<compile_context>
chip_gen: v7x
topology: tpu7x:2x2x1
jax: 0.10.0
libtpu: 0.0.40
codegen_flags: <defaults>
</compile_context>

<pallas_src>
import jax
import jax.numpy as jnp
import numpy as np
from jax import lax
from jax.experimental import pallas as pl
from jax.experimental.pallas import tpu as pltpu

# ----------------------------- configuration --------------------------------
B = 2            # batch
E = 4            # num_mics (input channels of encoder)
T_IN = 200       # input samples
K_ENC = 16       # encoder kernel size
STRIDE = 8       # encoder stride
D = 32           # encoder_dim
EMB = 32         # embed_dim (out_chan of TDConvNet, n_src = 1)
N_BLOCKS = 3     # TCN blocks (n_repeats = 1)
BN = 16          # bn_chan
HID = 32         # hid_chan
SKIP = 16        # skip_chan
CONV_K = 3       # conv_kernel_size
F = (T_IN - K_ENC) // STRIDE + 1   # encoder output frames (=24)
EPS = 1e-8
EK = E * K_ENC                     # im2col patch size (=64)
RS = BN + SKIP                     # fused residual+skip channels (=32)

# packing of (br; bs) into the [HID]-row per-block vector slab relies on this:
assert RS == HID


# ------------------------------- kernel -------------------------------------
def net_kernel(alphas_ref,            # SMEM scalars: PReLU alphas [2*N_BLOCKS+1]
               xunf_ref,              # [1, EK, F]        im2col'ed encoder input
               head_ref,              # [D, EK+3]         W_enc | b_enc | g0g | g0b
               bn_ref,                # [BN, D+1]         W_bn | b_bn
               w1_ref,                # [N_BLOCKS, HID, BN]
               wrs_ref,               # [N_BLOCKS, RS, HID]   (Wr ; Ws stacked on out-chan)
               blkv_ref,              # [N_BLOCKS, HID, 10]   per-block column vectors + Wd
               mask_ref,              # [SKIP+1, EMB]     rows 0:SKIP = W_m^T, row SKIP = b_m
               shift_ref,             # [N_BLOCKS, 2, F, F]   precomputed zero-pad shift matrices
               out_ref):              # [1, 1, EMB]
    f32 = jnp.float32

    def gln(x, g, b):
        # fused single-pass global layer-norm over (channels, time) of this batch element
        inv_n = 1.0 / x.size
        s = jnp.sum(x)
        s2 = jnp.sum(x * x)
        mean = s * inv_n
        var = jnp.maximum(s2 * inv_n - mean * mean, 0.0)
        return g * ((x - mean) * lax.rsqrt(var + EPS)) + b

    def prelu(x, a):
        return jnp.where(x >= 0, x, a * x)

    x = xunf_ref[0]                                                   # [EK, F]

    # ---- encoder Conv1d as matmul over im2col patches ----
    head = head_ref[...]                                              # [D, EK+3]
    w_enc = head[:, 0:EK]
    b_enc = head[:, EK:EK + 1]
    g0g = head[:, EK + 1:EK + 2]
    g0b = head[:, EK + 2:EK + 3]
    enc = jnp.dot(w_enc, x, preferred_element_type=f32) + b_enc       # [D, F]

    # ---- bottleneck: gLN + 1x1 conv ----
    bnp = bn_ref[...]                                                 # [BN, D+1]
    w_bn = bnp[:, 0:D]
    b_bn = bnp[:, D:D + 1]
    y = gln(enc, g0g, g0b)
    y = jnp.dot(w_bn, y, preferred_element_type=f32) + b_bn           # [BN, F]

    skip_sum = jnp.zeros((SKIP, F), f32)
    for i in range(N_BLOCKS):
        v = blkv_ref[i]                                               # [HID, 10]
        b1 = v[:, 0:1]
        g1g = v[:, 1:2]
        g1b = v[:, 2:3]
        wd0 = v[:, 3:4]
        wd1 = v[:, 4:5]
        wd2 = v[:, 5:6]
        bd = v[:, 6:7]
        g2g = v[:, 7:8]
        g2b = v[:, 8:9]
        brs = v[:, 9:10]                                              # [RS, 1]

        # 1x1 in-conv + PReLU + gLN
        h = jnp.dot(w1_ref[i], y, preferred_element_type=f32) + b1    # [HID, F]
        h = prelu(h, alphas_ref[2 * i])
        h = gln(h, g1g, g1b)

        # dilated depthwise conv ('same' zero padding):
        #   center tap is the identity; outer taps use precomputed shift matrices S with
        #   (h @ S)[:, t] = h[:, t + off] (0 outside the valid range).
        hl = jnp.dot(h, shift_ref[i, 0], preferred_element_type=f32)  # off = -dil
        hr = jnp.dot(h, shift_ref[i, 1], preferred_element_type=f32)  # off = +dil
        h = wd0 * hl + wd1 * h + wd2 * hr + bd
        h = prelu(h, alphas_ref[2 * i + 1])
        h = gln(h, g2g, g2b)

        # fused residual + skip 1x1 conv (one matmul), then split rows
        rs = jnp.dot(wrs_ref[i], h, preferred_element_type=f32) + brs  # [RS, F]
        y = y + rs[0:BN]
        skip_sum = skip_sum + rs[BN:RS]

    # ---- mask net (PReLU + 1x1 conv, mask_act='linear') fused with temporal mean ----
    m = prelu(skip_sum, alphas_ref[2 * N_BLOCKS])                     # [SKIP, F]
    wm_t = mask_ref[0:SKIP, :]                                        # [SKIP, EMB]
    bm = mask_ref[SKIP:SKIP + 1, :]                                   # [1, EMB]
    # score^T = m^T @ W_m^T -> [F, EMB]; temporal mean is a cheap sublane reduction and the
    # result is already lane-dense ([1, EMB]) for the store.
    score_t = lax.dot_general(m, wm_t, (((0,), (0,)), ((), ())),
                              preferred_element_type=f32)             # [F, EMB]
    out_ref[0] = jnp.sum(score_t, axis=0, keepdims=True) * (1.0 / F) + bm


# ------------------------------ wrapper --------------------------------------
def im2col(x):
    """[B, E, T_in] -> [B, E*K_ENC, F]  (valid, strided patches)."""
    b = x.shape[0]
    idx = jnp.arange(F)[:, None] * STRIDE + jnp.arange(K_ENC)[None, :]   # [F, K]
    patches = x[:, :, idx]                                               # [B, E, F, K]
    patches = jnp.transpose(patches, (0, 1, 3, 2))                       # [B, E, K, F]
    return patches.reshape(b, EK, F)


def build_shift_matrices():
    """S[i, j] implements (h @ S)[:, t] = h[:, t + off] with zero padding, for the two
    non-center taps (off = -dil, +dil) of block i."""
    mats = np.zeros((N_BLOCKS, 2, F, F), np.float32)
    for i in range(N_BLOCKS):
        dil = 2 ** i
        pad = (CONV_K - 1) * dil // 2
        for j, k in enumerate((0, CONV_K - 1)):
            off = k * dil - pad
            for c in range(F):
                r = c + off
                if 0 <= r < F:
                    mats[i, j, r, c] = 1.0
    return mats


SHIFT_MATS = build_shift_matrices()


def pack_params(p):
    """Pack the ~20 small parameter tensors into 7 slabs.  Done ONCE, outside the jitted
    forward, so the per-call XLA graph contains no packing ops."""
    head = jnp.concatenate(
        [p["W_enc"].reshape(D, EK), p["b_enc"][:, None],
         p["g0g"][:, None], p["g0b"][:, None]], axis=1)                   # [D, EK+3]
    bn = jnp.concatenate([p["W_bn"], p["b_bn"][:, None]], axis=1)         # [BN, D+1]
    wrs = jnp.concatenate([p["Wr"], p["Ws"]], axis=1)                     # [NB, RS, HID]
    blkv = jnp.concatenate(
        [p["b1"][..., None], p["g1g"][..., None], p["g1b"][..., None],
         p["Wd"],
         p["bd"][..., None], p["g2g"][..., None], p["g2b"][..., None],
         jnp.concatenate([p["br"], p["bs"]], axis=1)[..., None]], axis=2)  # [NB, HID, 10]
    maskw = jnp.concatenate([p["W_m"].T, p["b_m"][None, :]], axis=0)      # [SKIP+1, EMB]
    shifts = jnp.asarray(SHIFT_MATS)                                      # [NB, 2, F, F]
    return {"alphas": p["alphas"], "head": head, "bn": bn, "w1": p["W1"],
            "wrs": wrs, "blkv": blkv, "maskw": maskw, "shifts": shifts}


def _full_spec(shape):
    nd = len(shape)
    return pl.BlockSpec(shape, lambda b, *_, _nd=nd: (0,) * _nd)


@jax.jit
def net_forward(enrollment, packed):
    x_unf = im2col(enrollment.astype(jnp.float32))

    tensor_args = [x_unf, packed["head"], packed["bn"], packed["w1"],
                   packed["wrs"], packed["blkv"], packed["maskw"], packed["shifts"]]

    in_specs = [pl.BlockSpec((1, EK, F), lambda b, *_: (b, 0, 0))]
    in_specs += [_full_spec(a.shape) for a in tensor_args[1:]]

    out = pl.pallas_call(
        net_kernel,
        out_shape=jax.ShapeDtypeStruct((B, 1, EMB), jnp.float32),
        grid_spec=pltpu.PrefetchScalarGridSpec(
            num_scalar_prefetch=1,          # PReLU alphas -> SMEM
            grid=(B,),
            in_specs=in_specs,
            out_specs=pl.BlockSpec((1, 1, EMB), lambda b, *_: (b, 0, 0)),
        ),
        compiler_params=pltpu.CompilerParams(
            dimension_semantics=("parallel",)),   # batch elements are independent (2 TCs on v7x)
    )(packed["alphas"], *tensor_args)

    return out                                                            # [B, 1, EMB]


# ------------------------- deterministic parameters ---------------------------
def init_params(key):
    keys = iter(jax.random.split(key, 40))

    def rnd(shape, scale=0.1):
        return (scale * jax.random.normal(next(keys), shape)).astype(jnp.float32)

    p = {
        "W_enc": rnd((D, E, K_ENC)), "b_enc": rnd((D,)),
        "g0g": 1.0 + rnd((D,)), "g0b": rnd((D,)),
        "W_bn": rnd((BN, D)), "b_bn": rnd((BN,)),
        "W1": rnd((N_BLOCKS, HID, BN)), "b1": rnd((N_BLOCKS, HID)),
        "g1g": 1.0 + rnd((N_BLOCKS, HID)), "g1b": rnd((N_BLOCKS, HID)),
        "Wd": rnd((N_BLOCKS, HID, CONV_K)), "bd": rnd((N_BLOCKS, HID)),
        "g2g": 1.0 + rnd((N_BLOCKS, HID)), "g2b": rnd((N_BLOCKS, HID)),
        "Wr": rnd((N_BLOCKS, BN, HID)), "br": rnd((N_BLOCKS, BN)),
        "Ws": rnd((N_BLOCKS, SKIP, HID)), "bs": rnd((N_BLOCKS, SKIP)),
        "W_m": rnd((EMB, SKIP)), "b_m": rnd((EMB,)),
        "alphas": jnp.full((2 * N_BLOCKS + 1,), 0.25, jnp.float32),  # nn.PReLU() default
    }
    return p


# ------------------------ pure-JAX reference (for checking) -------------------
def reference_forward(x, p):
    dn = ("NCH", "OIH", "NCH")

    def gln(v, g, b):
        m = jnp.mean(v, axis=(1, 2), keepdims=True)
        var = jnp.mean((v - m) ** 2, axis=(1, 2), keepdims=True)
        return g[None, :, None] * (v - m) / jnp.sqrt(var + EPS) + b[None, :, None]

    def prelu(v, a):
        return jnp.where(v >= 0, v, a * v)

    enc = lax.conv_general_dilated(x, p["W_enc"], (STRIDE,), "VALID",
                                   dimension_numbers=dn) + p["b_enc"][None, :, None]
    y = gln(enc, p["g0g"], p["g0b"])
    y = jnp.einsum("oc,bct->bot", p["W_bn"], y) + p["b_bn"][None, :, None]
    skip = jnp.zeros((x.shape[0], SKIP, y.shape[-1]), jnp.float32)
    for i in range(N_BLOCKS):
        dil = 2 ** i
        pad = (CONV_K - 1) * dil // 2
        h = jnp.einsum("oc,bct->bot", p["W1"][i], y) + p["b1"][i][None, :, None]
        h = prelu(h, p["alphas"][2 * i])
        h = gln(h, p["g1g"][i], p["g1b"][i])
        h = lax.conv_general_dilated(h, p["Wd"][i][:, None, :], (1,), [(pad, pad)],
                                     rhs_dilation=(dil,), dimension_numbers=dn,
                                     feature_group_count=HID)
        h = h + p["bd"][i][None, :, None]
        h = prelu(h, p["alphas"][2 * i + 1])
        h = gln(h, p["g2g"][i], p["g2b"][i])
        skip = skip + jnp.einsum("oc,bct->bot", p["Ws"][i], h) + p["bs"][i][None, :, None]
        y = y + jnp.einsum("oc,bct->bot", p["Wr"][i], h) + p["br"][i][None, :, None]
    m = prelu(skip, p["alphas"][2 * N_BLOCKS])
    score = jnp.einsum("oc,bct->bot", p["W_m"], m) + p["b_m"][None, :, None]
    return jnp.mean(score, axis=-1)[:, None, :]


# ---------------------------------- main ---------------------------------------
if __name__ == "__main__":
    enrollment = jax.random.normal(jax.random.PRNGKey(0), (B, E, T_IN), jnp.float32)
    params = init_params(jax.random.PRNGKey(42))
    packed = pack_params(params)          # one-time parameter packing (outside the jit)

    emb = net_forward(enrollment, packed)
    emb = jax.block_until_ready(emb)
    assert emb.shape == (B, 1, EMB), emb.shape

    ref = reference_forward(enrollment, params)
    np.testing.assert_allclose(np.asarray(emb), np.asarray(ref), rtol=2e-3, atol=2e-3)

    print("KERNEL_OK")
</pallas_src>

<mosaic_0001>
module attributes {stable_mosaic.version = 11 : i64} {
  func.func @net_kernel(%arg0: i32, %arg1: memref<7xf32, #tpu.memory_space<smem>>, %arg2: memref<1x64x24xf32, #tpu.memory_space<vmem>>, %arg3: memref<32x67xf32, #tpu.memory_space<vmem>>, %arg4: memref<16x33xf32, #tpu.memory_space<vmem>>, %arg5: memref<3x32x16xf32, #tpu.memory_space<vmem>>, %arg6: memref<3x32x32xf32, #tpu.memory_space<vmem>>, %arg7: memref<3x32x10xf32, #tpu.memory_space<vmem>>, %arg8: memref<17x32xf32, #tpu.memory_space<vmem>>, %arg9: memref<3x2x24x24xf32, #tpu.memory_space<vmem>>, %arg10: memref<1x1x32xf32, #tpu.memory_space<vmem>>) attributes {dimension_semantics = [#tpu.dimension_semantics<parallel>], iteration_bounds = array<i64: 2>, scalar_prefetch = 1 : i64, scratch_operands = 0 : i64, tpu.core_type = #tpu.core_type<tc>, window_params = [{transform_indices = @transform_0, window_bounds = array<i64: 1, 64, 24>}, {pipeline_mode = #tpu.pipeline_mode<synchronous>, transform_indices = @transform_1, window_bounds = array<i64: 32, 67>}, {pipeline_mode = #tpu.pipeline_mode<synchronous>, transform_indices = @transform_2, window_bounds = array<i64: 16, 33>}, {pipeline_mode = #tpu.pipeline_mode<synchronous>, transform_indices = @transform_3, window_bounds = array<i64: 3, 32, 16>}, {pipeline_mode = #tpu.pipeline_mode<synchronous>, transform_indices = @transform_4, window_bounds = array<i64: 3, 32, 32>}, {pipeline_mode = #tpu.pipeline_mode<synchronous>, transform_indices = @transform_5, window_bounds = array<i64: 3, 32, 10>}, {pipeline_mode = #tpu.pipeline_mode<synchronous>, transform_indices = @transform_6, window_bounds = array<i64: 17, 32>}, {pipeline_mode = #tpu.pipeline_mode<synchronous>, transform_indices = @transform_7, window_bounds = array<i64: 3, 2, 24, 24>}, {transform_indices = @transform_8, window_bounds = array<i64: 1, 1, 32>}]} {
    %c0 = arith.constant 0 : index
    %c0_0 = arith.constant 0 : index
    %c0_1 = arith.constant 0 : index
    %0 = vector.load %arg2[%c0, %c0_0, %c0_1] : memref<1x64x24xf32, #tpu.memory_space<vmem>>, vector<1x64x24xf32>
    %1 = vector.shape_cast %0 : vector<1x64x24xf32> to vector<64x24xf32>
    %c0_2 = arith.constant 0 : index
    %c0_3 = arith.constant 0 : index
    %2 = vector.load %arg3[%c0_2, %c0_3] : memref<32x67xf32, #tpu.memory_space<vmem>>, vector<32x67xf32>
    %3 = vector.extract_strided_slice %2 {offsets = [0, 0], sizes = [32, 64], strides = [1, 1]} : vector<32x67xf32> to vector<32x64xf32>
    %4 = vector.extract_strided_slice %2 {offsets = [0, 64], sizes = [32, 1], strides = [1, 1]} : vector<32x67xf32> to vector<32x1xf32>
    %5 = vector.extract_strided_slice %2 {offsets = [0, 65], sizes = [32, 1], strides = [1, 1]} : vector<32x67xf32> to vector<32x1xf32>
    %6 = vector.extract_strided_slice %2 {offsets = [0, 66], sizes = [32, 1], strides = [1, 1]} : vector<32x67xf32> to vector<32x1xf32>
    %cst = arith.constant dense<0.000000e+00> : vector<32x24xf32>
    %7 = tpu.matmul %3, %1, %cst {dimension_numbers = #tpu.dot_dimension_numbers<[1], [0], [0], [1], [0, 0, 1, 1], [], []>} : vector<32x64xf32>, vector<64x24xf32>, vector<32x24xf32> -> vector<32x24xf32>
    %8 = vector.broadcast %4 : vector<32x1xf32> to vector<32x24xf32>
    %9 = arith.addf %7, %8 : vector<32x24xf32>
    %c0_4 = arith.constant 0 : index
    %c0_5 = arith.constant 0 : index
    %10 = vector.load %arg4[%c0_4, %c0_5] : memref<16x33xf32, #tpu.memory_space<vmem>>, vector<16x33xf32>
    %11 = vector.extract_strided_slice %10 {offsets = [0, 0], sizes = [16, 32], strides = [1, 1]} : vector<16x33xf32> to vector<16x32xf32>
    %12 = vector.extract_strided_slice %10 {offsets = [0, 32], sizes = [16, 1], strides = [1, 1]} : vector<16x33xf32> to vector<16x1xf32>
    %13 = vector.shape_cast %9 : vector<32x24xf32> to vector<1x32x24xf32>
    %cst_6 = arith.constant dense<0.000000e+00> : vector<1xf32>
    %14 = vector.multi_reduction <add>, %13, %cst_6 [1, 2] : vector<1x32x24xf32> to vector<1xf32>
    %15 = vector.shape_cast %14 : vector<1xf32> to vector<1x1x1xf32>
    %16 = vector.extract %15[0, 0, 0] : f32 from vector<1x1x1xf32>
    %17 = arith.mulf %9, %9 : vector<32x24xf32>
    %18 = vector.shape_cast %17 : vector<32x24xf32> to vector<1x32x24xf32>
    %cst_7 = arith.constant dense<0.000000e+00> : vector<1xf32>
    %19 = vector.multi_reduction <add>, %18, %cst_7 [1, 2] : vector<1x32x24xf32> to vector<1xf32>
    %20 = vector.shape_cast %19 : vector<1xf32> to vector<1x1x1xf32>
    %21 = vector.extract %20[0, 0, 0] : f32 from vector<1x1x1xf32>
    %cst_8 = arith.constant 0.00130208337 : f32
    %22 = arith.mulf %16, %cst_8 : f32
    %cst_9 = arith.constant 0.00130208337 : f32
    %23 = arith.mulf %21, %cst_9 : f32
    %24 = arith.mulf %22, %22 : f32
    %25 = arith.subf %23, %24 : f32
    %cst_10 = arith.constant 0.000000e+00 : f32
    %26 = arith.maximumf %25, %cst_10 : f32
    %27 = vector.broadcast %22 : f32 to vector<32x24xf32>
    %28 = arith.subf %9, %27 : vector<32x24xf32>
    %cst_11 = arith.constant 9.99999993E-9 : f32
    %29 = arith.addf %26, %cst_11 : f32
    %30 = math.rsqrt %29 : f32
    %31 = vector.broadcast %30 : f32 to vector<32x24xf32>
    %32 = arith.mulf %28, %31 : vector<32x24xf32>
    %33 = vector.broadcast %5 : vector<32x1xf32> to vector<32x24xf32>
    %34 = arith.mulf %33, %32 : vector<32x24xf32>
    %35 = vector.broadcast %6 : vector<32x1xf32> to vector<32x24xf32>
    %36 = arith.addf %34, %35 : vector<32x24xf32>
    %cst_12 = arith.constant dense<0.000000e+00> : vector<16x24xf32>
    %37 = tpu.matmul %11, %36, %cst_12 {dimension_numbers = #tpu.dot_dimension_numbers<[1], [0], [0], [1], [0, 0, 1, 1], [], []>} : vector<16x32xf32>, vector<32x24xf32>, vector<16x24xf32> -> vector<16x24xf32>
    %38 = vector.broadcast %12 : vector<16x1xf32> to vector<16x24xf32>
    %39 = arith.addf %37, %38 : vector<16x24xf32>
    %cst_13 = arith.constant 0.000000e+00 : f32
    %40 = vector.broadcast %cst_13 : f32 to vector<16x24xf32>
    %c0_14 = arith.constant 0 : index
    %c0_15 = arith.constant 0 : index
    %c0_16 = arith.constant 0 : index
    %41 = vector.load %arg7[%c0_14, %c0_15, %c0_16] : memref<3x32x10xf32, #tpu.memory_space<vmem>>, vector<1x32x10xf32>
    %42 = vector.shape_cast %41 : vector<1x32x10xf32> to vector<32x10xf32>
    %43 = vector.extract_strided_slice %42 {offsets = [0, 0], sizes = [32, 1], strides = [1, 1]} : vector<32x10xf32> to vector<32x1xf32>
    %44 = vector.extract_strided_slice %42 {offsets = [0, 1], sizes = [32, 1], strides = [1, 1]} : vector<32x10xf32> to vector<32x1xf32>
    %45 = vector.extract_strided_slice %42 {offsets = [0, 2], sizes = [32, 1], strides = [1, 1]} : vector<32x10xf32> to vector<32x1xf32>
    %46 = vector.extract_strided_slice %42 {offsets = [0, 3], sizes = [32, 1], strides = [1, 1]} : vector<32x10xf32> to vector<32x1xf32>
    %47 = vector.extract_strided_slice %42 {offsets = [0, 4], sizes = [32, 1], strides = [1, 1]} : vector<32x10xf32> to vector<32x1xf32>
    %48 = vector.extract_strided_slice %42 {offsets = [0, 5], sizes = [32, 1], strides = [1, 1]} : vector<32x10xf32> to vector<32x1xf32>
    %49 = vector.extract_strided_slice %42 {offsets = [0, 6], sizes = [32, 1], strides = [1, 1]} : vector<32x10xf32> to vector<32x1xf32>
    %50 = vector.extract_strided_slice %42 {offsets = [0, 7], sizes = [32, 1], strides = [1, 1]} : vector<32x10xf32> to vector<32x1xf32>
    %51 = vector.extract_strided_slice %42 {offsets = [0, 8], sizes = [32, 1], strides = [1, 1]} : vector<32x10xf32> to vector<32x1xf32>
    %52 = vector.extract_strided_slice %42 {offsets = [0, 9], sizes = [32, 1], strides = [1, 1]} : vector<32x10xf32> to vector<32x1xf32>
    %c0_17 = arith.constant 0 : index
    %c0_18 = arith.constant 0 : index
    %c0_19 = arith.constant 0 : index
    %53 = vector.load %arg5[%c0_17, %c0_18, %c0_19] : memref<3x32x16xf32, #tpu.memory_space<vmem>>, vector<1x32x16xf32>
    %54 = vector.shape_cast %53 : vector<1x32x16xf32> to vector<32x16xf32>
    %cst_20 = arith.constant dense<0.000000e+00> : vector<32x24xf32>
    %55 = tpu.matmul %54, %39, %cst_20 {dimension_numbers = #tpu.dot_dimension_numbers<[1], [0], [0], [1], [0, 0, 1, 1], [], []>} : vector<32x16xf32>, vector<16x24xf32>, vector<32x24xf32> -> vector<32x24xf32>
    %56 = vector.broadcast %43 : vector<32x1xf32> to vector<32x24xf32>
    %57 = arith.addf %55, %56 : vector<32x24xf32>
    %c0_21 = arith.constant 0 : index
    %58 = memref.load %arg1[%c0_21] : memref<7xf32, #tpu.memory_space<smem>>
    %cst_22 = arith.constant 0.000000e+00 : f32
    %59 = vector.broadcast %cst_22 : f32 to vector<32x24xf32>
    %60 = arith.cmpf oge, %57, %59 : vector<32x24xf32>
    %61 = vector.broadcast %58 : f32 to vector<32x24xf32>
    %62 = arith.mulf %61, %57 : vector<32x24xf32>
    %63 = arith.select %60, %57, %62 : vector<32x24xi1>, vector<32x24xf32>
    %64 = vector.shape_cast %63 : vector<32x24xf32> to vector<1x32x24xf32>
    %cst_23 = arith.constant dense<0.000000e+00> : vector<1xf32>
    %65 = vector.multi_reduction <add>, %64, %cst_23 [1, 2] : vector<1x32x24xf32> to vector<1xf32>
    %66 = vector.shape_cast %65 : vector<1xf32> to vector<1x1x1xf32>
    %67 = vector.extract %66[0, 0, 0] : f32 from vector<1x1x1xf32>
    %68 = arith.mulf %63, %63 : vector<32x24xf32>
    %69 = vector.shape_cast %68 : vector<32x24xf32> to vector<1x32x24xf32>
    %cst_24 = arith.constant dense<0.000000e+00> : vector<1xf32>
    %70 = vector.multi_reduction <add>, %69, %cst_24 [1, 2] : vector<1x32x24xf32> to vector<1xf32>
    %71 = vector.shape_cast %70 : vector<1xf32> to vector<1x1x1xf32>
    %72 = vector.extract %71[0, 0, 0] : f32 from vector<1x1x1xf32>
    %cst_25 = arith.constant 0.00130208337 : f32
    %73 = arith.mulf %67, %cst_25 : f32
    %cst_26 = arith.constant 0.00130208337 : f32
    %74 = arith.mulf %72, %cst_26 : f32
    %75 = arith.mulf %73, %73 : f32
    %76 = arith.subf %74, %75 : f32
    %cst_27 = arith.constant 0.000000e+00 : f32
    %77 = arith.maximumf %76, %cst_27 : f32
    %78 = vector.broadcast %73 : f32 to vector<32x24xf32>
    %79 = arith.subf %63, %78 : vector<32x24xf32>
    %cst_28 = arith.constant 9.99999993E-9 : f32
    %80 = arith.addf %77, %cst_28 : f32
    %81 = math.rsqrt %80 : f32
    %82 = vector.broadcast %81 : f32 to vector<32x24xf32>
    %83 = arith.mulf %79, %82 : vector<32x24xf32>
    %84 = vector.broadcast %44 : vector<32x1xf32> to vector<32x24xf32>
    %85 = arith.mulf %84, %83 : vector<32x24xf32>
    %86 = vector.broadcast %45 : vector<32x1xf32> to vector<32x24xf32>
    %87 = arith.addf %85, %86 : vector<32x24xf32>
    %c0_29 = arith.constant 0 : index
    %c0_30 = arith.constant 0 : index
    %c0_31 = arith.constant 0 : index
    %c0_32 = arith.constant 0 : index
    %88 = vector.load %arg9[%c0_29, %c0_30, %c0_31, %c0_32] : memref<3x2x24x24xf32, #tpu.memory_space<vmem>>, vector<1x1x24x24xf32>
    %89 = vector.shape_cast %88 : vector<1x1x24x24xf32> to vector<24x24xf32>
    %cst_33 = arith.constant dense<0.000000e+00> : vector<32x24xf32>
    %90 = tpu.matmul %87, %89, %cst_33 {dimension_numbers = #tpu.dot_dimension_numbers<[1], [0], [0], [1], [0, 0, 1, 1], [], []>} : vector<32x24xf32>, vector<24x24xf32>, vector<32x24xf32> -> vector<32x24xf32>
    %c0_34 = arith.constant 0 : index
    %c1 = arith.constant 1 : index
    %c0_35 = arith.constant 0 : index
    %c0_36 = arith.constant 0 : index
    %91 = vector.load %arg9[%c0_34, %c1, %c0_35, %c0_36] : memref<3x2x24x24xf32, #tpu.memory_space<vmem>>, vector<1x1x24x24xf32>
    %92 = vector.shape_cast %91 : vector<1x1x24x24xf32> to vector<24x24xf32>
    %cst_37 = arith.constant dense<0.000000e+00> : vector<32x24xf32>
    %93 = tpu.matmul %87, %92, %cst_37 {dimension_numbers = #tpu.dot_dimension_numbers<[1], [0], [0], [1], [0, 0, 1, 1], [], []>} : vector<32x24xf32>, vector<24x24xf32>, vector<32x24xf32> -> vector<32x24xf32>
    %94 = vector.broadcast %46 : vector<32x1xf32> to vector<32x24xf32>
    %95 = arith.mulf %94, %90 : vector<32x24xf32>
    %96 = vector.broadcast %47 : vector<32x1xf32> to vector<32x24xf32>
    %97 = arith.mulf %96, %87 : vector<32x24xf32>
    %98 = arith.addf %95, %97 : vector<32x24xf32>
    %99 = vector.broadcast %48 : vector<32x1xf32> to vector<32x24xf32>
    %100 = arith.mulf %99, %93 : vector<32x24xf32>
    %101 = arith.addf %98, %100 : vector<32x24xf32>
    %102 = vector.broadcast %49 : vector<32x1xf32> to vector<32x24xf32>
    %103 = arith.addf %101, %102 : vector<32x24xf32>
    %c1_38 = arith.constant 1 : index
    %104 = memref.load %arg1[%c1_38] : memref<7xf32, #tpu.memory_space<smem>>
    %cst_39 = arith.constant 0.000000e+00 : f32
    %105 = vector.broadcast %cst_39 : f32 to vector<32x24xf32>
    %106 = arith.cmpf oge, %103, %105 : vector<32x24xf32>
    %107 = vector.broadcast %104 : f32 to vector<32x24xf32>
    %108 = arith.mulf %107, %103 : vector<32x24xf32>
    %109 = arith.select %106, %103, %108 : vector<32x24xi1>, vector<32x24xf32>
    %110 = vector.shape_cast %109 : vector<32x24xf32> to vector<1x32x24xf32>
    %cst_40 = arith.constant dense<0.000000e+00> : vector<1xf32>
    %111 = vector.multi_reduction <add>, %110, %cst_40 [1, 2] : vector<1x32x24xf32> to vector<1xf32>
    %112 = vector.shape_cast %111 : vector<1xf32> to vector<1x1x1xf32>
    %113 = vector.extract %112[0, 0, 0] : f32 from vector<1x1x1xf32>
    %114 = arith.mulf %109, %109 : vector<32x24xf32>
    %115 = vector.shape_cast %114 : vector<32x24xf32> to vector<1x32x24xf32>
    %cst_41 = arith.constant dense<0.000000e+00> : vector<1xf32>
    %116 = vector.multi_reduction <add>, %115, %cst_41 [1, 2] : vector<1x32x24xf32> to vector<1xf32>
    %117 = vector.shape_cast %116 : vector<1xf32> to vector<1x1x1xf32>
    %118 = vector.extract %117[0, 0, 0] : f32 from vector<1x1x1xf32>
    %cst_42 = arith.constant 0.00130208337 : f32
    %119 = arith.mulf %113, %cst_42 : f32
    %cst_43 = arith.constant 0.00130208337 : f32
    %120 = arith.mulf %118, %cst_43 : f32
    %121 = arith.mulf %119, %119 : f32
    %122 = arith.subf %120, %121 : f32
    %cst_44 = arith.constant 0.000000e+00 : f32
    %123 = arith.maximumf %122, %cst_44 : f32
    %124 = vector.broadcast %119 : f32 to vector<32x24xf32>
    %125 = arith.subf %109, %124 : vector<32x24xf32>
    %cst_45 = arith.constant 9.99999993E-9 : f32
    %126 = arith.addf %123, %cst_45 : f32
    %127 = math.rsqrt %126 : f32
    %128 = vector.broadcast %127 : f32 to vector<32x24xf32>
    %129 = arith.mulf %125, %128 : vector<32x24xf32>
    %130 = vector.broadcast %50 : vector<32x1xf32> to vector<32x24xf32>
    %131 = arith.mulf %130, %129 : vector<32x24xf32>
    %132 = vector.broadcast %51 : vector<32x1xf32> to vector<32x24xf32>
    %133 = arith.addf %131, %132 : vector<32x24xf32>
    %c0_46 = arith.constant 0 : index
    %c0_47 = arith.constant 0 : index
    %c0_48 = arith.constant 0 : index
    %134 = vector.load %arg6[%c0_46, %c0_47, %c0_48] : memref<3x32x32xf32, #tpu.memory_space<vmem>>, vector<1x32x32xf32>
    %135 = vector.shape_cast %134 : vector<1x32x32xf32> to vector<32x32xf32>
    %cst_49 = arith.constant dense<0.000000e+00> : vector<32x24xf32>
    %136 = tpu.matmul %135, %133, %cst_49 {dimension_numbers = #tpu.dot_dimension_numbers<[1], [0], [0], [1], [0, 0, 1, 1], [], []>} : vector<32x32xf32>, vector<32x24xf32>, vector<32x24xf32> -> vector<32x24xf32>
    %137 = vector.broadcast %52 : vector<32x1xf32> to vector<32x24xf32>
    %138 = arith.addf %136, %137 : vector<32x24xf32>
    %139 = vector.extract_strided_slice %138 {offsets = [0, 0], sizes = [16, 24], strides = [1, 1]} : vector<32x24xf32> to vector<16x24xf32>
    %140 = arith.addf %39, %139 : vector<16x24xf32>
    %141 = vector.extract_strided_slice %138 {offsets = [16, 0], sizes = [16, 24], strides = [1, 1]} : vector<32x24xf32> to vector<16x24xf32>
    %142 = arith.addf %40, %141 : vector<16x24xf32>
    %c1_50 = arith.constant 1 : index
    %c0_51 = arith.constant 0 : index
    %c0_52 = arith.constant 0 : index
    %143 = vector.load %arg7[%c1_50, %c0_51, %c0_52] : memref<3x32x10xf32, #tpu.memory_space<vmem>>, vector<1x32x10xf32>
    %144 = vector.shape_cast %143 : vector<1x32x10xf32> to vector<32x10xf32>
    %145 = vector.extract_strided_slice %144 {offsets = [0, 0], sizes = [32, 1], strides = [1, 1]} : vector<32x10xf32> to vector<32x1xf32>
    %146 = vector.extract_strided_slice %144 {offsets = [0, 1], sizes = [32, 1], strides = [1, 1]} : vector<32x10xf32> to vector<32x1xf32>
    %147 = vector.extract_strided_slice %144 {offsets = [0, 2], sizes = [32, 1], strides = [1, 1]} : vector<32x10xf32> to vector<32x1xf32>
    %148 = vector.extract_strided_slice %144 {offsets = [0, 3], sizes = [32, 1], strides = [1, 1]} : vector<32x10xf32> to vector<32x1xf32>
    %149 = vector.extract_strided_slice %144 {offsets = [0, 4], sizes = [32, 1], strides = [1, 1]} : vector<32x10xf32> to vector<32x1xf32>
    %150 = vector.extract_strided_slice %144 {offsets = [0, 5], sizes = [32, 1], strides = [1, 1]} : vector<32x10xf32> to vector<32x1xf32>
    %151 = vector.extract_strided_slice %144 {offsets = [0, 6], sizes = [32, 1], strides = [1, 1]} : vector<32x10xf32> to vector<32x1xf32>
    %152 = vector.extract_strided_slice %144 {offsets = [0, 7], sizes = [32, 1], strides = [1, 1]} : vector<32x10xf32> to vector<32x1xf32>
    %153 = vector.extract_strided_slice %144 {offsets = [0, 8], sizes = [32, 1], strides = [1, 1]} : vector<32x10xf32> to vector<32x1xf32>
    %154 = vector.extract_strided_slice %144 {offsets = [0, 9], sizes = [32, 1], strides = [1, 1]} : vector<32x10xf32> to vector<32x1xf32>
    %c1_53 = arith.constant 1 : index
    %c0_54 = arith.constant 0 : index
    %c0_55 = arith.constant 0 : index
    %155 = vector.load %arg5[%c1_53, %c0_54, %c0_55] : memref<3x32x16xf32, #tpu.memory_space<vmem>>, vector<1x32x16xf32>
    %156 = vector.shape_cast %155 : vector<1x32x16xf32> to vector<32x16xf32>
    %cst_56 = arith.constant dense<0.000000e+00> : vector<32x24xf32>
    %157 = tpu.matmul %156, %140, %cst_56 {dimension_numbers = #tpu.dot_dimension_numbers<[1], [0], [0], [1], [0, 0, 1, 1], [], []>} : vector<32x16xf32>, vector<16x24xf32>, vector<32x24xf32> -> vector<32x24xf32>
    %158 = vector.broadcast %145 : vector<32x1xf32> to vector<32x24xf32>
    %159 = arith.addf %157, %158 : vector<32x24xf32>
    %c2 = arith.constant 2 : index
    %160 = memref.load %arg1[%c2] : memref<7xf32, #tpu.memory_space<smem>>
    %cst_57 = arith.constant 0.000000e+00 : f32
    %161 = vector.broadcast %cst_57 : f32 to vector<32x24xf32>
    %162 = arith.cmpf oge, %159, %161 : vector<32x24xf32>
    %163 = vector.broadcast %160 : f32 to vector<32x24xf32>
    %164 = arith.mulf %163, %159 : vector<32x24xf32>
    %165 = arith.select %162, %159, %164 : vector<32x24xi1>, vector<32x24xf32>
    %166 = vector.shape_cast %165 : vector<32x24xf32> to vector<1x32x24xf32>
    %cst_58 = arith.constant dense<0.000000e+00> : vector<1xf32>
    %167 = vector.multi_reduction <add>, %166, %cst_58 [1, 2] : vector<1x32x24xf32> to vector<1xf32>
    %168 = vector.shape_cast %167 : vector<1xf32> to vector<1x1x1xf32>
    %169 = vector.extract %168[0, 0, 0] : f32 from vector<1x1x1xf32>
    %170 = arith.mulf %165, %165 : vector<32x24xf32>
    %171 = vector.shape_cast %170 : vector<32x24xf32> to vector<1x32x24xf32>
    %cst_59 = arith.constant dense<0.000000e+00> : vector<1xf32>
    %172 = vector.multi_reduction <add>, %171, %cst_59 [1, 2] : vector<1x32x24xf32> to vector<1xf32>
    %173 = vector.shape_cast %172 : vector<1xf32> to vector<1x1x1xf32>
    %174 = vector.extract %173[0, 0, 0] : f32 from vector<1x1x1xf32>
    %cst_60 = arith.constant 0.00130208337 : f32
    %175 = arith.mulf %169, %cst_60 : f32
    %cst_61 = arith.constant 0.00130208337 : f32
    %176 = arith.mulf %174, %cst_61 : f32
    %177 = arith.mulf %175, %175 : f32
    %178 = arith.subf %176, %177 : f32
    %cst_62 = arith.constant 0.000000e+00 : f32
    %179 = arith.maximumf %178, %cst_62 : f32
    %180 = vector.broadcast %175 : f32 to vector<32x24xf32>
    %181 = arith.subf %165, %180 : vector<32x24xf32>
    %cst_63 = arith.constant 9.99999993E-9 : f32
    %182 = arith.addf %179, %cst_63 : f32
    %183 = math.rsqrt %182 : f32
    %184 = vector.broadcast %183 : f32 to vector<32x24xf32>
    %185 = arith.mulf %181, %184 : vector<32x24xf32>
    %186 = vector.broadcast %146 : vector<32x1xf32> to vector<32x24xf32>
    %187 = arith.mulf %186, %185 : vector<32x24xf32>
    %188 = vector.broadcast %147 : vector<32x1xf32> to vector<32x24xf32>
    %189 = arith.addf %187, %188 : vector<32x24xf32>
    %c1_64 = arith.constant 1 : index
    %c0_65 = arith.constant 0 : index
    %c0_66 = arith.constant 0 : index
    %c0_67 = arith.constant 0 : index
    %190 = vector.load %arg9[%c1_64, %c0_65, %c0_66, %c0_67] : memref<3x2x24x24xf32, #tpu.memory_space<vmem>>, vector<1x1x24x24xf32>
    %191 = vector.shape_cast %190 : vector<1x1x24x24xf32> to vector<24x24xf32>
    %cst_68 = arith.constant dense<0.000000e+00> : vector<32x24xf32>
    %192 = tpu.matmul %189, %191, %cst_68 {dimension_numbers = #tpu.dot_dimension_numbers<[1], [0], [0], [1], [0, 0, 1, 1], [], []>} : vector<32x24xf32>, vector<24x24xf32>, vector<32x24xf32> -> vector<32x24xf32>
    %c1_69 = arith.constant 1 : index
    %c1_70 = arith.constant 1 : index
    %c0_71 = arith.constant 0 : index
    %c0_72 = arith.constant 0 : index
    %193 = vector.load %arg9[%c1_69, %c1_70, %c0_71, %c0_72] : memref<3x2x24x24xf32, #tpu.memory_space<vmem>>, vector<1x1x24x24xf32>
    %194 = vector.shape_cast %193 : vector<1x1x24x24xf32> to vector<24x24xf32>
    %cst_73 = arith.constant dense<0.000000e+00> : vector<32x24xf32>
    %195 = tpu.matmul %189, %194, %cst_73 {dimension_numbers = #tpu.dot_dimension_numbers<[1], [0], [0], [1], [0, 0, 1, 1], [], []>} : vector<32x24xf32>, vector<24x24xf32>, vector<32x24xf32> -> vector<32x24xf32>
    %196 = vector.broadcast %148 : vector<32x1xf32> to vector<32x24xf32>
    %197 = arith.mulf %196, %192 : vector<32x24xf32>
    %198 = vector.broadcast %149 : vector<32x1xf32> to vector<32x24xf32>
    %199 = arith.mulf %198, %189 : vector<32x24xf32>
    %200 = arith.addf %197, %199 : vector<32x24xf32>
    %201 = vector.broadcast %150 : vector<32x1xf32> to vector<32x24xf32>
    %202 = arith.mulf %201, %195 : vector<32x24xf32>
    %203 = arith.addf %200, %202 : vector<32x24xf32>
    %204 = vector.broadcast %151 : vector<32x1xf32> to vector<32x24xf32>
    %205 = arith.addf %203, %204 : vector<32x24xf32>
    %c3 = arith.constant 3 : index
    %206 = memref.load %arg1[%c3] : memref<7xf32, #tpu.memory_space<smem>>
    %cst_74 = arith.constant 0.000000e+00 : f32
    %207 = vector.broadcast %cst_74 : f32 to vector<32x24xf32>
    %208 = arith.cmpf oge, %205, %207 : vector<32x24xf32>
    %209 = vector.broadcast %206 : f32 to vector<32x24xf32>
    %210 = arith.mulf %209, %205 : vector<32x24xf32>
    %211 = arith.select %208, %205, %210 : vector<32x24xi1>, vector<32x24xf32>
    %212 = vector.shape_cast %211 : vector<32x24xf32> to vector<1x32x24xf32>
    %cst_75 = arith.constant dense<0.000000e+00> : vector<1xf32>
    %213 = vector.multi_reduction <add>, %212, %cst_75 [1, 2] : vector<1x32x24xf32> to vector<1xf32>
    %214 = vector.shape_cast %213 : vector<1xf32> to vector<1x1x1xf32>
    %215 = vector.extract %214[0, 0, 0] : f32 from vector<1x1x1xf32>
    %216 = arith.mulf %211, %211 : vector<32x24xf32>
    %217 = vector.shape_cast %216 : vector<32x24xf32> to vector<1x32x24xf32>
    %cst_76 = arith.constant dense<0.000000e+00> : vector<1xf32>
    %218 = vector.multi_reduction <add>, %217, %cst_76 [1, 2] : vector<1x32x24xf32> to vector<1xf32>
    %219 = vector.shape_cast %218 : vector<1xf32> to vector<1x1x1xf32>
    %220 = vector.extract %219[0, 0, 0] : f32 from vector<1x1x1xf32>
    %cst_77 = arith.constant 0.00130208337 : f32
    %221 = arith.mulf %215, %cst_77 : f32
    %cst_78 = arith.constant 0.00130208337 : f32
    %222 = arith.mulf %220, %cst_78 : f32
    %223 = arith.mulf %221, %221 : f32
    %224 = arith.subf %222, %223 : f32
    %cst_79 = arith.constant 0.000000e+00 : f32
    %225 = arith.maximumf %224, %cst_79 : f32
    %226 = vector.broadcast %221 : f32 to vector<32x24xf32>
    %227 = arith.subf %211, %226 : vector<32x24xf32>
    %cst_80 = arith.constant 9.99999993E-9 : f32
    %228 = arith.addf %225, %cst_80 : f32
    %229 = math.rsqrt %228 : f32
    %230 = vector.broadcast %229 : f32 to vector<32x24xf32>
    %231 = arith.mulf %227, %230 : vector<32x24xf32>
    %232 = vector.broadcast %152 : vector<32x1xf32> to vector<32x24xf32>
    %233 = arith.mulf %232, %231 : vector<32x24xf32>
    %234 = vector.broadcast %153 : vector<32x1xf32> to vector<32x24xf32>
    %235 = arith.addf %233, %234 : vector<32x24xf32>
    %c1_81 = arith.constant 1 : index
    %c0_82 = arith.constant 0 : index
    %c0_83 = arith.constant 0 : index
    %236 = vector.load %arg6[%c1_81, %c0_82, %c0_83] : memref<3x32x32xf32, #tpu.memory_space<vmem>>, vector<1x32x32xf32>
    %237 = vector.shape_cast %236 : vector<1x32x32xf32> to vector<32x32xf32>
    %cst_84 = arith.constant dense<0.000000e+00> : vector<32x24xf32>
    %238 = tpu.matmul %237, %235, %cst_84 {dimension_numbers = #tpu.dot_dimension_numbers<[1], [0], [0], [1], [0, 0, 1, 1], [], []>} : vector<32x32xf32>, vector<32x24xf32>, vector<32x24xf32> -> vector<32x24xf32>
    %239 = vector.broadcast %154 : vector<32x1xf32> to vector<32x24xf32>
    %240 = arith.addf %238, %239 : vector<32x24xf32>
    %241 = vector.extract_strided_slice %240 {offsets = [0, 0], sizes = [16, 24], strides = [1, 1]} : vector<32x24xf32> to vector<16x24xf32>
    %242 = arith.addf %140, %241 : vector<16x24xf32>
    %243 = vector.extract_strided_slice %240 {offsets = [16, 0], sizes = [16, 24], strides = [1, 1]} : vector<32x24xf32> to vector<16x24xf32>
    %244 = arith.addf %142, %243 : vector<16x24xf32>
    %c2_85 = arith.constant 2 : index
    %c0_86 = arith.constant 0 : index
    %c0_87 = arith.constant 0 : index
    %245 = vector.load %arg7[%c2_85, %c0_86, %c0_87] : memref<3x32x10xf32, #tpu.memory_space<vmem>>, vector<1x32x10xf32>
    %246 = vector.shape_cast %245 : vector<1x32x10xf32> to vector<32x10xf32>
    %247 = vector.extract_strided_slice %246 {offsets = [0, 0], sizes = [32, 1], strides = [1, 1]} : vector<32x10xf32> to vector<32x1xf32>
    %248 = vector.extract_strided_slice %246 {offsets = [0, 1], sizes = [32, 1], strides = [1, 1]} : vector<32x10xf32> to vector<32x1xf32>
    %249 = vector.extract_strided_slice %246 {offsets = [0, 2], sizes = [32, 1], strides = [1, 1]} : vector<32x10xf32> to vector<32x1xf32>
    %250 = vector.extract_strided_slice %246 {offsets = [0, 3], sizes = [32, 1], strides = [1, 1]} : vector<32x10xf32> to vector<32x1xf32>
    %251 = vector.extract_strided_slice %246 {offsets = [0, 4], sizes = [32, 1], strides = [1, 1]} : vector<32x10xf32> to vector<32x1xf32>
    %252 = vector.extract_strided_slice %246 {offsets = [0, 5], sizes = [32, 1], strides = [1, 1]} : vector<32x10xf32> to vector<32x1xf32>
    %253 = vector.extract_strided_slice %246 {offsets = [0, 6], sizes = [32, 1], strides = [1, 1]} : vector<32x10xf32> to vector<32x1xf32>
    %254 = vector.extract_strided_slice %246 {offsets = [0, 7], sizes = [32, 1], strides = [1, 1]} : vector<32x10xf32> to vector<32x1xf32>
    %255 = vector.extract_strided_slice %246 {offsets = [0, 8], sizes = [32, 1], strides = [1, 1]} : vector<32x10xf32> to vector<32x1xf32>
    %256 = vector.extract_strided_slice %246 {offsets = [0, 9], sizes = [32, 1], strides = [1, 1]} : vector<32x10xf32> to vector<32x1xf32>
    %c2_88 = arith.constant 2 : index
    %c0_89 = arith.constant 0 : index
    %c0_90 = arith.constant 0 : index
    %257 = vector.load %arg5[%c2_88, %c0_89, %c0_90] : memref<3x32x16xf32, #tpu.memory_space<vmem>>, vector<1x32x16xf32>
    %258 = vector.shape_cast %257 : vector<1x32x16xf32> to vector<32x16xf32>
    %cst_91 = arith.constant dense<0.000000e+00> : vector<32x24xf32>
    %259 = tpu.matmul %258, %242, %cst_91 {dimension_numbers = #tpu.dot_dimension_numbers<[1], [0], [0], [1], [0, 0, 1, 1], [], []>} : vector<32x16xf32>, vector<16x24xf32>, vector<32x24xf32> -> vector<32x24xf32>
    %260 = vector.broadcast %247 : vector<32x1xf32> to vector<32x24xf32>
    %261 = arith.addf %259, %260 : vector<32x24xf32>
    %c4 = arith.constant 4 : index
    %262 = memref.load %arg1[%c4] : memref<7xf32, #tpu.memory_space<smem>>
    %cst_92 = arith.constant 0.000000e+00 : f32
    %263 = vector.broadcast %cst_92 : f32 to vector<32x24xf32>
    %264 = arith.cmpf oge, %261, %263 : vector<32x24xf32>
    %265 = vector.broadcast %262 : f32 to vector<32x24xf32>
    %266 = arith.mulf %265, %261 : vector<32x24xf32>
    %267 = arith.select %264, %261, %266 : vector<32x24xi1>, vector<32x24xf32>
    %268 = vector.shape_cast %267 : vector<32x24xf32> to vector<1x32x24xf32>
    %cst_93 = arith.constant dense<0.000000e+00> : vector<1xf32>
    %269 = vector.multi_reduction <add>, %268, %cst_93 [1, 2] : vector<1x32x24xf32> to vector<1xf32>
    %270 = vector.shape_cast %269 : vector<1xf32> to vector<1x1x1xf32>
    %271 = vector.extract %270[0, 0, 0] : f32 from vector<1x1x1xf32>
    %272 = arith.mulf %267, %267 : vector<32x24xf32>
    %273 = vector.shape_cast %272 : vector<32x24xf32> to vector<1x32x24xf32>
    %cst_94 = arith.constant dense<0.000000e+00> : vector<1xf32>
    %274 = vector.multi_reduction <add>, %273, %cst_94 [1, 2] : vector<1x32x24xf32> to vector<1xf32>
    %275 = vector.shape_cast %274 : vector<1xf32> to vector<1x1x1xf32>
    %276 = vector.extract %275[0, 0, 0] : f32 from vector<1x1x1xf32>
    %cst_95 = arith.constant 0.00130208337 : f32
    %277 = arith.mulf %271, %cst_95 : f32
    %cst_96 = arith.constant 0.00130208337 : f32
    %278 = arith.mulf %276, %cst_96 : f32
    %279 = arith.mulf %277, %277 : f32
    %280 = arith.subf %278, %279 : f32
    %cst_97 = arith.constant 0.000000e+00 : f32
    %281 = arith.maximumf %280, %cst_97 : f32
    %282 = vector.broadcast %277 : f32 to vector<32x24xf32>
    %283 = arith.subf %267, %282 : vector<32x24xf32>
    %cst_98 = arith.constant 9.99999993E-9 : f32
    %284 = arith.addf %281, %cst_98 : f32
    %285 = math.rsqrt %284 : f32
    %286 = vector.broadcast %285 : f32 to vector<32x24xf32>
    %287 = arith.mulf %283, %286 : vector<32x24xf32>
    %288 = vector.broadcast %248 : vector<32x1xf32> to vector<32x24xf32>
    %289 = arith.mulf %288, %287 : vector<32x24xf32>
    %290 = vector.broadcast %249 : vector<32x1xf32> to vector<32x24xf32>
    %291 = arith.addf %289, %290 : vector<32x24xf32>
    %c2_99 = arith.constant 2 : index
    %c0_100 = arith.constant 0 : index
    %c0_101 = arith.constant 0 : index
    %c0_102 = arith.constant 0 : index
    %292 = vector.load %arg9[%c2_99, %c0_100, %c0_101, %c0_102] : memref<3x2x24x24xf32, #tpu.memory_space<vmem>>, vector<1x1x24x24xf32>
    %293 = vector.shape_cast %292 : vector<1x1x24x24xf32> to vector<24x24xf32>
    %cst_103 = arith.constant dense<0.000000e+00> : vector<32x24xf32>
    %294 = tpu.matmul %291, %293, %cst_103 {dimension_numbers = #tpu.dot_dimension_numbers<[1], [0], [0], [1], [0, 0, 1, 1], [], []>} : vector<32x24xf32>, vector<24x24xf32>, vector<32x24xf32> -> vector<32x24xf32>
    %c2_104 = arith.constant 2 : index
    %c1_105 = arith.constant 1 : index
    %c0_106 = arith.constant 0 : index
    %c0_107 = arith.constant 0 : index
    %295 = vector.load %arg9[%c2_104, %c1_105, %c0_106, %c0_107] : memref<3x2x24x24xf32, #tpu.memory_space<vmem>>, vector<1x1x24x24xf32>
    %296 = vector.shape_cast %295 : vector<1x1x24x24xf32> to vector<24x24xf32>
    %cst_108 = arith.constant dense<0.000000e+00> : vector<32x24xf32>
    %297 = tpu.matmul %291, %296, %cst_108 {dimension_numbers = #tpu.dot_dimension_numbers<[1], [0], [0], [1], [0, 0, 1, 1], [], []>} : vector<32x24xf32>, vector<24x24xf32>, vector<32x24xf32> -> vector<32x24xf32>
    %298 = vector.broadcast %250 : vector<32x1xf32> to vector<32x24xf32>
    %299 = arith.mulf %298, %294 : vector<32x24xf32>
    %300 = vector.broadcast %251 : vector<32x1xf32> to vector<32x24xf32>
    %301 = arith.mulf %300, %291 : vector<32x24xf32>
    %302 = arith.addf %299, %301 : vector<32x24xf32>
    %303 = vector.broadcast %252 : vector<32x1xf32> to vector<32x24xf32>
    %304 = arith.mulf %303, %297 : vector<32x24xf32>
    %305 = arith.addf %302, %304 : vector<32x24xf32>
    %306 = vector.broadcast %253 : vector<32x1xf32> to vector<32x24xf32>
    %307 = arith.addf %305, %306 : vector<32x24xf32>
    %c5 = arith.constant 5 : index
    %308 = memref.load %arg1[%c5] : memref<7xf32, #tpu.memory_space<smem>>
    %cst_109 = arith.constant 0.000000e+00 : f32
    %309 = vector.broadcast %cst_109 : f32 to vector<32x24xf32>
    %310 = arith.cmpf oge, %307, %309 : vector<32x24xf32>
    %311 = vector.broadcast %308 : f32 to vector<32x24xf32>
    %312 = arith.mulf %311, %307 : vector<32x24xf32>
    %313 = arith.select %310, %307, %312 : vector<32x24xi1>, vector<32x24xf32>
    %314 = vector.shape_cast %313 : vector<32x24xf32> to vector<1x32x24xf32>
    %cst_110 = arith.constant dense<0.000000e+00> : vector<1xf32>
    %315 = vector.multi_reduction <add>, %314, %cst_110 [1, 2] : vector<1x32x24xf32> to vector<1xf32>
    %316 = vector.shape_cast %315 : vector<1xf32> to vector<1x1x1xf32>
    %317 = vector.extract %316[0, 0, 0] : f32 from vector<1x1x1xf32>
    %318 = arith.mulf %313, %313 : vector<32x24xf32>
    %319 = vector.shape_cast %318 : vector<32x24xf32> to vector<1x32x24xf32>
    %cst_111 = arith.constant dense<0.000000e+00> : vector<1xf32>
    %320 = vector.multi_reduction <add>, %319, %cst_111 [1, 2] : vector<1x32x24xf32> to vector<1xf32>
    %321 = vector.shape_cast %320 : vector<1xf32> to vector<1x1x1xf32>
    %322 = vector.extract %321[0, 0, 0] : f32 from vector<1x1x1xf32>
    %cst_112 = arith.constant 0.00130208337 : f32
    %323 = arith.mulf %317, %cst_112 : f32
    %cst_113 = arith.constant 0.00130208337 : f32
    %324 = arith.mulf %322, %cst_113 : f32
    %325 = arith.mulf %323, %323 : f32
    %326 = arith.subf %324, %325 : f32
    %cst_114 = arith.constant 0.000000e+00 : f32
    %327 = arith.maximumf %326, %cst_114 : f32
    %328 = vector.broadcast %323 : f32 to vector<32x24xf32>
    %329 = arith.subf %313, %328 : vector<32x24xf32>
    %cst_115 = arith.constant 9.99999993E-9 : f32
    %330 = arith.addf %327, %cst_115 : f32
    %331 = math.rsqrt %330 : f32
    %332 = vector.broadcast %331 : f32 to vector<32x24xf32>
    %333 = arith.mulf %329, %332 : vector<32x24xf32>
    %334 = vector.broadcast %254 : vector<32x1xf32> to vector<32x24xf32>
    %335 = arith.mulf %334, %333 : vector<32x24xf32>
    %336 = vector.broadcast %255 : vector<32x1xf32> to vector<32x24xf32>
    %337 = arith.addf %335, %336 : vector<32x24xf32>
    %c2_116 = arith.constant 2 : index
    %c0_117 = arith.constant 0 : index
    %c0_118 = arith.constant 0 : index
    %338 = vector.load %arg6[%c2_116, %c0_117, %c0_118] : memref<3x32x32xf32, #tpu.memory_space<vmem>>, vector<1x32x32xf32>
    %339 = vector.shape_cast %338 : vector<1x32x32xf32> to vector<32x32xf32>
    %cst_119 = arith.constant dense<0.000000e+00> : vector<32x24xf32>
    %340 = tpu.matmul %339, %337, %cst_119 {dimension_numbers = #tpu.dot_dimension_numbers<[1], [0], [0], [1], [0, 0, 1, 1], [], []>} : vector<32x32xf32>, vector<32x24xf32>, vector<32x24xf32> -> vector<32x24xf32>
    %341 = vector.broadcast %256 : vector<32x1xf32> to vector<32x24xf32>
    %342 = arith.addf %340, %341 : vector<32x24xf32>
    %343 = vector.extract_strided_slice %342 {offsets = [16, 0], sizes = [16, 24], strides = [1, 1]} : vector<32x24xf32> to vector<16x24xf32>
    %344 = arith.addf %244, %343 : vector<16x24xf32>
    %c6 = arith.constant 6 : index
    %345 = memref.load %arg1[%c6] : memref<7xf32, #tpu.memory_space<smem>>
    %cst_120 = arith.constant 0.000000e+00 : f32
    %346 = vector.broadcast %cst_120 : f32 to vector<16x24xf32>
    %347 = arith.cmpf oge, %344, %346 : vector<16x24xf32>
    %348 = vector.broadcast %345 : f32 to vector<16x24xf32>
    %349 = arith.mulf %348, %344 : vector<16x24xf32>
    %350 = arith.select %347, %344, %349 : vector<16x24xi1>, vector<16x24xf32>
    %c0_121 = arith.constant 0 : index
    %c0_122 = arith.constant 0 : index
    %351 = vector.load %arg8[%c0_121, %c0_122] : memref<17x32xf32, #tpu.memory_space<vmem>>, vector<16x32xf32>
    %c16 = arith.constant 16 : index
    %c0_123 = arith.constant 0 : index
    %352 = vector.load %arg8[%c16, %c0_123] : memref<17x32xf32, #tpu.memory_space<vmem>>, vector<1x32xf32>
    %cst_124 = arith.constant dense<0.000000e+00> : vector<24x32xf32>
    %353 = tpu.matmul %350, %351, %cst_124 {dimension_numbers = #tpu.dot_dimension_numbers<[0], [0], [1], [1], [0, 1, 1, 1], [], []>} : vector<16x24xf32>, vector<16x32xf32>, vector<24x32xf32> -> vector<24x32xf32>
    %cst_125 = arith.constant dense<0.000000e+00> : vector<32xf32>
    %354 = vector.multi_reduction <add>, %353, %cst_125 [0] : vector<24x32xf32> to vector<32xf32>
    %355 = vector.shape_cast %354 : vector<32xf32> to vector<1x32xf32>
    %cst_126 = arith.constant 0.0416666679 : f32
    %356 = vector.broadcast %cst_126 : f32 to vector<1x32xf32>
    %357 = arith.mulf %355, %356 : vector<1x32xf32>
    %358 = arith.addf %357, %352 : vector<1x32xf32>
    %c0_127 = arith.constant 0 : index
    %c0_128 = arith.constant 0 : index
    %c0_129 = arith.constant 0 : index
    %359 = vector.load %arg10[%c0_127, %c0_128, %c0_129] : memref<1x1x32xf32, #tpu.memory_space<vmem>>, vector<1x1x32xf32>
    %360 = vector.shape_cast %359 : vector<1x1x32xf32> to vector<1x32xf32>
    %361 = vector.shape_cast %358 : vector<1x32xf32> to vector<1x1x32xf32>
    tpu.vector_store %arg10[%c0_127, %c0_128, %c0_129], %361 {strides = array<i32>} : memref<1x1x32xf32, #tpu.memory_space<vmem>>, vector<1x1x32xf32>,
    return
  }
  func.func @transform_0(%arg0: i32, %arg1: memref<7xf32, #tpu.memory_space<smem>>) -> (i32, i32, i32) {
    %c0_i32 = arith.constant 0 : i32
    %c0_i32_0 = arith.constant 0 : i32
    %c0_i32_1 = arith.constant 0 : i32
    return %arg0, %c0_i32, %c0_i32_0 : i32, i32, i32
  }
  func.func @transform_1(%arg0: i32, %arg1: memref<7xf32, #tpu.memory_space<smem>>) -> (i32, i32) {
    %c0_i32 = arith.constant 0 : i32
    %c0_i32_0 = arith.constant 0 : i32
    %c0_i32_1 = arith.constant 0 : i32
    return %c0_i32, %c0_i32_0 : i32, i32
  }
  func.func @transform_2(%arg0: i32, %arg1: memref<7xf32, #tpu.memory_space<smem>>) -> (i32, i32) {
    %c0_i32 = arith.constant 0 : i32
    %c0_i32_0 = arith.constant 0 : i32
    %c0_i32_1 = arith.constant 0 : i32
    return %c0_i32, %c0_i32_0 : i32, i32
  }
  func.func @transform_3(%arg0: i32, %arg1: memref<7xf32, #tpu.memory_space<smem>>) -> (i32, i32, i32) {
    %c0_i32 = arith.constant 0 : i32
    %c0_i32_0 = arith.constant 0 : i32
    %c0_i32_1 = arith.constant 0 : i32
    %c0_i32_2 = arith.constant 0 : i32
    return %c0_i32, %c0_i32_0, %c0_i32_1 : i32, i32, i32
  }
  func.func @transform_4(%arg0: i32, %arg1: memref<7xf32, #tpu.memory_space<smem>>) -> (i32, i32, i32) {
    %c0_i32 = arith.constant 0 : i32
    %c0_i32_0 = arith.constant 0 : i32
    %c0_i32_1 = arith.constant 0 : i32
    %c0_i32_2 = arith.constant 0 : i32
    return %c0_i32, %c0_i32_0, %c0_i32_1 : i32, i32, i32
  }
  func.func @transform_5(%arg0: i32, %arg1: memref<7xf32, #tpu.memory_space<smem>>) -> (i32, i32, i32) {
    %c0_i32 = arith.constant 0 : i32
    %c0_i32_0 = arith.constant 0 : i32
    %c0_i32_1 = arith.constant 0 : i32
    %c0_i32_2 = arith.constant 0 : i32
    return %c0_i32, %c0_i32_0, %c0_i32_1 : i32, i32, i32
  }
  func.func @transform_6(%arg0: i32, %arg1: memref<7xf32, #tpu.memory_space<smem>>) -> (i32, i32) {
    %c0_i32 = arith.constant 0 : i32
    %c0_i32_0 = arith.constant 0 : i32
    %c0_i32_1 = arith.constant 0 : i32
    return %c0_i32, %c0_i32_0 : i32, i32
  }
  func.func @transform_7(%arg0: i32, %arg1: memref<7xf32, #tpu.memory_space<smem>>) -> (i32, i32, i32, i32) {
    %c0_i32 = arith.constant 0 : i32
    %c0_i32_0 = arith.constant 0 : i32
    %c0_i32_1 = arith.constant 0 : i32
    %c0_i32_2 = arith.constant 0 : i32
    %c0_i32_3 = arith.constant 0 : i32
    return %c0_i32, %c0_i32_0, %c0_i32_1, %c0_i32_2 : i32, i32, i32, i32
  }
  func.func @transform_8(%arg0: i32, %arg1: memref<7xf32, #tpu.memory_space<smem>>) -> (i32, i32, i32) {
    %c0_i32 = arith.constant 0 : i32
    %c0_i32_0 = arith.constant 0 : i32
    %c0_i32_1 = arith.constant 0 : i32
    return %arg0, %c0_i32, %c0_i32_0 : i32, i32, i32
  }
}

</mosaic_0001>

<llo_original>
// kernel: net_forward.1
$region0: #{net_forward.1}
  #allocation0 [shape = 'u32[]', space=smem, size = 0x4, offset = 0x4, fixed_abs, tag = 'smem constant byte address 0x4 - core index']
  #allocation1 [shape = 'u32[144,128]{1,0:T(1,128)}', space=vmem, size = 0x12000, scoped, tag = 'internal scratch']
  #allocation2 [shape = 's32[1]{0}', space=sflag, size = 0x4, scoped, tag = 'scoped memory for net_forward.1']
  #allocation3 [shape = 'u8[512]{0}', space=smem, size = 0x200, scoped, tag = 'prefetched SMEM operand 0']
  %s0 = inlined_call_operand.vmem [shape: f32[7], index: 0, kind: input, shape index: {}]
  %s1 = inlined_call_operand.vmem [shape: f32[2,64,24], index: 1, kind: input, shape index: {}]
  %s2 = inlined_call_operand.vmem [shape: f32[32,67], index: 2, kind: input, shape index: {}]
  %s3 = inlined_call_operand.vmem [shape: f32[16,33], index: 3, kind: input, shape index: {}]
  %s4 = inlined_call_operand.vmem [shape: f32[3,32,16], index: 4, kind: input, shape index: {}]
  %s5 = inlined_call_operand.vmem [shape: f32[3,32,32], index: 5, kind: input, shape index: {}]
  %s6 = inlined_call_operand.vmem [shape: f32[3,32,10], index: 6, kind: input, shape index: {}]
  %s7 = inlined_call_operand.vmem [shape: f32[17,32], index: 7, kind: input, shape index: {}]
  %s8 = inlined_call_operand.vmem [shape: f32[3,2,24,24], index: 8, kind: input, shape index: {}]
  %s9 = inlined_call_operand.hbm [shape: f32[2,1,32], index: 9, kind: output, shape index: {}]
  %s10 = sld [smem:[#allocation0]]
  $region65: #{net_forward.1} parent=0
    _
  %s12 = ssub.s32 1, %s10
  %s13 = scalar_select 0, %s12, %s10
  %s14 = sshll.u32 %s0, 4
  %s15 = int_to_ptr.vmem [resolvable:$true] %s14
  %17 = dma.vmem_to_smem %s15, 16, [#allocation3], [#allocation2]
  %18 = dma.done [#allocation2], 16
  %19 = sfence
  $region1: #{net_forward.1} parent=0
    #allocation4 [shape = 'u8[1024]{0}', space=vmem, size = 0x400, scoped, tag = 'output window, operand 0']
    #allocation5 [shape = 's32[2]{0}', space=sflag, size = 0x8, scoped, tag = 'scoped memory for net_forward.1']
    %20 = vsyncpa [#allocation5], 0
    %s21 = scalar_lea.sflag [#allocation5], 1
    %22 = vsyncpa %s21, 0
    loop: start=0, step=1, limit=4
    $region2: #{net_forward.1} parent=1 // loop_pre_header
      _
    $region3: #{net_forward.1} parent=1 // loop_header
      %s24 = sphi 0, %s28
      %p25 = scmp.ge.s32.totalorder %s24, 4
      %s34 = sphi 0, %s36
      %s37 = sphi 0, %s34
      %s38 = sphi 0, %s37
      %s54 = sphi 0, %s38
      %s58 = sphi 0, %s58
      %s60 = sphi 0, %s58
      %s61 = sphi 0, %s60
      %s75 = sphi 0, %s61
      %s79 = sphi 0, %s79
      %s81 = sphi 0, %s79
      %s82 = sphi 0, %s81
      %s96 = sphi 0, %s82
      %s100 = sphi 0, %s100
      %s102 = sphi 0, %s100
      %s103 = sphi 0, %s102
      %s117 = sphi 0, %s103
      %s121 = sphi 0, %s121
      %s123 = sphi 0, %s121
      %s124 = sphi 0, %s123
      %s138 = sphi 0, %s124
      %s142 = sphi 0, %s142
      %s144 = sphi 0, %s142
      %s145 = sphi 0, %s144
      %s159 = sphi 0, %s145
      %s163 = sphi 0, %s163
      %s165 = sphi 0, %s163
      %s166 = sphi 0, %s165
      %s180 = sphi 0, %s166
      %s184 = sphi 0, %s184
      %s186 = sphi 0, %s184
      %s187 = sphi 0, %s186
      %s201 = sphi 0, %s187
      %s207 = sphi 0, %s209
      %s210 = sphi 0, %s207
      %s211 = sphi 0, %s210
      %s227 = sphi 0, %s211
    $region4: #{net_forward.1} parent=1 // loop_header_branch
      %27 = sbr.rel (%p25) target = $region8
    $region5: #{net_forward.1} parent=1 // loop_body
      %s29 = ssub.s32 %s24, 1
      %s30 = ssub.s32 %s24, 2
      %s31 = sadd.s32 %s24, 1
      %s32 = ssub.s32 %s24, %s31
      %p33 = scmp.eq.s32.totalorder %s32, 0
      %s35 = sadd.s32 %s34, 1
      %s36 = scalar_select %p33, %s34, %s35
      %p39 = pneg %p33
      %p40 = scmp.eq.s32.totalorder %s24, 1
      %p41 = por %p39, %p40
      %p42 = scmp.ne.s32.totalorder %s34, %s37
      %p43 = scmp.eq.s32.totalorder %s24, 0
      %p44 = por %p42, %p43
      %p45 = scmp.ne.s32.totalorder %s34, %s37
      %p46 = scmp.eq.s32.totalorder %s29, 1
      %p47 = por %p45, %p46
      %p48 = scmp.ne.s32.totalorder %s37, %s38
      %p49 = scmp.eq.s32.totalorder %s29, 0
      %p50 = por %p48, %p49
      %p51 = scmp.ne.s32.totalorder %s37, %s38
      %p52 = scmp.eq.s32.totalorder %s30, 1
      %p53 = por %p51, %p52
      %p55 = scmp.ne.s32.totalorder %s38, %s54
      %p56 = scmp.eq.s32.totalorder %s30, 0
      %p57 = por %p55, %p56
      %s59 = sadd.s32 %s58, 1
      %p62 = scmp.eq.s32.totalorder %s24, 1
      %p63 = scmp.ne.s32.totalorder %s58, %s60
      %p64 = scmp.eq.s32.totalorder %s24, 0
      %p65 = por %p63, %p64
      %p66 = scmp.ne.s32.totalorder %s58, %s60
      %p67 = scmp.eq.s32.totalorder %s29, 1
      %p68 = por %p66, %p67
      %p69 = scmp.ne.s32.totalorder %s60, %s61
      %p70 = scmp.eq.s32.totalorder %s29, 0
      %p71 = por %p69, %p70
      %p72 = scmp.ne.s32.totalorder %s60, %s61
      %p73 = scmp.eq.s32.totalorder %s30, 1
      %p74 = por %p72, %p73
      %p76 = scmp.ne.s32.totalorder %s61, %s75
      %p77 = scmp.eq.s32.totalorder %s30, 0
      %p78 = por %p76, %p77
      %s80 = sadd.s32 %s79, 1
      %p83 = scmp.eq.s32.totalorder %s24, 1
      %p84 = scmp.ne.s32.totalorder %s79, %s81
      %p85 = scmp.eq.s32.totalorder %s24, 0
      %p86 = por %p84, %p85
      %p87 = scmp.ne.s32.totalorder %s79, %s81
      %p88 = scmp.eq.s32.totalorder %s29, 1
      %p89 = por %p87, %p88
      %p90 = scmp.ne.s32.totalorder %s81, %s82
      %p91 = scmp.eq.s32.totalorder %s29, 0
      %p92 = por %p90, %p91
      %p93 = scmp.ne.s32.totalorder %s81, %s82
      %p94 = scmp.eq.s32.totalorder %s30, 1
      %p95 = por %p93, %p94
      %p97 = scmp.ne.s32.totalorder %s82, %s96
      %p98 = scmp.eq.s32.totalorder %s30, 0
      %p99 = por %p97, %p98
      %s101 = sadd.s32 %s100, 1
      %p104 = scmp.eq.s32.totalorder %s24, 1
      %p105 = scmp.ne.s32.totalorder %s100, %s102
      %p106 = scmp.eq.s32.totalorder %s24, 0
      %p107 = por %p105, %p106
      %p108 = scmp.ne.s32.totalorder %s100, %s102
      %p109 = scmp.eq.s32.totalorder %s29, 1
      %p110 = por %p108, %p109
      %p111 = scmp.ne.s32.totalorder %s102, %s103
      %p112 = scmp.eq.s32.totalorder %s29, 0
      %p113 = por %p111, %p112
      %p114 = scmp.ne.s32.totalorder %s102, %s103
      %p115 = scmp.eq.s32.totalorder %s30, 1
      %p116 = por %p114, %p115
      %p118 = scmp.ne.s32.totalorder %s103, %s117
      %p119 = scmp.eq.s32.totalorder %s30, 0
      %p120 = por %p118, %p119
      %s122 = sadd.s32 %s121, 1
      %p125 = scmp.eq.s32.totalorder %s24, 1
      %p126 = scmp.ne.s32.totalorder %s121, %s123
      %p127 = scmp.eq.s32.totalorder %s24, 0
      %p128 = por %p126, %p127
      %p129 = scmp.ne.s32.totalorder %s121, %s123
      %p130 = scmp.eq.s32.totalorder %s29, 1
      %p131 = por %p129, %p130
      %p132 = scmp.ne.s32.totalorder %s123, %s124
      %p133 = scmp.eq.s32.totalorder %s29, 0
      %p134 = por %p132, %p133
      %p135 = scmp.ne.s32.totalorder %s123, %s124
      %p136 = scmp.eq.s32.totalorder %s30, 1
      %p137 = por %p135, %p136
      %p139 = scmp.ne.s32.totalorder %s124, %s138
      %p140 = scmp.eq.s32.totalorder %s30, 0
      %p141 = por %p139, %p140
      %s143 = sadd.s32 %s142, 1
      %p146 = scmp.eq.s32.totalorder %s24, 1
      %p147 = scmp.ne.s32.totalorder %s142, %s144
      %p148 = scmp.eq.s32.totalorder %s24, 0
      %p149 = por %p147, %p148
      %p150 = scmp.ne.s32.totalorder %s142, %s144
      %p151 = scmp.eq.s32.totalorder %s29, 1
      %p152 = por %p150, %p151
      %p153 = scmp.ne.s32.totalorder %s144, %s145
      %p154 = scmp.eq.s32.totalorder %s29, 0
      %p155 = por %p153, %p154
      %p156 = scmp.ne.s32.totalorder %s144, %s145
      %p157 = scmp.eq.s32.totalorder %s30, 1
      %p158 = por %p156, %p157
      %p160 = scmp.ne.s32.totalorder %s145, %s159
      %p161 = scmp.eq.s32.totalorder %s30, 0
      %p162 = por %p160, %p161
      %s164 = sadd.s32 %s163, 1
      %p167 = scmp.eq.s32.totalorder %s24, 1
      %p168 = scmp.ne.s32.totalorder %s163, %s165
      %p169 = scmp.eq.s32.totalorder %s24, 0
      %p170 = por %p168, %p169
      %p171 = scmp.ne.s32.totalorder %s163, %s165
      %p172 = scmp.eq.s32.totalorder %s29, 1
      %p173 = por %p171, %p172
      %p174 = scmp.ne.s32.totalorder %s165, %s166
      %p175 = scmp.eq.s32.totalorder %s29, 0
      %p176 = por %p174, %p175
      %p177 = scmp.ne.s32.totalorder %s165, %s166
      %p178 = scmp.eq.s32.totalorder %s30, 1
      %p179 = por %p177, %p178
      %p181 = scmp.ne.s32.totalorder %s166, %s180
      %p182 = scmp.eq.s32.totalorder %s30, 0
      %p183 = por %p181, %p182
      %s185 = sadd.s32 %s184, 1
      %p188 = scmp.eq.s32.totalorder %s24, 1
      %p189 = scmp.ne.s32.totalorder %s184, %s186
      %p190 = scmp.eq.s32.totalorder %s24, 0
      %p191 = por %p189, %p190
      %p192 = scmp.ne.s32.totalorder %s184, %s186
      %p193 = scmp.eq.s32.totalorder %s29, 1
      %p194 = por %p192, %p193
      %p195 = scmp.ne.s32.totalorder %s186, %s187
      %p196 = scmp.eq.s32.totalorder %s29, 0
      %p197 = por %p195, %p196
      %p198 = scmp.ne.s32.totalorder %s186, %s187
      %p199 = scmp.eq.s32.totalorder %s30, 1
      %p200 = por %p198, %p199
      %p202 = scmp.ne.s32.totalorder %s187, %s201
      %p203 = scmp.eq.s32.totalorder %s30, 0
      %p204 = por %p202, %p203
      %s205 = ssub.s32 %s24, %s31
      %p206 = scmp.eq.s32.totalorder %s205, 0
      %s208 = sadd.s32 %s207, 1
      %s209 = scalar_select %p206, %s207, %s208
      %p212 = pneg %p206
      %p213 = scmp.eq.s32.totalorder %s24, 1
      %p214 = por %p212, %p213
      %p215 = scmp.ne.s32.totalorder %s207, %s210
      %p216 = scmp.eq.s32.totalorder %s24, 0
      %p217 = por %p215, %p216
      %p218 = scmp.ne.s32.totalorder %s207, %s210
      %p219 = scmp.eq.s32.totalorder %s29, 1
      %p220 = por %p218, %p219
      %p221 = scmp.ne.s32.totalorder %s210, %s211
      %p222 = scmp.eq.s32.totalorder %s29, 0
      %p223 = por %p221, %p222
      %p224 = scmp.ne.s32.totalorder %s210, %s211
      %p225 = scmp.eq.s32.totalorder %s30, 1
      %p226 = por %p224, %p225
      %p228 = scmp.ne.s32.totalorder %s211, %s227
      %p229 = scmp.eq.s32.totalorder %s30, 0
      %p230 = por %p228, %p229
      %p231 = scmp.le.s32.totalorder 1, %s24
      %p232 = scmp.lt.s32.totalorder %s24, 3
      %p233 = pnand %p231, %p232
      %p234 = pneg %p233
      // Predicated region
      $region9: #{net_forward.1} parent=5 // pred_check
        _
      $region10: #{net_forward.1} parent=5 // pred_check_branch
        %236 = sbr.rel (%p233) target = $region12
      $region11: #{net_forward.1} parent=5 // pred_region
        %s237 = ssub.s32 %s24, 1
        // Predicated region
        $region13: #{net_forward.1} parent=11 // pred_check
          %p238 = pneg %p71
        $region14: #{net_forward.1} parent=11 // pred_check_branch
          %240 = sbr.rel (%p238) target = $region16
        $region15: #{net_forward.1} parent=11 // pred_region
          _
        $region16: #{net_forward.1} parent=11 // pred_fallthru
          _
        // Predicated region
        $region17: #{net_forward.1} parent=11 // pred_check
          %p241 = pneg %p92
        $region18: #{net_forward.1} parent=11 // pred_check_branch
          %243 = sbr.rel (%p241) target = $region20
        $region19: #{net_forward.1} parent=11 // pred_region
          _
        $region20: #{net_forward.1} parent=11 // pred_fallthru
          _
        // Predicated region
        $region21: #{net_forward.1} parent=11 // pred_check
          %p244 = pneg %p113
        $region22: #{net_forward.1} parent=11 // pred_check_branch
          %246 = sbr.rel (%p244) target = $region24
        $region23: #{net_forward.1} parent=11 // pred_region
          _
        $region24: #{net_forward.1} parent=11 // pred_fallthru
          _
        // Predicated region
        $region25: #{net_forward.1} parent=11 // pred_check
          %p247 = pneg %p134
        $region26: #{net_forward.1} parent=11 // pred_check_branch
          %249 = sbr.rel (%p247) target = $region28
        $region27: #{net_forward.1} parent=11 // pred_region
          _
        $region28: #{net_forward.1} parent=11 // pred_fallthru
          _
        // Predicated region
        $region29: #{net_forward.1} parent=11 // pred_check
          %p250 = pneg %p155
        $region30: #{net_forward.1} parent=11 // pred_check_branch
          %252 = sbr.rel (%p250) target = $region32
        $region31: #{net_forward.1} parent=11 // pred_region
          _
        $region32: #{net_forward.1} parent=11 // pred_fallthru
          _
        // Predicated region
        $region33: #{net_forward.1} parent=11 // pred_check
          %p253 = pneg %p176
        $region34: #{net_forward.1} parent=11 // pred_check_branch
          %255 = sbr.rel (%p253) target = $region36
        $region35: #{net_forward.1} parent=11 // pred_region
          _
        $region36: #{net_forward.1} parent=11 // pred_fallthru
          _
        // Predicated region
        $region37: #{net_forward.1} parent=11 // pred_check
          %p256 = pneg %p197
        $region38: #{net_forward.1} parent=11 // pred_check_branch
          %258 = sbr.rel (%p256) target = $region40
        $region39: #{net_forward.1} parent=11 // pred_region
          _
        $region40: #{net_forward.1} parent=11 // pred_fallthru
          _
      $region12: #{net_forward.1} parent=5 // pred_fallthru
        _
      %p259 = scmp.lt.s32.totalorder %s24, 2
      // Predicated region
      $region41: #{net_forward.1} parent=5 // pred_check
        %p260 = pneg %p259
      $region42: #{net_forward.1} parent=5 // pred_check_branch
        %262 = sbr.rel (%p260) target = $region44
      $region43: #{net_forward.1} parent=5 // pred_region
        // Predicated region
        $region45: #{net_forward.1} parent=43 // pred_check
          %p263 = pneg %p44
        $region46: #{net_forward.1} parent=43 // pred_check_branch
          %265 = sbr.rel (%p263) target = $region48
        $region47: #{net_forward.1} parent=43 // pred_region
          %p266 = scmp.lt.s32.totalorder %s24, 1
          %s267 = scalar_select %p266, %s24, 1
          %s268 = smul.addr %s267, 8
          %s269 = smul.addr %s268, 8
          %s270 = scalar_lea.vmem %s1, %s269
        $region48: #{net_forward.1} parent=43 // pred_fallthru
          _
      $region44: #{net_forward.1} parent=5 // pred_fallthru
        _
      %p271 = scmp.le.s32.totalorder 1, %s24
      %p272 = scmp.lt.s32.totalorder %s24, 3
      %p273 = pnand %p271, %p272
      %p274 = pneg %p273
      // Predicated region
      $region49: #{net_forward.1} parent=5 // pred_check
        _
      $region50: #{net_forward.1} parent=5 // pred_check_branch
        %276 = sbr.rel (%p273) target = $region52
      $region51: #{net_forward.1} parent=5 // pred_region
        %s277 = ssub.s32 %s24, 1
        %p278 = scmp.lt.s32.totalorder %s29, 1
        %s279 = scalar_select %p278, %s29, 1
        %s280 = smul.addr %s279, 8
        %s281 = smul.addr %s280, 8
        %s282 = scalar_lea.vmem %s1, %s281
        %p283 = pneg %p50
        %p284 = pneg %p47
        %p285 = pneg %p71
        %p286 = pneg %p68
        %p287 = pneg %p92
        %p288 = pneg %p89
        %p289 = pneg %p113
        %p290 = pneg %p110
        %p291 = pneg %p134
        %p292 = pneg %p131
        %p293 = pneg %p155
        %p294 = pneg %p152
        %p295 = pneg %p176
        %p296 = pneg %p173
        %p297 = pneg %p197
        %p298 = pneg %p194
        %p299 = pneg %p223
        %p300 = pneg %p220
        %s301 = sand.u32 %s210, 1
        %s302 = scalar_lea.sflag [#allocation5], %s301
        %s303 = sand.u32 %s210, 1
        %s304 = scalar_lea.vmem [#allocation4], %s303
        %p305 = scmp.lt.s32.totalorder %s29, 1
        %s306 = scalar_select %p305, %s29, 1
        %s307 = smul.addr %s306, 8
        %s308 = smul.addr %s307, 8
        %s309 = scalar_lea.vmem %s1, %s308
        %v310 = vld [vmem:[%s309] sm:$0xff]
        %v311 = vld [vmem:[%s309 + $0x8] sm:$0xff]
        %v312 = vld [vmem:[%s309 + $0x10] sm:$0xff]
        %v313 = vld [vmem:[%s309 + $0x18] sm:$0xff]
        %v314 = vld [vmem:[%s309 + $0x20] sm:$0xff]
        %v315 = vld [vmem:[%s309 + $0x28] sm:$0xff]
        %v316 = vld [vmem:[%s309 + $0x30] sm:$0xff]
        %v317 = vld [vmem:[%s309 + $0x38] sm:$0xff]
        %v318 = vld [vmem:[%s2] sm:$0xff]
        %v319 = vld [vmem:[%s2 + $0x8] sm:$0xff]
        %v320 = vld [vmem:[%s2 + $0x10] sm:$0xff]
        %v321 = vld [vmem:[%s2 + $0x18] sm:$0xff]
        %323 = vset.pattern.permute.xlu0 64
        %324 = vperm.xlu0 %323, %v318
        %v325 = vpop.permute.xlu0 %324
        %328 = vset.pattern.permute.xlu0 64
        %329 = vperm.xlu0 %328, %v319
        %v330 = vpop.permute.xlu0 %329
        %333 = vset.pattern.permute.xlu0 64
        %334 = vperm.xlu0 %333, %v320
        %v335 = vpop.permute.xlu0 %334
        %338 = vset.pattern.permute.xlu0 64
        %339 = vperm.xlu0 %338, %v321
        %v340 = vpop.permute.xlu0 %339
        %vm342 = vcmask 523264
        %v343 = vsel %vm342, %v318, 0
        %v345 = vsel %vm342, %v319, 0
        %v347 = vsel %vm342, %v320, 0
        %v349 = vsel %vm342, %v321, 0
        %351 = vmatprep.subr.mxu0 0.0
        %352 = vmatpush1.msra.mxu0 %v310
        %353 = vmatprep.subr.mxu0 0.0
        %354 = vmatpush1.msra.mxu0 %v311
        %355 = vmatprep.subr.mxu0 0.0
        %356 = vmatpush1.msra.mxu0 %v312
        %357 = vmatprep.subr.mxu0 0.0
        %358 = vmatpush1.msra.mxu0 %v313
        %359 = vmatprep.subr.mxu0 0.0
        %360 = vmatpush1.msra.mxu0 %v314
        %361 = vmatprep.subr.mxu0 0.0
        %362 = vmatpush1.msra.mxu0 %v315
        %363 = vmatprep.subr.mxu0 0.0
        %364 = vmatpush1.msra.mxu0 %v316
        %365 = vmatprep.subr.mxu0 0.0
        %366 = vmatpush1.msra.mxu0 %v317
        %367 = vmatprep.subr.mxu0 0.0
        %368 = vmatpush1.msra.mxu0 0.0
        %369 = vmatprep.subr.mxu0 0.0
        %370 = vmatpush1.msra.mxu0 0.0
        %371 = vmatprep.subr.mxu0 0.0
        %372 = vmatpush1.msra.mxu0 0.0
        %373 = vmatprep.subr.mxu0 0.0
        %374 = vmatpush1.msra.mxu0 0.0
        %375 = vmatprep.subr.mxu0 0.0
        %376 = vmatpush1.msra.mxu0 0.0
        %377 = vmatprep.subr.mxu0 0.0
        %378 = vmatpush1.msra.mxu0 0.0
        %379 = vmatprep.subr.mxu0 0.0
        %380 = vmatpush1.msra.mxu0 0.0
        %381 = vmatprep.subr.mxu0 0.0
        %382 = vmatpush1.msra.mxu0 0.0
        %383 = vmatprep.subr.mxu0 0.0
        %384 = vmatpush1.msra.mxu0 0.0
        %385 = vmatprep.subr.mxu0 0.0
        %386 = vmatpush1.msra.mxu0 0.0
        %387 = vmatprep.subr.mxu0 0.0
        %388 = vmatpush1.msra.mxu0 0.0
        %389 = vmatprep.subr.mxu0 0.0
        %390 = vmatpush1.msra.mxu0 0.0
        %391 = vmatprep.subr.mxu0 0.0
        %392 = vmatpush1.msra.mxu0 0.0
        %393 = vmatprep.subr.mxu0 0.0
        %394 = vmatpush1.msra.mxu0 0.0
        %395 = vmatprep.subr.mxu0 0.0
        %396 = vmatpush1.msra.mxu0 0.0
        %397 = vmatprep.subr.mxu0 0.0
        %398 = vmatpush1.msra.mxu0 0.0
        %399 = vmatprep.subr.mxu0 0.0
        %400 = vmatpush1.msra.mxu0 0.0
        %401 = vmatprep.subr.mxu0 0.0
        %402 = vmatpush1.msra.mxu0 0.0
        %403 = vmatprep.subr.mxu0 0.0
        %404 = vmatpush1.msra.mxu0 0.0
        %405 = vmatprep.subr.mxu0 0.0
        %406 = vmatpush1.msra.mxu0 0.0
        %407 = vmatprep.subr.mxu0 0.0
        %408 = vmatpush1.msra.mxu0 0.0
        %409 = vmatprep.subr.mxu0 0.0
        %410 = vmatpush1.msra.mxu0 0.0
        %411 = vmatprep.subr.mxu0 0.0
        %412 = vmatpush1.msra.mxu0 0.0
        %413 = vmatprep.subr.mxu0 0.0
        %414 = vmatpush1.msra.mxu0 0.0
        %415 = vmatprep.mubr.f32.mxu0 0.0
        %416 = vmatmul.mubr.f32.gmra.mrb[0].mxu0 %v343
        %v417 = vpop.f32.mrb[0].mxu0
        %v418 = vadd.f32 %v325, %v417
        %v419 = vpop.f32.mrb[0].mxu0
        %420 = vmatprep.mubr.f32.mxu0 0.0
        %421 = vmatmul.mubr.f32.gmra.mrb[0].mxu0 %v345
        %v422 = vpop.f32.mrb[0].mxu0
        %v423 = vadd.f32 %v330, %v422
        %v424 = vpop.f32.mrb[0].mxu0
        %425 = vmatprep.mubr.f32.mxu0 0.0
        %426 = vmatmul.mubr.f32.gmra.mrb[0].mxu0 %v347
        %v427 = vpop.f32.mrb[0].mxu0
        %v428 = vadd.f32 %v335, %v427
        %v429 = vpop.f32.mrb[0].mxu0
        %430 = vmatprep.mubr.f32.mxu0 0.0
        %431 = vmatmul.mubr.f32.gmra.mrb[0].mxu0 %v349
        %v432 = vpop.f32.mrb[0].mxu0
        %v433 = vadd.f32 %v340, %v432
        %v434 = vpop.f32.mrb[0].mxu0
        %435 = vdwg.mxu0
        %v436 = vld [vmem:[%s3] sm:$0xff]
        %v437 = vld [vmem:[%s3 + $0x8] sm:$0xff]
        %vm438 = vcmask 195584
        %v439 = vsel %vm438, %v418, 0.0
        %v440 = vsel %vm438, %v423, 0.0
        %v441 = vadd.f32 %v439, %v440
        %v442 = vsel %vm438, %v428, 0.0
        %v443 = vadd.f32 %v441, %v442
        %v444 = vsel %vm438, %v433, 0.0
        %v445 = vadd.f32 %v443, %v444
        %446 = vadd.xlane.f32.xlu0 %v445
        %v447 = vpop.xlane.xlu0 %446
        %v448 = vrot.slane %v447, 4
        %v449 = vadd.f32 %v447, %v448
        %v450 = vrot.slane %v449, 2
        %v451 = vadd.f32 %v449, %v450
        %v452 = vrot.slane %v451, 1
        %v453 = vadd.f32 %v451, %v452
        %s454 = vtos %v453
        %v455 = vmul.f32 %v418, %v418
        %v456 = vmul.f32 %v423, %v423
        %v457 = vmul.f32 %v428, %v428
        %v458 = vmul.f32 %v433, %v433
        %v459 = vsel %vm438, %v455, 0.0
        %v460 = vsel %vm438, %v456, 0.0
        %v461 = vadd.f32 %v459, %v460
        %v462 = vsel %vm438, %v457, 0.0
        %v463 = vadd.f32 %v461, %v462
        %v464 = vsel %vm438, %v458, 0.0
        %v465 = vadd.f32 %v463, %v464
        %466 = vadd.xlane.f32.xlu0 %v465
        %v467 = vpop.xlane.xlu0 %466
        %v468 = vrot.slane %v467, 4
        %v469 = vadd.f32 %v467, %v468
        %v470 = vrot.slane %v469, 2
        %v471 = vadd.f32 %v469, %v470
        %v472 = vrot.slane %v471, 1
        %v473 = vadd.f32 %v471, %v472
        %s474 = vtos %v473
        %s475 = smul.f32 %s454, 0.0013020834
        %s476 = smul.f32 %s474, 0.0013020834
        %s477 = smul.f32 %s475, %s475
        %s478 = ssub.f32 %s476, %s477
        %s479 = smax.f32 %s478, 0.0
        %v480 = vstv %s475
        %v481 = vsub.f32 %v418, %v480
        %v482 = vsub.f32 %v423, %v480
        %v483 = vsub.f32 %v428, %v480
        %v484 = vsub.f32 %v433, %v480
        %s485 = sadd.f32 %s479, 1e-08
        %v486 = vstv %s485
        %v487 = vrsqrt.pop %v486
        %s488 = vtos %v487
        %v489 = vstv %s488
        %v490 = vmul.f32 %v481, %v489
        %v491 = vmul.f32 %v482, %v489
        %v492 = vmul.f32 %v483, %v489
        %v493 = vmul.f32 %v484, %v489
        %494 = vset.pattern.permute.xlu0 65
        %495 = vperm.xlu0 %494, %v318
        %v496 = vpop.permute.xlu0 %495
        %498 = vset.pattern.permute.xlu0 65
        %499 = vperm.xlu0 %498, %v319
        %v500 = vpop.permute.xlu0 %499
        %502 = vset.pattern.permute.xlu0 65
        %503 = vperm.xlu0 %502, %v320
        %v504 = vpop.permute.xlu0 %503
        %506 = vset.pattern.permute.xlu0 65
        %507 = vperm.xlu0 %506, %v321
        %v508 = vpop.permute.xlu0 %507
        %v510 = vmul.f32 %v496, %v490
        %v511 = vmul.f32 %v500, %v491
        %v512 = vmul.f32 %v504, %v492
        %v513 = vmul.f32 %v508, %v493
        %514 = vset.pattern.permute.xlu0 66
        %515 = vperm.xlu0 %514, %v318
        %v516 = vpop.permute.xlu0 %515
        %518 = vset.pattern.permute.xlu0 66
        %519 = vperm.xlu0 %518, %v319
        %v520 = vpop.permute.xlu0 %519
        %522 = vset.pattern.permute.xlu0 66
        %523 = vperm.xlu0 %522, %v320
        %v524 = vpop.permute.xlu0 %523
        %526 = vset.pattern.permute.xlu0 66
        %527 = vperm.xlu0 %526, %v321
        %v528 = vpop.permute.xlu0 %527
        %v530 = vadd.f32 %v510, %v516
        %v531 = vadd.f32 %v511, %v520
        %v532 = vadd.f32 %v512, %v524
        %v533 = vadd.f32 %v513, %v528
        %535 = vset.pattern.permute.xlu0 32
        %536 = vperm.xlu0 %535, %v436
        %v537 = vpop.permute.xlu0 %536
        %540 = vset.pattern.permute.xlu0 32
        %541 = vperm.xlu0 %540, %v437
        %v542 = vpop.permute.xlu0 %541
        %vm544 = vcmask 261120
        %v545 = vsel %vm544, %v436, 0
        %v547 = vsel %vm544, %v437, 0
        %549 = vmatprep.subr.mxu0 0.0
        %550 = vmatpush1.msra.mxu0 %v530
        %551 = vmatprep.subr.mxu0 0.0
        %552 = vmatpush1.msra.mxu0 %v531
        %553 = vmatprep.subr.mxu0 0.0
        %554 = vmatpush1.msra.mxu0 %v532
        %555 = vmatprep.subr.mxu0 0.0
        %556 = vmatpush1.msra.mxu0 %v533
        %557 = vmatprep.subr.mxu0 0.0
        %558 = vmatpush1.msra.mxu0 0.0
        %559 = vmatprep.subr.mxu0 0.0
        %560 = vmatpush1.msra.mxu0 0.0
        %561 = vmatprep.subr.mxu0 0.0
        %562 = vmatpush1.msra.mxu0 0.0
        %563 = vmatprep.subr.mxu0 0.0
        %564 = vmatpush1.msra.mxu0 0.0
        %565 = vmatprep.subr.mxu0 0.0
        %566 = vmatpush1.msra.mxu0 0.0
        %567 = vmatprep.subr.mxu0 0.0
        %568 = vmatpush1.msra.mxu0 0.0
        %569 = vmatprep.subr.mxu0 0.0
        %570 = vmatpush1.msra.mxu0 0.0
        %571 = vmatprep.subr.mxu0 0.0
        %572 = vmatpush1.msra.mxu0 0.0
        %573 = vmatprep.subr.mxu0 0.0
        %574 = vmatpush1.msra.mxu0 0.0
        %575 = vmatprep.subr.mxu0 0.0
        %576 = vmatpush1.msra.mxu0 0.0
        %577 = vmatprep.subr.mxu0 0.0
        %578 = vmatpush1.msra.mxu0 0.0
        %579 = vmatprep.subr.mxu0 0.0
        %580 = vmatpush1.msra.mxu0 0.0
        %581 = vmatprep.subr.mxu0 0.0
        %582 = vmatpush1.msra.mxu0 0.0
        %583 = vmatprep.subr.mxu0 0.0
        %584 = vmatpush1.msra.mxu0 0.0
        %585 = vmatprep.subr.mxu0 0.0
        %586 = vmatpush1.msra.mxu0 0.0
        %587 = vmatprep.subr.mxu0 0.0
        %588 = vmatpush1.msra.mxu0 0.0
        %589 = vmatprep.subr.mxu0 0.0
        %590 = vmatpush1.msra.mxu0 0.0
        %591 = vmatprep.subr.mxu0 0.0
        %592 = vmatpush1.msra.mxu0 0.0
        %593 = vmatprep.subr.mxu0 0.0
        %594 = vmatpush1.msra.mxu0 0.0
        %595 = vmatprep.subr.mxu0 0.0
        %596 = vmatpush1.msra.mxu0 0.0
        %597 = vmatprep.subr.mxu0 0.0
        %598 = vmatpush1.msra.mxu0 0.0
        %599 = vmatprep.subr.mxu0 0.0
        %600 = vmatpush1.msra.mxu0 0.0
        %601 = vmatprep.subr.mxu0 0.0
        %602 = vmatpush1.msra.mxu0 0.0
        %603 = vmatprep.subr.mxu0 0.0
        %604 = vmatpush1.msra.mxu0 0.0
        %605 = vmatprep.subr.mxu0 0.0
        %606 = vmatpush1.msra.mxu0 0.0
        %607 = vmatprep.subr.mxu0 0.0
        %608 = vmatpush1.msra.mxu0 0.0
        %609 = vmatprep.subr.mxu0 0.0
        %610 = vmatpush1.msra.mxu0 0.0
        %611 = vmatprep.subr.mxu0 0.0
        %612 = vmatpush1.msra.mxu0 0.0
        %613 = vmatprep.mubr.f32.mxu0 0.0
        %614 = vmatmul.mubr.f32.gmra.mrb[0].mxu0 %v545
        %v615 = vpop.f32.mrb[0].mxu0
        %v616 = vadd.f32 %v537, %v615
        %v617 = vpop.f32.mrb[0].mxu0
        %618 = vmatprep.mubr.f32.mxu0 0.0
        %619 = vmatmul.mubr.f32.gmra.mrb[0].mxu0 %v547
        %v620 = vpop.f32.mrb[0].mxu0
        %v621 = vadd.f32 %v542, %v620
        %v622 = vpop.f32.mrb[0].mxu0
        %623 = vdwg.mxu0
        %v624 = vld [vmem:[%s6] sm:$0xff]
        %v625 = vld [vmem:[%s6 + $0x8] sm:$0xff]
        %v626 = vld [vmem:[%s6 + $0x10] sm:$0xff]
        %v627 = vld [vmem:[%s6 + $0x18] sm:$0xff]
        %v628 = vld [vmem:[%s4] sm:$0xff]
        %v629 = vld [vmem:[%s4 + $0x8] sm:$0xff]
        %v630 = vld [vmem:[%s4 + $0x10] sm:$0xff]
        %v631 = vld [vmem:[%s4 + $0x18] sm:$0xff]
        %633 = vset.pattern.permute.xlu0 0
        %634 = vperm.xlu0 %633, %v624
        %v635 = vpop.permute.xlu0 %634
        %638 = vset.pattern.permute.xlu0 0
        %639 = vperm.xlu0 %638, %v625
        %v640 = vpop.permute.xlu0 %639
        %643 = vset.pattern.permute.xlu0 0
        %644 = vperm.xlu0 %643, %v626
        %v645 = vpop.permute.xlu0 %644
        %648 = vset.pattern.permute.xlu0 0
        %649 = vperm.xlu0 %648, %v627
        %v650 = vpop.permute.xlu0 %649
        %vm652 = vcmask 130048
        %v654 = vsel %vm652, %v628, 0
        %v657 = vsel %vm652, %v629, 0
        %v660 = vsel %vm652, %v630, 0
        %v663 = vsel %vm652, %v631, 0
        %665 = vmatprep.subr.mxu0 0.0
        %666 = vmatpush1.msra.mxu0 %v616
        %667 = vmatprep.subr.mxu0 0.0
        %668 = vmatpush1.msra.mxu0 %v621
        %669 = vmatprep.subr.mxu0 0.0
        %670 = vmatpush1.msra.mxu0 0.0
        %671 = vmatprep.subr.mxu0 0.0
        %672 = vmatpush1.msra.mxu0 0.0
        %673 = vmatprep.subr.mxu0 0.0
        %674 = vmatpush1.msra.mxu0 0.0
        %675 = vmatprep.subr.mxu0 0.0
        %676 = vmatpush1.msra.mxu0 0.0
        %677 = vmatprep.subr.mxu0 0.0
        %678 = vmatpush1.msra.mxu0 0.0
        %679 = vmatprep.subr.mxu0 0.0
        %680 = vmatpush1.msra.mxu0 0.0
        %681 = vmatprep.subr.mxu0 0.0
        %682 = vmatpush1.msra.mxu0 0.0
        %683 = vmatprep.subr.mxu0 0.0
        %684 = vmatpush1.msra.mxu0 0.0
        %685 = vmatprep.subr.mxu0 0.0
        %686 = vmatpush1.msra.mxu0 0.0
        %687 = vmatprep.subr.mxu0 0.0
        %688 = vmatpush1.msra.mxu0 0.0
        %689 = vmatprep.subr.mxu0 0.0
        %690 = vmatpush1.msra.mxu0 0.0
        %691 = vmatprep.subr.mxu0 0.0
        %692 = vmatpush1.msra.mxu0 0.0
        %693 = vmatprep.subr.mxu0 0.0
        %694 = vmatpush1.msra.mxu0 0.0
        %695 = vmatprep.subr.mxu0 0.0
        %696 = vmatpush1.msra.mxu0 0.0
        %697 = vmatprep.subr.mxu0 0.0
        %698 = vmatpush1.msra.mxu0 0.0
        %699 = vmatprep.subr.mxu0 0.0
        %700 = vmatpush1.msra.mxu0 0.0
        %701 = vmatprep.subr.mxu0 0.0
        %702 = vmatpush1.msra.mxu0 0.0
        %703 = vmatprep.subr.mxu0 0.0
        %704 = vmatpush1.msra.mxu0 0.0
        %705 = vmatprep.subr.mxu0 0.0
        %706 = vmatpush1.msra.mxu0 0.0
        %707 = vmatprep.subr.mxu0 0.0
        %708 = vmatpush1.msra.mxu0 0.0
        %709 = vmatprep.subr.mxu0 0.0
        %710 = vmatpush1.msra.mxu0 0.0
        %711 = vmatprep.subr.mxu0 0.0
        %712 = vmatpush1.msra.mxu0 0.0
        %713 = vmatprep.subr.mxu0 0.0
        %714 = vmatpush1.msra.mxu0 0.0
        %715 = vmatprep.subr.mxu0 0.0
        %716 = vmatpush1.msra.mxu0 0.0
        %717 = vmatprep.subr.mxu0 0.0
        %718 = vmatpush1.msra.mxu0 0.0
        %719 = vmatprep.subr.mxu0 0.0
        %720 = vmatpush1.msra.mxu0 0.0
        %721 = vmatprep.subr.mxu0 0.0
        %722 = vmatpush1.msra.mxu0 0.0
        %723 = vmatprep.subr.mxu0 0.0
        %724 = vmatpush1.msra.mxu0 0.0
        %725 = vmatprep.subr.mxu0 0.0
        %726 = vmatpush1.msra.mxu0 0.0
        %727 = vmatprep.subr.mxu0 0.0
        %728 = vmatpush1.msra.mxu0 0.0
        %729 = vmatprep.mubr.f32.mxu0 0.0
        %730 = vmatmul.mubr.f32.gmra.mrb[0].mxu0 %v654
        %v731 = vpop.f32.mrb[0].mxu0
        %v732 = vadd.f32 %v635, %v731
        %v733 = vpop.f32.mrb[0].mxu0
        %734 = vmatprep.mubr.f32.mxu0 0.0
        %735 = vmatmul.mubr.f32.gmra.mrb[0].mxu0 %v657
        %v736 = vpop.f32.mrb[0].mxu0
        %v737 = vadd.f32 %v640, %v736
        %v738 = vpop.f32.mrb[0].mxu0
        %739 = vmatprep.mubr.f32.mxu0 0.0
        %740 = vmatmul.mubr.f32.gmra.mrb[0].mxu0 %v660
        %v741 = vpop.f32.mrb[0].mxu0
        %v742 = vadd.f32 %v645, %v741
        %v743 = vpop.f32.mrb[0].mxu0
        %744 = vmatprep.mubr.f32.mxu0 0.0
        %745 = vmatmul.mubr.f32.gmra.mrb[0].mxu0 %v663
        %v746 = vpop.f32.mrb[0].mxu0
        %v747 = vadd.f32 %v650, %v746
        %v748 = vpop.f32.mrb[0].mxu0
        %749 = vdwg.mxu0
        %s750 = sld [smem:[#allocation3]]
        %vm751 = vcmp.ge.f32.partialorder %v732, 0.0
        %vm752 = vcmp.ge.f32.partialorder %v737, 0.0
        %vm753 = vcmp.ge.f32.partialorder %v742, 0.0
        %vm754 = vcmp.ge.f32.partialorder %v747, 0.0
        %v755 = vstv %s750
        %v756 = vmul.f32 %v755, %v732
        %v757 = vmul.f32 %v755, %v737
        %v758 = vmul.f32 %v755, %v742
        %v759 = vmul.f32 %v755, %v747
        %v760 = vsel %vm751, %v732, %v756
        %v761 = vsel %vm752, %v737, %v757
        %v762 = vsel %vm753, %v742, %v758
        %v763 = vsel %vm754, %v747, %v759
        %v764 = vsel %vm438, %v760, 0.0
        %v765 = vsel %vm438, %v761, 0.0
        %v766 = vadd.f32 %v764, %v765
        %v767 = vsel %vm438, %v762, 0.0
        %v768 = vadd.f32 %v766, %v767
        %v769 = vsel %vm438, %v763, 0.0
        %v770 = vadd.f32 %v768, %v769
        %771 = vadd.xlane.f32.xlu0 %v770
        %v772 = vpop.xlane.xlu0 %771
        %v773 = vrot.slane %v772, 4
        %v774 = vadd.f32 %v772, %v773
        %v775 = vrot.slane %v774, 2
        %v776 = vadd.f32 %v774, %v775
        %v777 = vrot.slane %v776, 1
        %v778 = vadd.f32 %v776, %v777
        %s779 = vtos %v778
        %v780 = vmul.f32 %v760, %v760
        %v781 = vmul.f32 %v761, %v761
        %v782 = vmul.f32 %v762, %v762
        %v783 = vmul.f32 %v763, %v763
        %v784 = vsel %vm438, %v780, 0.0
        %v785 = vsel %vm438, %v781, 0.0
        %v786 = vadd.f32 %v784, %v785
        %v787 = vsel %vm438, %v782, 0.0
        %v788 = vadd.f32 %v786, %v787
        %v789 = vsel %vm438, %v783, 0.0
        %v790 = vadd.f32 %v788, %v789
        %791 = vadd.xlane.f32.xlu0 %v790
        %v792 = vpop.xlane.xlu0 %791
        %v793 = vrot.slane %v792, 4
        %v794 = vadd.f32 %v792, %v793
        %v795 = vrot.slane %v794, 2
        %v796 = vadd.f32 %v794, %v795
        %v797 = vrot.slane %v796, 1
        %v798 = vadd.f32 %v796, %v797
        %s799 = vtos %v798
        %s800 = smul.f32 %s779, 0.0013020834
        %s801 = smul.f32 %s799, 0.0013020834
        %s802 = smul.f32 %s800, %s800
        %s803 = ssub.f32 %s801, %s802
        %s804 = smax.f32 %s803, 0.0
        %v805 = vstv %s800
        %v806 = vsub.f32 %v760, %v805
        %v807 = vsub.f32 %v761, %v805
        %v808 = vsub.f32 %v762, %v805
        %v809 = vsub.f32 %v763, %v805
        %s810 = sadd.f32 %s804, 1e-08
        %v811 = vstv %s810
        %v812 = vrsqrt.pop %v811
        %s813 = vtos %v812
        %v814 = vstv %s813
        %v815 = vmul.f32 %v806, %v814
        %v816 = vmul.f32 %v807, %v814
        %v817 = vmul.f32 %v808, %v814
        %v818 = vmul.f32 %v809, %v814
        %819 = vset.pattern.permute.xlu0 1
        %820 = vperm.xlu0 %819, %v624
        %v821 = vpop.permute.xlu0 %820
        %823 = vset.pattern.permute.xlu0 1
        %824 = vperm.xlu0 %823, %v625
        %v825 = vpop.permute.xlu0 %824
        %827 = vset.pattern.permute.xlu0 1
        %828 = vperm.xlu0 %827, %v626
        %v829 = vpop.permute.xlu0 %828
        %831 = vset.pattern.permute.xlu0 1
        %832 = vperm.xlu0 %831, %v627
        %v833 = vpop.permute.xlu0 %832
        %v835 = vmul.f32 %v821, %v815
        %v836 = vmul.f32 %v825, %v816
        %v837 = vmul.f32 %v829, %v817
        %v838 = vmul.f32 %v833, %v818
        %839 = vset.pattern.permute.xlu0 2
        %840 = vperm.xlu0 %839, %v624
        %v841 = vpop.permute.xlu0 %840
        %843 = vset.pattern.permute.xlu0 2
        %844 = vperm.xlu0 %843, %v625
        %v845 = vpop.permute.xlu0 %844
        %847 = vset.pattern.permute.xlu0 2
        %848 = vperm.xlu0 %847, %v626
        %v849 = vpop.permute.xlu0 %848
        %851 = vset.pattern.permute.xlu0 2
        %852 = vperm.xlu0 %851, %v627
        %v853 = vpop.permute.xlu0 %852
        %v855 = vadd.f32 %v835, %v841
        %v856 = vadd.f32 %v836, %v845
        %v857 = vadd.f32 %v837, %v849
        %v858 = vadd.f32 %v838, %v853
        %v859 = vld [vmem:[%s8] sm:$0xff]
        %v860 = vld [vmem:[%s8 + $0x8] sm:$0xff]
        %v861 = vld [vmem:[%s8 + $0x10] sm:$0xff]
        %v863 = vsel %vm438, %v855, 0
        %v866 = vsel %vm438, %v856, 0
        %v869 = vsel %vm438, %v857, 0
        %v872 = vsel %vm438, %v858, 0
        %874 = vmatprep.subr.mxu0 0.0
        %875 = vmatpush1.msra.mxu0 %v859
        %876 = vmatprep.subr.mxu0 0.0
        %877 = vmatpush1.msra.mxu0 %v860
        %878 = vmatprep.subr.mxu0 0.0
        %879 = vmatpush1.msra.mxu0 %v861
        %880 = vmatprep.subr.mxu0 0.0
        %881 = vmatpush1.msra.mxu0 0.0
        %882 = vmatprep.subr.mxu0 0.0
        %883 = vmatpush1.msra.mxu0 0.0
        %884 = vmatprep.subr.mxu0 0.0
        %885 = vmatpush1.msra.mxu0 0.0
        %886 = vmatprep.subr.mxu0 0.0
        %887 = vmatpush1.msra.mxu0 0.0
        %888 = vmatprep.subr.mxu0 0.0
        %889 = vmatpush1.msra.mxu0 0.0
        %890 = vmatprep.subr.mxu0 0.0
        %891 = vmatpush1.msra.mxu0 0.0
        %892 = vmatprep.subr.mxu0 0.0
        %893 = vmatpush1.msra.mxu0 0.0
        %894 = vmatprep.subr.mxu0 0.0
        %895 = vmatpush1.msra.mxu0 0.0
        %896 = vmatprep.subr.mxu0 0.0
        %897 = vmatpush1.msra.mxu0 0.0
        %898 = vmatprep.subr.mxu0 0.0
        %899 = vmatpush1.msra.mxu0 0.0
        %900 = vmatprep.subr.mxu0 0.0
        %901 = vmatpush1.msra.mxu0 0.0
        %902 = vmatprep.subr.mxu0 0.0
        %903 = vmatpush1.msra.mxu0 0.0
        %904 = vmatprep.subr.mxu0 0.0
        %905 = vmatpush1.msra.mxu0 0.0
        %906 = vmatprep.subr.mxu0 0.0
        %907 = vmatpush1.msra.mxu0 0.0
        %908 = vmatprep.subr.mxu0 0.0
        %909 = vmatpush1.msra.mxu0 0.0
        %910 = vmatprep.subr.mxu0 0.0
        %911 = vmatpush1.msra.mxu0 0.0
        %912 = vmatprep.subr.mxu0 0.0
        %913 = vmatpush1.msra.mxu0 0.0
        %914 = vmatprep.subr.mxu0 0.0
        %915 = vmatpush1.msra.mxu0 0.0
        %916 = vmatprep.subr.mxu0 0.0
        %917 = vmatpush1.msra.mxu0 0.0
        %918 = vmatprep.subr.mxu0 0.0
        %919 = vmatpush1.msra.mxu0 0.0
        %920 = vmatprep.subr.mxu0 0.0
        %921 = vmatpush1.msra.mxu0 0.0
        %922 = vmatprep.subr.mxu0 0.0
        %923 = vmatpush1.msra.mxu0 0.0
        %924 = vmatprep.subr.mxu0 0.0
        %925 = vmatpush1.msra.mxu0 0.0
        %926 = vmatprep.subr.mxu0 0.0
        %927 = vmatpush1.msra.mxu0 0.0
        %928 = vmatprep.subr.mxu0 0.0
        %929 = vmatpush1.msra.mxu0 0.0
        %930 = vmatprep.subr.mxu0 0.0
        %931 = vmatpush1.msra.mxu0 0.0
        %932 = vmatprep.subr.mxu0 0.0
        %933 = vmatpush1.msra.mxu0 0.0
        %934 = vmatprep.subr.mxu0 0.0
        %935 = vmatpush1.msra.mxu0 0.0
        %936 = vmatprep.subr.mxu0 0.0
        %937 = vmatpush1.msra.mxu0 0.0
        %938 = vmatprep.mubr.f32.mxu0 0.0
        %939 = vmatmul.mubr.f32.gmra.mrb[0].mxu0 %v863
        %v940 = vpop.f32.mrb[0].mxu0
        %v941 = vadd.f32 0.0, %v940
        %v942 = vpop.f32.mrb[0].mxu0
        %943 = vmatprep.mubr.f32.mxu0 0.0
        %944 = vmatmul.mubr.f32.gmra.mrb[0].mxu0 %v866
        %v945 = vpop.f32.mrb[0].mxu0
        %v946 = vadd.f32 0.0, %v945
        %v947 = vpop.f32.mrb[0].mxu0
        %948 = vmatprep.mubr.f32.mxu0 0.0
        %949 = vmatmul.mubr.f32.gmra.mrb[0].mxu0 %v869
        %v950 = vpop.f32.mrb[0].mxu0
        %v951 = vadd.f32 0.0, %v950
        %v952 = vpop.f32.mrb[0].mxu0
        %953 = vmatprep.mubr.f32.mxu0 0.0
        %954 = vmatmul.mubr.f32.gmra.mrb[0].mxu0 %v872
        %v955 = vpop.f32.mrb[0].mxu0
        %v956 = vadd.f32 0.0, %v955
        %v957 = vpop.f32.mrb[0].mxu0
        %958 = vdwg.mxu0
        %s959 = scalar_lea.vmem %s8, 24
        %v960 = vld [vmem:[%s959] sm:$0xff]
        %v961 = vld [vmem:[%s959 + $0x8] sm:$0xff]
        %v962 = vld [vmem:[%s959 + $0x10] sm:$0xff]
        %963 = vmatprep.subr.mxu0 0.0
        %964 = vmatpush1.msra.mxu0 %v960
        %965 = vmatprep.subr.mxu0 0.0
        %966 = vmatpush1.msra.mxu0 %v961
        %967 = vmatprep.subr.mxu0 0.0
        %968 = vmatpush1.msra.mxu0 %v962
        %969 = vmatprep.subr.mxu0 0.0
        %970 = vmatpush1.msra.mxu0 0.0
        %971 = vmatprep.subr.mxu0 0.0
        %972 = vmatpush1.msra.mxu0 0.0
        %973 = vmatprep.subr.mxu0 0.0
        %974 = vmatpush1.msra.mxu0 0.0
        %975 = vmatprep.subr.mxu0 0.0
        %976 = vmatpush1.msra.mxu0 0.0
        %977 = vmatprep.subr.mxu0 0.0
        %978 = vmatpush1.msra.mxu0 0.0
        %979 = vmatprep.subr.mxu0 0.0
        %980 = vmatpush1.msra.mxu0 0.0
        %981 = vmatprep.subr.mxu0 0.0
        %982 = vmatpush1.msra.mxu0 0.0
        %983 = vmatprep.subr.mxu0 0.0
        %984 = vmatpush1.msra.mxu0 0.0
        %985 = vmatprep.subr.mxu0 0.0
        %986 = vmatpush1.msra.mxu0 0.0
        %987 = vmatprep.subr.mxu0 0.0
        %988 = vmatpush1.msra.mxu0 0.0
        %989 = vmatprep.subr.mxu0 0.0
        %990 = vmatpush1.msra.mxu0 0.0
        %991 = vmatprep.subr.mxu0 0.0
        %992 = vmatpush1.msra.mxu0 0.0
        %993 = vmatprep.subr.mxu0 0.0
        %994 = vmatpush1.msra.mxu0 0.0
        %995 = vmatprep.subr.mxu0 0.0
        %996 = vmatpush1.msra.mxu0 0.0
        %997 = vmatprep.subr.mxu0 0.0
        %998 = vmatpush1.msra.mxu0 0.0
        %999 = vmatprep.subr.mxu0 0.0
        %1000 = vmatpush1.msra.mxu0 0.0
        %1001 = vmatprep.subr.mxu0 0.0
        %1002 = vmatpush1.msra.mxu0 0.0
        %1003 = vmatprep.subr.mxu0 0.0
        %1004 = vmatpush1.msra.mxu0 0.0
        %1005 = vmatprep.subr.mxu0 0.0
        %1006 = vmatpush1.msra.mxu0 0.0
        %1007 = vmatprep.subr.mxu0 0.0
        %1008 = vmatpush1.msra.mxu0 0.0
        %1009 = vmatprep.subr.mxu0 0.0
        %1010 = vmatpush1.msra.mxu0 0.0
        %1011 = vmatprep.subr.mxu0 0.0
        %1012 = vmatpush1.msra.mxu0 0.0
        %1013 = vmatprep.subr.mxu0 0.0
        %1014 = vmatpush1.msra.mxu0 0.0
        %1015 = vmatprep.subr.mxu0 0.0
        %1016 = vmatpush1.msra.mxu0 0.0
        %1017 = vmatprep.subr.mxu0 0.0
        %1018 = vmatpush1.msra.mxu0 0.0
        %1019 = vmatprep.subr.mxu0 0.0
        %1020 = vmatpush1.msra.mxu0 0.0
        %1021 = vmatprep.subr.mxu0 0.0
        %1022 = vmatpush1.msra.mxu0 0.0
        %1023 = vmatprep.subr.mxu0 0.0
        %1024 = vmatpush1.msra.mxu0 0.0
        %1025 = vmatprep.subr.mxu0 0.0
        %1026 = vmatpush1.msra.mxu0 0.0
        %1027 = vmatprep.mubr.f32.mxu0 0.0
        %1028 = vmatmul.mubr.f32.gmra.mrb[0].mxu0 %v863
        %v1029 = vpop.f32.mrb[0].mxu0
        %v1030 = vadd.f32 0.0, %v1029
        %v1031 = vpop.f32.mrb[0].mxu0
        %1032 = vmatprep.mubr.f32.mxu0 0.0
        %1033 = vmatmul.mubr.f32.gmra.mrb[0].mxu0 %v866
        %v1034 = vpop.f32.mrb[0].mxu0
        %v1035 = vadd.f32 0.0, %v1034
        %v1036 = vpop.f32.mrb[0].mxu0
        %1037 = vmatprep.mubr.f32.mxu0 0.0
        %1038 = vmatmul.mubr.f32.gmra.mrb[0].mxu0 %v869
        %v1039 = vpop.f32.mrb[0].mxu0
        %v1040 = vadd.f32 0.0, %v1039
        %v1041 = vpop.f32.mrb[0].mxu0
        %1042 = vmatprep.mubr.f32.mxu0 0.0
        %1043 = vmatmul.mubr.f32.gmra.mrb[0].mxu0 %v872
        %v1044 = vpop.f32.mrb[0].mxu0
        %v1045 = vadd.f32 0.0, %v1044
        %v1046 = vpop.f32.mrb[0].mxu0
        %1047 = vdwg.mxu0
        %1048 = vset.pattern.permute.xlu0 3
        %1049 = vperm.xlu0 %1048, %v624
        %v1050 = vpop.permute.xlu0 %1049
        %1052 = vset.pattern.permute.xlu0 3
        %1053 = vperm.xlu0 %1052, %v625
        %v1054 = vpop.permute.xlu0 %1053
        %1056 = vset.pattern.permute.xlu0 3
        %1057 = vperm.xlu0 %1056, %v626
        %v1058 = vpop.permute.xlu0 %1057
        %1060 = vset.pattern.permute.xlu0 3
        %1061 = vperm.xlu0 %1060, %v627
        %v1062 = vpop.permute.xlu0 %1061
        %v1064 = vmul.f32 %v1050, %v941
        %v1065 = vmul.f32 %v1054, %v946
        %v1066 = vmul.f32 %v1058, %v951
        %v1067 = vmul.f32 %v1062, %v956
        %1068 = vset.pattern.permute.xlu0 4
        %1069 = vperm.xlu0 %1068, %v624
        %v1070 = vpop.permute.xlu0 %1069
        %1072 = vset.pattern.permute.xlu0 4
        %1073 = vperm.xlu0 %1072, %v625
        %v1074 = vpop.permute.xlu0 %1073
        %1076 = vset.pattern.permute.xlu0 4
        %1077 = vperm.xlu0 %1076, %v626
        %v1078 = vpop.permute.xlu0 %1077
        %1080 = vset.pattern.permute.xlu0 4
        %1081 = vperm.xlu0 %1080, %v627
        %v1082 = vpop.permute.xlu0 %1081
        %v1084 = vmul.f32 %v1070, %v855
        %v1085 = vmul.f32 %v1074, %v856
        %v1086 = vmul.f32 %v1078, %v857
        %v1087 = vmul.f32 %v1082, %v858
        %v1088 = vadd.f32 %v1064, %v1084
        %v1089 = vadd.f32 %v1065, %v1085
        %v1090 = vadd.f32 %v1066, %v1086
        %v1091 = vadd.f32 %v1067, %v1087
        %1092 = vset.pattern.permute.xlu0 5
        %1093 = vperm.xlu0 %1092, %v624
        %v1094 = vpop.permute.xlu0 %1093
        %1096 = vset.pattern.permute.xlu0 5
        %1097 = vperm.xlu0 %1096, %v625
        %v1098 = vpop.permute.xlu0 %1097
        %1100 = vset.pattern.permute.xlu0 5
        %1101 = vperm.xlu0 %1100, %v626
        %v1102 = vpop.permute.xlu0 %1101
        %1104 = vset.pattern.permute.xlu0 5
        %1105 = vperm.xlu0 %1104, %v627
        %v1106 = vpop.permute.xlu0 %1105
        %v1108 = vmul.f32 %v1094, %v1030
        %v1109 = vmul.f32 %v1098, %v1035
        %v1110 = vmul.f32 %v1102, %v1040
        %v1111 = vmul.f32 %v1106, %v1045
        %v1112 = vadd.f32 %v1088, %v1108
        %v1113 = vadd.f32 %v1089, %v1109
        %v1114 = vadd.f32 %v1090, %v1110
        %v1115 = vadd.f32 %v1091, %v1111
        %1116 = vset.pattern.permute.xlu0 6
        %1117 = vperm.xlu0 %1116, %v624
        %v1118 = vpop.permute.xlu0 %1117
        %1120 = vset.pattern.permute.xlu0 6
        %1121 = vperm.xlu0 %1120, %v625
        %v1122 = vpop.permute.xlu0 %1121
        %1124 = vset.pattern.permute.xlu0 6
        %1125 = vperm.xlu0 %1124, %v626
        %v1126 = vpop.permute.xlu0 %1125
        %1128 = vset.pattern.permute.xlu0 6
        %1129 = vperm.xlu0 %1128, %v627
        %v1130 = vpop.permute.xlu0 %1129
        %v1132 = vadd.f32 %v1112, %v1118
        %v1133 = vadd.f32 %v1113, %v1122
        %v1134 = vadd.f32 %v1114, %v1126
        %v1135 = vadd.f32 %v1115, %v1130
        %s1136 = sld [smem:[#allocation3 + $0x1]]
        %vm1137 = vcmp.ge.f32.partialorder %v1132, 0.0
        %vm1138 = vcmp.ge.f32.partialorder %v1133, 0.0
        %vm1139 = vcmp.ge.f32.partialorder %v1134, 0.0
        %vm1140 = vcmp.ge.f32.partialorder %v1135, 0.0
        %v1141 = vstv %s1136
        %v1142 = vmul.f32 %v1141, %v1132
        %v1143 = vmul.f32 %v1141, %v1133
        %v1144 = vmul.f32 %v1141, %v1134
        %v1145 = vmul.f32 %v1141, %v1135
        %v1146 = vsel %vm1137, %v1132, %v1142
        %v1147 = vsel %vm1138, %v1133, %v1143
        %v1148 = vsel %vm1139, %v1134, %v1144
        %v1149 = vsel %vm1140, %v1135, %v1145
        %v1150 = vsel %vm438, %v1146, 0.0
        %v1151 = vsel %vm438, %v1147, 0.0
        %v1152 = vadd.f32 %v1150, %v1151
        %v1153 = vsel %vm438, %v1148, 0.0
        %v1154 = vadd.f32 %v1152, %v1153
        %v1155 = vsel %vm438, %v1149, 0.0
        %v1156 = vadd.f32 %v1154, %v1155
        %1157 = vadd.xlane.f32.xlu0 %v1156
        %v1158 = vpop.xlane.xlu0 %1157
        %v1159 = vrot.slane %v1158, 4
        %v1160 = vadd.f32 %v1158, %v1159
        %v1161 = vrot.slane %v1160, 2
        %v1162 = vadd.f32 %v1160, %v1161
        %v1163 = vrot.slane %v1162, 1
        %v1164 = vadd.f32 %v1162, %v1163
        %s1165 = vtos %v1164
        %v1166 = vmul.f32 %v1146, %v1146
        %v1167 = vmul.f32 %v1147, %v1147
        %v1168 = vmul.f32 %v1148, %v1148
        %v1169 = vmul.f32 %v1149, %v1149
        %v1170 = vsel %vm438, %v1166, 0.0
        %v1171 = vsel %vm438, %v1167, 0.0
        %v1172 = vadd.f32 %v1170, %v1171
        %v1173 = vsel %vm438, %v1168, 0.0
        %v1174 = vadd.f32 %v1172, %v1173
        %v1175 = vsel %vm438, %v1169, 0.0
        %v1176 = vadd.f32 %v1174, %v1175
        %1177 = vadd.xlane.f32.xlu0 %v1176
        %v1178 = vpop.xlane.xlu0 %1177
        %v1179 = vrot.slane %v1178, 4
        %v1180 = vadd.f32 %v1178, %v1179
        %v1181 = vrot.slane %v1180, 2
        %v1182 = vadd.f32 %v1180, %v1181
        %v1183 = vrot.slane %v1182, 1
        %v1184 = vadd.f32 %v1182, %v1183
        %s1185 = vtos %v1184
        %s1186 = smul.f32 %s1165, 0.0013020834
        %s1187 = smul.f32 %s1185, 0.0013020834
        %s1188 = smul.f32 %s1186, %s1186
        %s1189 = ssub.f32 %s1187, %s1188
        %s1190 = smax.f32 %s1189, 0.0
        %v1191 = vstv %s1186
        %v1192 = vsub.f32 %v1146, %v1191
        %v1193 = vsub.f32 %v1147, %v1191
        %v1194 = vsub.f32 %v1148, %v1191
        %v1195 = vsub.f32 %v1149, %v1191
        %s1196 = sadd.f32 %s1190, 1e-08
        %v1197 = vstv %s1196
        %v1198 = vrsqrt.pop %v1197
        %s1199 = vtos %v1198
        %v1200 = vstv %s1199
        %v1201 = vmul.f32 %v1192, %v1200
        %v1202 = vmul.f32 %v1193, %v1200
        %v1203 = vmul.f32 %v1194, %v1200
        %v1204 = vmul.f32 %v1195, %v1200
        %1205 = vset.pattern.permute.xlu0 7
        %1206 = vperm.xlu0 %1205, %v624
        %v1207 = vpop.permute.xlu0 %1206
        %1209 = vset.pattern.permute.xlu0 7
        %1210 = vperm.xlu0 %1209, %v625
        %v1211 = vpop.permute.xlu0 %1210
        %1213 = vset.pattern.permute.xlu0 7
        %1214 = vperm.xlu0 %1213, %v626
        %v1215 = vpop.permute.xlu0 %1214
        %1217 = vset.pattern.permute.xlu0 7
        %1218 = vperm.xlu0 %1217, %v627
        %v1219 = vpop.permute.xlu0 %1218
        %v1221 = vmul.f32 %v1207, %v1201
        %v1222 = vmul.f32 %v1211, %v1202
        %v1223 = vmul.f32 %v1215, %v1203
        %v1224 = vmul.f32 %v1219, %v1204
        %1225 = vset.pattern.permute.xlu0 8
        %1226 = vperm.xlu0 %1225, %v624
        %v1227 = vpop.permute.xlu0 %1226
        %1229 = vset.pattern.permute.xlu0 8
        %1230 = vperm.xlu0 %1229, %v625
        %v1231 = vpop.permute.xlu0 %1230
        %1233 = vset.pattern.permute.xlu0 8
        %1234 = vperm.xlu0 %1233, %v626
        %v1235 = vpop.permute.xlu0 %1234
        %1237 = vset.pattern.permute.xlu0 8
        %1238 = vperm.xlu0 %1237, %v627
        %v1239 = vpop.permute.xlu0 %1238
        %v1241 = vadd.f32 %v1221, %v1227
        %v1242 = vadd.f32 %v1222, %v1231
        %v1243 = vadd.f32 %v1223, %v1235
        %v1244 = vadd.f32 %v1224, %v1239
        %v1245 = vld [vmem:[%s5] sm:$0xff]
        %v1246 = vld [vmem:[%s5 + $0x8] sm:$0xff]
        %v1247 = vld [vmem:[%s5 + $0x10] sm:$0xff]
        %v1248 = vld [vmem:[%s5 + $0x18] sm:$0xff]
        %1249 = vset.pattern.permute.xlu0 9
        %1250 = vperm.xlu0 %1249, %v624
        %v1251 = vpop.permute.xlu0 %1250
        %1253 = vset.pattern.permute.xlu0 9
        %1254 = vperm.xlu0 %1253, %v625
        %v1255 = vpop.permute.xlu0 %1254
        %1257 = vset.pattern.permute.xlu0 9
        %1258 = vperm.xlu0 %1257, %v626
        %v1259 = vpop.permute.xlu0 %1258
        %1261 = vset.pattern.permute.xlu0 9
        %1262 = vperm.xlu0 %1261, %v627
        %v1263 = vpop.permute.xlu0 %1262
        %v1266 = vsel %vm544, %v1245, 0
        %v1269 = vsel %vm544, %v1246, 0
        %v1272 = vsel %vm544, %v1247, 0
        %v1275 = vsel %vm544, %v1248, 0
        %1277 = vmatprep.subr.mxu0 0.0
        %1278 = vmatpush1.msra.mxu0 %v1241
        %1279 = vmatprep.subr.mxu0 0.0
        %1280 = vmatpush1.msra.mxu0 %v1242
        %1281 = vmatprep.subr.mxu0 0.0
        %1282 = vmatpush1.msra.mxu0 %v1243
        %1283 = vmatprep.subr.mxu0 0.0
        %1284 = vmatpush1.msra.mxu0 %v1244
        %1285 = vmatprep.subr.mxu0 0.0
        %1286 = vmatpush1.msra.mxu0 0.0
        %1287 = vmatprep.subr.mxu0 0.0
        %1288 = vmatpush1.msra.mxu0 0.0
        %1289 = vmatprep.subr.mxu0 0.0
        %1290 = vmatpush1.msra.mxu0 0.0
        %1291 = vmatprep.subr.mxu0 0.0
        %1292 = vmatpush1.msra.mxu0 0.0
        %1293 = vmatprep.subr.mxu0 0.0
        %1294 = vmatpush1.msra.mxu0 0.0
        %1295 = vmatprep.subr.mxu0 0.0
        %1296 = vmatpush1.msra.mxu0 0.0
        %1297 = vmatprep.subr.mxu0 0.0
        %1298 = vmatpush1.msra.mxu0 0.0
        %1299 = vmatprep.subr.mxu0 0.0
        %1300 = vmatpush1.msra.mxu0 0.0
        %1301 = vmatprep.subr.mxu0 0.0
        %1302 = vmatpush1.msra.mxu0 0.0
        %1303 = vmatprep.subr.mxu0 0.0
        %1304 = vmatpush1.msra.mxu0 0.0
        %1305 = vmatprep.subr.mxu0 0.0
        %1306 = vmatpush1.msra.mxu0 0.0
        %1307 = vmatprep.subr.mxu0 0.0
        %1308 = vmatpush1.msra.mxu0 0.0
        %1309 = vmatprep.subr.mxu0 0.0
        %1310 = vmatpush1.msra.mxu0 0.0
        %1311 = vmatprep.subr.mxu0 0.0
        %1312 = vmatpush1.msra.mxu0 0.0
        %1313 = vmatprep.subr.mxu0 0.0
        %1314 = vmatpush1.msra.mxu0 0.0
        %1315 = vmatprep.subr.mxu0 0.0
        %1316 = vmatpush1.msra.mxu0 0.0
        %1317 = vmatprep.subr.mxu0 0.0
        %1318 = vmatpush1.msra.mxu0 0.0
        %1319 = vmatprep.subr.mxu0 0.0
        %1320 = vmatpush1.msra.mxu0 0.0
        %1321 = vmatprep.subr.mxu0 0.0
        %1322 = vmatpush1.msra.mxu0 0.0
        %1323 = vmatprep.subr.mxu0 0.0
        %1324 = vmatpush1.msra.mxu0 0.0
        %1325 = vmatprep.subr.mxu0 0.0
        %1326 = vmatpush1.msra.mxu0 0.0
        %1327 = vmatprep.subr.mxu0 0.0
        %1328 = vmatpush1.msra.mxu0 0.0
        %1329 = vmatprep.subr.mxu0 0.0
        %1330 = vmatpush1.msra.mxu0 0.0
        %1331 = vmatprep.subr.mxu0 0.0
        %1332 = vmatpush1.msra.mxu0 0.0
        %1333 = vmatprep.subr.mxu0 0.0
        %1334 = vmatpush1.msra.mxu0 0.0
        %1335 = vmatprep.subr.mxu0 0.0
        %1336 = vmatpush1.msra.mxu0 0.0
        %1337 = vmatprep.subr.mxu0 0.0
        %1338 = vmatpush1.msra.mxu0 0.0
        %1339 = vmatprep.subr.mxu0 0.0
        %1340 = vmatpush1.msra.mxu0 0.0
        %1341 = vmatprep.mubr.f32.mxu0 0.0
        %1342 = vmatmul.mubr.f32.gmra.mrb[0].mxu0 %v1266
        %v1343 = vpop.f32.mrb[0].mxu0
        %v1344 = vadd.f32 %v1251, %v1343
        %v1345 = vpop.f32.mrb[0].mxu0
        %1346 = vmatprep.mubr.f32.mxu0 0.0
        %1347 = vmatmul.mubr.f32.gmra.mrb[0].mxu0 %v1269
        %v1348 = vpop.f32.mrb[0].mxu0
        %v1349 = vadd.f32 %v1255, %v1348
        %v1350 = vpop.f32.mrb[0].mxu0
        %1351 = vmatprep.mubr.f32.mxu0 0.0
        %1352 = vmatmul.mubr.f32.gmra.mrb[0].mxu0 %v1272
        %v1353 = vpop.f32.mrb[0].mxu0
        %v1354 = vadd.f32 %v1259, %v1353
        %v1355 = vpop.f32.mrb[0].mxu0
        %1356 = vmatprep.mubr.f32.mxu0 0.0
        %1357 = vmatmul.mubr.f32.gmra.mrb[0].mxu0 %v1275
        %v1358 = vpop.f32.mrb[0].mxu0
        %v1359 = vadd.f32 %v1263, %v1358
        %v1360 = vpop.f32.mrb[0].mxu0
        %1361 = vdwg.mxu0
        %v1362 = vadd.f32 %v616, %v1344
        %v1363 = vadd.f32 %v621, %v1349
        %v1364 = vadd.f32 %v1354, 0.0
        %v1365 = vadd.f32 %v1359, 0.0
        %s1366 = scalar_lea.vmem %s6, 32
        %v1367 = vld [vmem:[%s1366] sm:$0xff]
        %v1368 = vld [vmem:[%s1366 + $0x8] sm:$0xff]
        %v1369 = vld [vmem:[%s1366 + $0x10] sm:$0xff]
        %v1370 = vld [vmem:[%s1366 + $0x18] sm:$0xff]
        %s1371 = scalar_lea.vmem %s4, 32
        %v1372 = vld [vmem:[%s1371] sm:$0xff]
        %v1373 = vld [vmem:[%s1371 + $0x8] sm:$0xff]
        %v1374 = vld [vmem:[%s1371 + $0x10] sm:$0xff]
        %v1375 = vld [vmem:[%s1371 + $0x18] sm:$0xff]
        %1377 = vset.pattern.permute.xlu0 0
        %1378 = vperm.xlu0 %1377, %v1367
        %v1379 = vpop.permute.xlu0 %1378
        %1382 = vset.pattern.permute.xlu0 0
        %1383 = vperm.xlu0 %1382, %v1368
        %v1384 = vpop.permute.xlu0 %1383
        %1387 = vset.pattern.permute.xlu0 0
        %1388 = vperm.xlu0 %1387, %v1369
        %v1389 = vpop.permute.xlu0 %1388
        %1392 = vset.pattern.permute.xlu0 0
        %1393 = vperm.xlu0 %1392, %v1370
        %v1394 = vpop.permute.xlu0 %1393
        %v1397 = vsel %vm652, %v1372, 0
        %v1400 = vsel %vm652, %v1373, 0
        %v1403 = vsel %vm652, %v1374, 0
        %v1406 = vsel %vm652, %v1375, 0
        %1408 = vmatprep.subr.mxu0 0.0
        %1409 = vmatpush1.msra.mxu0 %v1362
        %1410 = vmatprep.subr.mxu0 0.0
        %1411 = vmatpush1.msra.mxu0 %v1363
        %1412 = vmatprep.subr.mxu0 0.0
        %1413 = vmatpush1.msra.mxu0 0.0
        %1414 = vmatprep.subr.mxu0 0.0
        %1415 = vmatpush1.msra.mxu0 0.0
        %1416 = vmatprep.subr.mxu0 0.0
        %1417 = vmatpush1.msra.mxu0 0.0
        %1418 = vmatprep.subr.mxu0 0.0
        %1419 = vmatpush1.msra.mxu0 0.0
        %1420 = vmatprep.subr.mxu0 0.0
        %1421 = vmatpush1.msra.mxu0 0.0
        %1422 = vmatprep.subr.mxu0 0.0
        %1423 = vmatpush1.msra.mxu0 0.0
        %1424 = vmatprep.subr.mxu0 0.0
        %1425 = vmatpush1.msra.mxu0 0.0
        %1426 = vmatprep.subr.mxu0 0.0
        %1427 = vmatpush1.msra.mxu0 0.0
        %1428 = vmatprep.subr.mxu0 0.0
        %1429 = vmatpush1.msra.mxu0 0.0
        %1430 = vmatprep.subr.mxu0 0.0
        %1431 = vmatpush1.msra.mxu0 0.0
        %1432 = vmatprep.subr.mxu0 0.0
        %1433 = vmatpush1.msra.mxu0 0.0
        %1434 = vmatprep.subr.mxu0 0.0
        %1435 = vmatpush1.msra.mxu0 0.0
        %1436 = vmatprep.subr.mxu0 0.0
        %1437 = vmatpush1.msra.mxu0 0.0
        %1438 = vmatprep.subr.mxu0 0.0
        %1439 = vmatpush1.msra.mxu0 0.0
        %1440 = vmatprep.subr.mxu0 0.0
        %1441 = vmatpush1.msra.mxu0 0.0
        %1442 = vmatprep.subr.mxu0 0.0
        %1443 = vmatpush1.msra.mxu0 0.0
        %1444 = vmatprep.subr.mxu0 0.0
        %1445 = vmatpush1.msra.mxu0 0.0
        %1446 = vmatprep.subr.mxu0 0.0
        %1447 = vmatpush1.msra.mxu0 0.0
        %1448 = vmatprep.subr.mxu0 0.0
        %1449 = vmatpush1.msra.mxu0 0.0
        %1450 = vmatprep.subr.mxu0 0.0
        %1451 = vmatpush1.msra.mxu0 0.0
        %1452 = vmatprep.subr.mxu0 0.0
        %1453 = vmatpush1.msra.mxu0 0.0
        %1454 = vmatprep.subr.mxu0 0.0
        %1455 = vmatpush1.msra.mxu0 0.0
        %1456 = vmatprep.subr.mxu0 0.0
        %1457 = vmatpush1.msra.mxu0 0.0
        %1458 = vmatprep.subr.mxu0 0.0
        %1459 = vmatpush1.msra.mxu0 0.0
        %1460 = vmatprep.subr.mxu0 0.0
        %1461 = vmatpush1.msra.mxu0 0.0
        %1462 = vmatprep.subr.mxu0 0.0
        %1463 = vmatpush1.msra.mxu0 0.0
        %1464 = vmatprep.subr.mxu0 0.0
        %1465 = vmatpush1.msra.mxu0 0.0
        %1466 = vmatprep.subr.mxu0 0.0
        %1467 = vmatpush1.msra.mxu0 0.0
        %1468 = vmatprep.subr.mxu0 0.0
        %1469 = vmatpush1.msra.mxu0 0.0
        %1470 = vmatprep.subr.mxu0 0.0
        %1471 = vmatpush1.msra.mxu0 0.0
        %1472 = vmatprep.mubr.f32.mxu0 0.0
        %1473 = vmatmul.mubr.f32.gmra.mrb[0].mxu0 %v1397
        %v1474 = vpop.f32.mrb[0].mxu0
        %v1475 = vadd.f32 %v1379, %v1474
        %v1476 = vpop.f32.mrb[0].mxu0
        %1477 = vmatprep.mubr.f32.mxu0 0.0
        %1478 = vmatmul.mubr.f32.gmra.mrb[0].mxu0 %v1400
        %v1479 = vpop.f32.mrb[0].mxu0
        %v1480 = vadd.f32 %v1384, %v1479
        %v1481 = vpop.f32.mrb[0].mxu0
        %1482 = vmatprep.mubr.f32.mxu0 0.0
        %1483 = vmatmul.mubr.f32.gmra.mrb[0].mxu0 %v1403
        %v1484 = vpop.f32.mrb[0].mxu0
        %v1485 = vadd.f32 %v1389, %v1484
        %v1486 = vpop.f32.mrb[0].mxu0
        %1487 = vmatprep.mubr.f32.mxu0 0.0
        %1488 = vmatmul.mubr.f32.gmra.mrb[0].mxu0 %v1406
        %v1489 = vpop.f32.mrb[0].mxu0
        %v1490 = vadd.f32 %v1394, %v1489
        %v1491 = vpop.f32.mrb[0].mxu0
        %1492 = vdwg.mxu0
        %s1493 = sld [smem:[#allocation3 + $0x2]]
        %vm1494 = vcmp.ge.f32.partialorder %v1475, 0.0
        %vm1495 = vcmp.ge.f32.partialorder %v1480, 0.0
        %vm1496 = vcmp.ge.f32.partialorder %v1485, 0.0
        %vm1497 = vcmp.ge.f32.partialorder %v1490, 0.0
        %v1498 = vstv %s1493
        %v1499 = vmul.f32 %v1498, %v1475
        %v1500 = vmul.f32 %v1498, %v1480
        %v1501 = vmul.f32 %v1498, %v1485
        %v1502 = vmul.f32 %v1498, %v1490
        %v1503 = vsel %vm1494, %v1475, %v1499
        %v1504 = vsel %vm1495, %v1480, %v1500
        %v1505 = vsel %vm1496, %v1485, %v1501
        %v1506 = vsel %vm1497, %v1490, %v1502
        %v1507 = vsel %vm438, %v1503, 0.0
        %v1508 = vsel %vm438, %v1504, 0.0
        %v1509 = vadd.f32 %v1507, %v1508
        %v1510 = vsel %vm438, %v1505, 0.0
        %v1511 = vadd.f32 %v1509, %v1510
        %v1512 = vsel %vm438, %v1506, 0.0
        %v1513 = vadd.f32 %v1511, %v1512
        %1514 = vadd.xlane.f32.xlu0 %v1513
        %v1515 = vpop.xlane.xlu0 %1514
        %v1516 = vrot.slane %v1515, 4
        %v1517 = vadd.f32 %v1515, %v1516
        %v1518 = vrot.slane %v1517, 2
        %v1519 = vadd.f32 %v1517, %v1518
        %v1520 = vrot.slane %v1519, 1
        %v1521 = vadd.f32 %v1519, %v1520
        %s1522 = vtos %v1521
        %v1523 = vmul.f32 %v1503, %v1503
        %v1524 = vmul.f32 %v1504, %v1504
        %v1525 = vmul.f32 %v1505, %v1505
        %v1526 = vmul.f32 %v1506, %v1506
        %v1527 = vsel %vm438, %v1523, 0.0
        %v1528 = vsel %vm438, %v1524, 0.0
        %v1529 = vadd.f32 %v1527, %v1528
        %v1530 = vsel %vm438, %v1525, 0.0
        %v1531 = vadd.f32 %v1529, %v1530
        %v1532 = vsel %vm438, %v1526, 0.0
        %v1533 = vadd.f32 %v1531, %v1532
        %1534 = vadd.xlane.f32.xlu0 %v1533
        %v1535 = vpop.xlane.xlu0 %1534
        %v1536 = vrot.slane %v1535, 4
        %v1537 = vadd.f32 %v1535, %v1536
        %v1538 = vrot.slane %v1537, 2
        %v1539 = vadd.f32 %v1537, %v1538
        %v1540 = vrot.slane %v1539, 1
        %v1541 = vadd.f32 %v1539, %v1540
        %s1542 = vtos %v1541
        %s1543 = smul.f32 %s1522, 0.0013020834
        %s1544 = smul.f32 %s1542, 0.0013020834
        %s1545 = smul.f32 %s1543, %s1543
        %s1546 = ssub.f32 %s1544, %s1545
        %s1547 = smax.f32 %s1546, 0.0
        %v1548 = vstv %s1543
        %v1549 = vsub.f32 %v1503, %v1548
        %v1550 = vsub.f32 %v1504, %v1548
        %v1551 = vsub.f32 %v1505, %v1548
        %v1552 = vsub.f32 %v1506, %v1548
        %s1553 = sadd.f32 %s1547, 1e-08
        %v1554 = vstv %s1553
        %v1555 = vrsqrt.pop %v1554
        %s1556 = vtos %v1555
        %v1557 = vstv %s1556
        %v1558 = vmul.f32 %v1549, %v1557
        %v1559 = vmul.f32 %v1550, %v1557
        %v1560 = vmul.f32 %v1551, %v1557
        %v1561 = vmul.f32 %v1552, %v1557
        %1562 = vset.pattern.permute.xlu0 1
        %1563 = vperm.xlu0 %1562, %v1367
        %v1564 = vpop.permute.xlu0 %1563
        %1566 = vset.pattern.permute.xlu0 1
        %1567 = vperm.xlu0 %1566, %v1368
        %v1568 = vpop.permute.xlu0 %1567
        %1570 = vset.pattern.permute.xlu0 1
        %1571 = vperm.xlu0 %1570, %v1369
        %v1572 = vpop.permute.xlu0 %1571
        %1574 = vset.pattern.permute.xlu0 1
        %1575 = vperm.xlu0 %1574, %v1370
        %v1576 = vpop.permute.xlu0 %1575
        %v1578 = vmul.f32 %v1564, %v1558
        %v1579 = vmul.f32 %v1568, %v1559
        %v1580 = vmul.f32 %v1572, %v1560
        %v1581 = vmul.f32 %v1576, %v1561
        %1582 = vset.pattern.permute.xlu0 2
        %1583 = vperm.xlu0 %1582, %v1367
        %v1584 = vpop.permute.xlu0 %1583
        %1586 = vset.pattern.permute.xlu0 2
        %1587 = vperm.xlu0 %1586, %v1368
        %v1588 = vpop.permute.xlu0 %1587
        %1590 = vset.pattern.permute.xlu0 2
        %1591 = vperm.xlu0 %1590, %v1369
        %v1592 = vpop.permute.xlu0 %1591
        %1594 = vset.pattern.permute.xlu0 2
        %1595 = vperm.xlu0 %1594, %v1370
        %v1596 = vpop.permute.xlu0 %1595
        %v1598 = vadd.f32 %v1578, %v1584
        %v1599 = vadd.f32 %v1579, %v1588
        %v1600 = vadd.f32 %v1580, %v1592
        %v1601 = vadd.f32 %v1581, %v1596
        %s1602 = scalar_lea.vmem %s8, 48
        %v1603 = vld [vmem:[%s1602] sm:$0xff]
        %v1604 = vld [vmem:[%s1602 + $0x8] sm:$0xff]
        %v1605 = vld [vmem:[%s1602 + $0x10] sm:$0xff]
        %v1607 = vsel %vm438, %v1598, 0
        %v1610 = vsel %vm438, %v1599, 0
        %v1613 = vsel %vm438, %v1600, 0
        %v1616 = vsel %vm438, %v1601, 0
        %1618 = vmatprep.subr.mxu0 0.0
        %1619 = vmatpush1.msra.mxu0 %v1603
        %1620 = vmatprep.subr.mxu0 0.0
        %1621 = vmatpush1.msra.mxu0 %v1604
        %1622 = vmatprep.subr.mxu0 0.0
        %1623 = vmatpush1.msra.mxu0 %v1605
        %1624 = vmatprep.subr.mxu0 0.0
        %1625 = vmatpush1.msra.mxu0 0.0
        %1626 = vmatprep.subr.mxu0 0.0
        %1627 = vmatpush1.msra.mxu0 0.0
        %1628 = vmatprep.subr.mxu0 0.0
        %1629 = vmatpush1.msra.mxu0 0.0
        %1630 = vmatprep.subr.mxu0 0.0
        %1631 = vmatpush1.msra.mxu0 0.0
        %1632 = vmatprep.subr.mxu0 0.0
        %1633 = vmatpush1.msra.mxu0 0.0
        %1634 = vmatprep.subr.mxu0 0.0
        %1635 = vmatpush1.msra.mxu0 0.0
        %1636 = vmatprep.subr.mxu0 0.0
        %1637 = vmatpush1.msra.mxu0 0.0
        %1638 = vmatprep.subr.mxu0 0.0
        %1639 = vmatpush1.msra.mxu0 0.0
        %1640 = vmatprep.subr.mxu0 0.0
        %1641 = vmatpush1.msra.mxu0 0.0
        %1642 = vmatprep.subr.mxu0 0.0
        %1643 = vmatpush1.msra.mxu0 0.0
        %1644 = vmatprep.subr.mxu0 0.0
        %1645 = vmatpush1.msra.mxu0 0.0
        %1646 = vmatprep.subr.mxu0 0.0
        %1647 = vmatpush1.msra.mxu0 0.0
        %1648 = vmatprep.subr.mxu0 0.0
        %1649 = vmatpush1.msra.mxu0 0.0
        %1650 = vmatprep.subr.mxu0 0.0
        %1651 = vmatpush1.msra.mxu0 0.0
        %1652 = vmatprep.subr.mxu0 0.0
        %1653 = vmatpush1.msra.mxu0 0.0
        %1654 = vmatprep.subr.mxu0 0.0
        %1655 = vmatpush1.msra.mxu0 0.0
        %1656 = vmatprep.subr.mxu0 0.0
        %1657 = vmatpush1.msra.mxu0 0.0
        %1658 = vmatprep.subr.mxu0 0.0
        %1659 = vmatpush1.msra.mxu0 0.0
        %1660 = vmatprep.subr.mxu0 0.0
        %1661 = vmatpush1.msra.mxu0 0.0
        %1662 = vmatprep.subr.mxu0 0.0
        %1663 = vmatpush1.msra.mxu0 0.0
        %1664 = vmatprep.subr.mxu0 0.0
        %1665 = vmatpush1.msra.mxu0 0.0
        %1666 = vmatprep.subr.mxu0 0.0
        %1667 = vmatpush1.msra.mxu0 0.0
        %1668 = vmatprep.subr.mxu0 0.0
        %1669 = vmatpush1.msra.mxu0 0.0
        %1670 = vmatprep.subr.mxu0 0.0
        %1671 = vmatpush1.msra.mxu0 0.0
        %1672 = vmatprep.subr.mxu0 0.0
        %1673 = vmatpush1.msra.mxu0 0.0
        %1674 = vmatprep.subr.mxu0 0.0
        %1675 = vmatpush1.msra.mxu0 0.0
        %1676 = vmatprep.subr.mxu0 0.0
        %1677 = vmatpush1.msra.mxu0 0.0
        %1678 = vmatprep.subr.mxu0 0.0
        %1679 = vmatpush1.msra.mxu0 0.0
        %1680 = vmatprep.subr.mxu0 0.0
        %1681 = vmatpush1.msra.mxu0 0.0
        %1682 = vmatprep.mubr.f32.mxu0 0.0
        %1683 = vmatmul.mubr.f32.gmra.mrb[0].mxu0 %v1607
        %v1684 = vpop.f32.mrb[0].mxu0
        %v1685 = vadd.f32 0.0, %v1684
        %v1686 = vpop.f32.mrb[0].mxu0
        %1687 = vmatprep.mubr.f32.mxu0 0.0
        %1688 = vmatmul.mubr.f32.gmra.mrb[0].mxu0 %v1610
        %v1689 = vpop.f32.mrb[0].mxu0
        %v1690 = vadd.f32 0.0, %v1689
        %v1691 = vpop.f32.mrb[0].mxu0
        %1692 = vmatprep.mubr.f32.mxu0 0.0
        %1693 = vmatmul.mubr.f32.gmra.mrb[0].mxu0 %v1613
        %v1694 = vpop.f32.mrb[0].mxu0
        %v1695 = vadd.f32 0.0, %v1694
        %v1696 = vpop.f32.mrb[0].mxu0
        %1697 = vmatprep.mubr.f32.mxu0 0.0
        %1698 = vmatmul.mubr.f32.gmra.mrb[0].mxu0 %v1616
        %v1699 = vpop.f32.mrb[0].mxu0
        %v1700 = vadd.f32 0.0, %v1699
        %v1701 = vpop.f32.mrb[0].mxu0
        %1702 = vdwg.mxu0
        %s1703 = scalar_lea.vmem %s8, 72
        %v1704 = vld [vmem:[%s1703] sm:$0xff]
        %v1705 = vld [vmem:[%s1703 + $0x8] sm:$0xff]
        %v1706 = vld [vmem:[%s1703 + $0x10] sm:$0xff]
        %1707 = vmatprep.subr.mxu0 0.0
        %1708 = vmatpush1.msra.mxu0 %v1704
        %1709 = vmatprep.subr.mxu0 0.0
        %1710 = vmatpush1.msra.mxu0 %v1705
        %1711 = vmatprep.subr.mxu0 0.0
        %1712 = vmatpush1.msra.mxu0 %v1706
        %1713 = vmatprep.subr.mxu0 0.0
        %1714 = vmatpush1.msra.mxu0 0.0
        %1715 = vmatprep.subr.mxu0 0.0
        %1716 = vmatpush1.msra.mxu0 0.0
        %1717 = vmatprep.subr.mxu0 0.0
        %1718 = vmatpush1.msra.mxu0 0.0
        %1719 = vmatprep.subr.mxu0 0.0
        %1720 = vmatpush1.msra.mxu0 0.0
        %1721 = vmatprep.subr.mxu0 0.0
        %1722 = vmatpush1.msra.mxu0 0.0
        %1723 = vmatprep.subr.mxu0 0.0
        %1724 = vmatpush1.msra.mxu0 0.0
        %1725 = vmatprep.subr.mxu0 0.0
        %1726 = vmatpush1.msra.mxu0 0.0
        %1727 = vmatprep.subr.mxu0 0.0
        %1728 = vmatpush1.msra.mxu0 0.0
        %1729 = vmatprep.subr.mxu0 0.0
        %1730 = vmatpush1.msra.mxu0 0.0
        %1731 = vmatprep.subr.mxu0 0.0
        %1732 = vmatpush1.msra.mxu0 0.0
        %1733 = vmatprep.subr.mxu0 0.0
        %1734 = vmatpush1.msra.mxu0 0.0
        %1735 = vmatprep.subr.mxu0 0.0
        %1736 = vmatpush1.msra.mxu0 0.0
        %1737 = vmatprep.subr.mxu0 0.0
        %1738 = vmatpush1.msra.mxu0 0.0
        %1739 = vmatprep.subr.mxu0 0.0
        %1740 = vmatpush1.msra.mxu0 0.0
        %1741 = vmatprep.subr.mxu0 0.0
        %1742 = vmatpush1.msra.mxu0 0.0
        %1743 = vmatprep.subr.mxu0 0.0
        %1744 = vmatpush1.msra.mxu0 0.0
        %1745 = vmatprep.subr.mxu0 0.0
        %1746 = vmatpush1.msra.mxu0 0.0
        %1747 = vmatprep.subr.mxu0 0.0
        %1748 = vmatpush1.msra.mxu0 0.0
        %1749 = vmatprep.subr.mxu0 0.0
        %1750 = vmatpush1.msra.mxu0 0.0
        %1751 = vmatprep.subr.mxu0 0.0
        %1752 = vmatpush1.msra.mxu0 0.0
        %1753 = vmatprep.subr.mxu0 0.0
        %1754 = vmatpush1.msra.mxu0 0.0
        %1755 = vmatprep.subr.mxu0 0.0
        %1756 = vmatpush1.msra.mxu0 0.0
        %1757 = vmatprep.subr.mxu0 0.0
        %1758 = vmatpush1.msra.mxu0 0.0
        %1759 = vmatprep.subr.mxu0 0.0
        %1760 = vmatpush1.msra.mxu0 0.0
        %1761 = vmatprep.subr.mxu0 0.0
        %1762 = vmatpush1.msra.mxu0 0.0
        %1763 = vmatprep.subr.mxu0 0.0
        %1764 = vmatpush1.msra.mxu0 0.0
        %1765 = vmatprep.subr.mxu0 0.0
        %1766 = vmatpush1.msra.mxu0 0.0
        %1767 = vmatprep.subr.mxu0 0.0
        %1768 = vmatpush1.msra.mxu0 0.0
        %1769 = vmatprep.subr.mxu0 0.0
        %1770 = vmatpush1.msra.mxu0 0.0
        %1771 = vmatprep.mubr.f32.mxu0 0.0
        %1772 = vmatmul.mubr.f32.gmra.mrb[0].mxu0 %v1607
        %v1773 = vpop.f32.mrb[0].mxu0
        %v1774 = vadd.f32 0.0, %v1773
        %v1775 = vpop.f32.mrb[0].mxu0
        %1776 = vmatprep.mubr.f32.mxu0 0.0
        %1777 = vmatmul.mubr.f32.gmra.mrb[0].mxu0 %v1610
        %v1778 = vpop.f32.mrb[0].mxu0
        %v1779 = vadd.f32 0.0, %v1778
        %v1780 = vpop.f32.mrb[0].mxu0
        %1781 = vmatprep.mubr.f32.mxu0 0.0
        %1782 = vmatmul.mubr.f32.gmra.mrb[0].mxu0 %v1613
        %v1783 = vpop.f32.mrb[0].mxu0
        %v1784 = vadd.f32 0.0, %v1783
        %v1785 = vpop.f32.mrb[0].mxu0
        %1786 = vmatprep.mubr.f32.mxu0 0.0
        %1787 = vmatmul.mubr.f32.gmra.mrb[0].mxu0 %v1616
        %v1788 = vpop.f32.mrb[0].mxu0
        %v1789 = vadd.f32 0.0, %v1788
        %v1790 = vpop.f32.mrb[0].mxu0
        %1791 = vdwg.mxu0
        %1792 = vset.pattern.permute.xlu0 3
        %1793 = vperm.xlu0 %1792, %v1367
        %v1794 = vpop.permute.xlu0 %1793
        %1796 = vset.pattern.permute.xlu0 3
        %1797 = vperm.xlu0 %1796, %v1368
        %v1798 = vpop.permute.xlu0 %1797
        %1800 = vset.pattern.permute.xlu0 3
        %1801 = vperm.xlu0 %1800, %v1369
        %v1802 = vpop.permute.xlu0 %1801
        %1804 = vset.pattern.permute.xlu0 3
        %1805 = vperm.xlu0 %1804, %v1370
        %v1806 = vpop.permute.xlu0 %1805
        %v1808 = vmul.f32 %v1794, %v1685
        %v1809 = vmul.f32 %v1798, %v1690
        %v1810 = vmul.f32 %v1802, %v1695
        %v1811 = vmul.f32 %v1806, %v1700
        %1812 = vset.pattern.permute.xlu0 4
        %1813 = vperm.xlu0 %1812, %v1367
        %v1814 = vpop.permute.xlu0 %1813
        %1816 = vset.pattern.permute.xlu0 4
        %1817 = vperm.xlu0 %1816, %v1368
        %v1818 = vpop.permute.xlu0 %1817
        %1820 = vset.pattern.permute.xlu0 4
        %1821 = vperm.xlu0 %1820, %v1369
        %v1822 = vpop.permute.xlu0 %1821
        %1824 = vset.pattern.permute.xlu0 4
        %1825 = vperm.xlu0 %1824, %v1370
        %v1826 = vpop.permute.xlu0 %1825
        %v1828 = vmul.f32 %v1814, %v1598
        %v1829 = vmul.f32 %v1818, %v1599
        %v1830 = vmul.f32 %v1822, %v1600
        %v1831 = vmul.f32 %v1826, %v1601
        %v1832 = vadd.f32 %v1808, %v1828
        %v1833 = vadd.f32 %v1809, %v1829
        %v1834 = vadd.f32 %v1810, %v1830
        %v1835 = vadd.f32 %v1811, %v1831
        %1836 = vset.pattern.permute.xlu0 5
        %1837 = vperm.xlu0 %1836, %v1367
        %v1838 = vpop.permute.xlu0 %1837
        %1840 = vset.pattern.permute.xlu0 5
        %1841 = vperm.xlu0 %1840, %v1368
        %v1842 = vpop.permute.xlu0 %1841
        %1844 = vset.pattern.permute.xlu0 5
        %1845 = vperm.xlu0 %1844, %v1369
        %v1846 = vpop.permute.xlu0 %1845
        %1848 = vset.pattern.permute.xlu0 5
        %1849 = vperm.xlu0 %1848, %v1370
        %v1850 = vpop.permute.xlu0 %1849
        %v1852 = vmul.f32 %v1838, %v1774
        %v1853 = vmul.f32 %v1842, %v1779
        %v1854 = vmul.f32 %v1846, %v1784
        %v1855 = vmul.f32 %v1850, %v1789
        %v1856 = vadd.f32 %v1832, %v1852
        %v1857 = vadd.f32 %v1833, %v1853
        %v1858 = vadd.f32 %v1834, %v1854
        %v1859 = vadd.f32 %v1835, %v1855
        %1860 = vset.pattern.permute.xlu0 6
        %1861 = vperm.xlu0 %1860, %v1367
        %v1862 = vpop.permute.xlu0 %1861
        %1864 = vset.pattern.permute.xlu0 6
        %1865 = vperm.xlu0 %1864, %v1368
        %v1866 = vpop.permute.xlu0 %1865
        %1868 = vset.pattern.permute.xlu0 6
        %1869 = vperm.xlu0 %1868, %v1369
        %v1870 = vpop.permute.xlu0 %1869
        %1872 = vset.pattern.permute.xlu0 6
        %1873 = vperm.xlu0 %1872, %v1370
        %v1874 = vpop.permute.xlu0 %1873
        %v1876 = vadd.f32 %v1856, %v1862
        %v1877 = vadd.f32 %v1857, %v1866
        %v1878 = vadd.f32 %v1858, %v1870
        %v1879 = vadd.f32 %v1859, %v1874
        %s1880 = sld [smem:[#allocation3 + $0x3]]
        %vm1881 = vcmp.ge.f32.partialorder %v1876, 0.0
        %vm1882 = vcmp.ge.f32.partialorder %v1877, 0.0
        %vm1883 = vcmp.ge.f32.partialorder %v1878, 0.0
        %vm1884 = vcmp.ge.f32.partialorder %v1879, 0.0
        %v1885 = vstv %s1880
        %v1886 = vmul.f32 %v1885, %v1876
        %v1887 = vmul.f32 %v1885, %v1877
        %v1888 = vmul.f32 %v1885, %v1878
        %v1889 = vmul.f32 %v1885, %v1879
        %v1890 = vsel %vm1881, %v1876, %v1886
        %v1891 = vsel %vm1882, %v1877, %v1887
        %v1892 = vsel %vm1883, %v1878, %v1888
        %v1893 = vsel %vm1884, %v1879, %v1889
        %v1894 = vsel %vm438, %v1890, 0.0
        %v1895 = vsel %vm438, %v1891, 0.0
        %v1896 = vadd.f32 %v1894, %v1895
        %v1897 = vsel %vm438, %v1892, 0.0
        %v1898 = vadd.f32 %v1896, %v1897
        %v1899 = vsel %vm438, %v1893, 0.0
        %v1900 = vadd.f32 %v1898, %v1899
        %1901 = vadd.xlane.f32.xlu0 %v1900
        %v1902 = vpop.xlane.xlu0 %1901
        %v1903 = vrot.slane %v1902, 4
        %v1904 = vadd.f32 %v1902, %v1903
        %v1905 = vrot.slane %v1904, 2
        %v1906 = vadd.f32 %v1904, %v1905
        %v1907 = vrot.slane %v1906, 1
        %v1908 = vadd.f32 %v1906, %v1907
        %s1909 = vtos %v1908
        %v1910 = vmul.f32 %v1890, %v1890
        %v1911 = vmul.f32 %v1891, %v1891
        %v1912 = vmul.f32 %v1892, %v1892
        %v1913 = vmul.f32 %v1893, %v1893
        %v1914 = vsel %vm438, %v1910, 0.0
        %v1915 = vsel %vm438, %v1911, 0.0
        %v1916 = vadd.f32 %v1914, %v1915
        %v1917 = vsel %vm438, %v1912, 0.0
        %v1918 = vadd.f32 %v1916, %v1917
        %v1919 = vsel %vm438, %v1913, 0.0
        %v1920 = vadd.f32 %v1918, %v1919
        %1921 = vadd.xlane.f32.xlu0 %v1920
        %v1922 = vpop.xlane.xlu0 %1921
        %v1923 = vrot.slane %v1922, 4
        %v1924 = vadd.f32 %v1922, %v1923
        %v1925 = vrot.slane %v1924, 2
        %v1926 = vadd.f32 %v1924, %v1925
        %v1927 = vrot.slane %v1926, 1
        %v1928 = vadd.f32 %v1926, %v1927
        %s1929 = vtos %v1928
        %s1930 = smul.f32 %s1909, 0.0013020834
        %s1931 = smul.f32 %s1929, 0.0013020834
        %s1932 = smul.f32 %s1930, %s1930
        %s1933 = ssub.f32 %s1931, %s1932
        %s1934 = smax.f32 %s1933, 0.0
        %v1935 = vstv %s1930
        %v1936 = vsub.f32 %v1890, %v1935
        %v1937 = vsub.f32 %v1891, %v1935
        %v1938 = vsub.f32 %v1892, %v1935
        %v1939 = vsub.f32 %v1893, %v1935
        %s1940 = sadd.f32 %s1934, 1e-08
        %v1941 = vstv %s1940
        %v1942 = vrsqrt.pop %v1941
        %s1943 = vtos %v1942
        %v1944 = vstv %s1943
        %v1945 = vmul.f32 %v1936, %v1944
        %v1946 = vmul.f32 %v1937, %v1944
        %v1947 = vmul.f32 %v1938, %v1944
        %v1948 = vmul.f32 %v1939, %v1944
        %1949 = vset.pattern.permute.xlu0 7
        %1950 = vperm.xlu0 %1949, %v1367
        %v1951 = vpop.permute.xlu0 %1950
        %1953 = vset.pattern.permute.xlu0 7
        %1954 = vperm.xlu0 %1953, %v1368
        %v1955 = vpop.permute.xlu0 %1954
        %1957 = vset.pattern.permute.xlu0 7
        %1958 = vperm.xlu0 %1957, %v1369
        %v1959 = vpop.permute.xlu0 %1958
        %1961 = vset.pattern.permute.xlu0 7
        %1962 = vperm.xlu0 %1961, %v1370
        %v1963 = vpop.permute.xlu0 %1962
        %v1965 = vmul.f32 %v1951, %v1945
        %v1966 = vmul.f32 %v1955, %v1946
        %v1967 = vmul.f32 %v1959, %v1947
        %v1968 = vmul.f32 %v1963, %v1948
        %1969 = vset.pattern.permute.xlu0 8
        %1970 = vperm.xlu0 %1969, %v1367
        %v1971 = vpop.permute.xlu0 %1970
        %1973 = vset.pattern.permute.xlu0 8
        %1974 = vperm.xlu0 %1973, %v1368
        %v1975 = vpop.permute.xlu0 %1974
        %1977 = vset.pattern.permute.xlu0 8
        %1978 = vperm.xlu0 %1977, %v1369
        %v1979 = vpop.permute.xlu0 %1978
        %1981 = vset.pattern.permute.xlu0 8
        %1982 = vperm.xlu0 %1981, %v1370
        %v1983 = vpop.permute.xlu0 %1982
        %v1985 = vadd.f32 %v1965, %v1971
        %v1986 = vadd.f32 %v1966, %v1975
        %v1987 = vadd.f32 %v1967, %v1979
        %v1988 = vadd.f32 %v1968, %v1983
        %s1989 = scalar_lea.vmem %s5, 32
        %v1990 = vld [vmem:[%s1989] sm:$0xff]
        %v1991 = vld [vmem:[%s1989 + $0x8] sm:$0xff]
        %v1992 = vld [vmem:[%s1989 + $0x10] sm:$0xff]
        %v1993 = vld [vmem:[%s1989 + $0x18] sm:$0xff]
        %1994 = vset.pattern.permute.xlu0 9
        %1995 = vperm.xlu0 %1994, %v1367
        %v1996 = vpop.permute.xlu0 %1995
        %1998 = vset.pattern.permute.xlu0 9
        %1999 = vperm.xlu0 %1998, %v1368
        %v2000 = vpop.permute.xlu0 %1999
        %2002 = vset.pattern.permute.xlu0 9
        %2003 = vperm.xlu0 %2002, %v1369
        %v2004 = vpop.permute.xlu0 %2003
        %2006 = vset.pattern.permute.xlu0 9
        %2007 = vperm.xlu0 %2006, %v1370
        %v2008 = vpop.permute.xlu0 %2007
        %v2011 = vsel %vm544, %v1990, 0
        %v2014 = vsel %vm544, %v1991, 0
        %v2017 = vsel %vm544, %v1992, 0
        %v2020 = vsel %vm544, %v1993, 0
        %2022 = vmatprep.subr.mxu0 0.0
        %2023 = vmatpush1.msra.mxu0 %v1985
        %2024 = vmatprep.subr.mxu0 0.0
        %2025 = vmatpush1.msra.mxu0 %v1986
        %2026 = vmatprep.subr.mxu0 0.0
        %2027 = vmatpush1.msra.mxu0 %v1987
        %2028 = vmatprep.subr.mxu0 0.0
        %2029 = vmatpush1.msra.mxu0 %v1988
        %2030 = vmatprep.subr.mxu0 0.0
        %2031 = vmatpush1.msra.mxu0 0.0
        %2032 = vmatprep.subr.mxu0 0.0
        %2033 = vmatpush1.msra.mxu0 0.0
        %2034 = vmatprep.subr.mxu0 0.0
        %2035 = vmatpush1.msra.mxu0 0.0
        %2036 = vmatprep.subr.mxu0 0.0
        %2037 = vmatpush1.msra.mxu0 0.0
        %2038 = vmatprep.subr.mxu0 0.0
        %2039 = vmatpush1.msra.mxu0 0.0
        %2040 = vmatprep.subr.mxu0 0.0
        %2041 = vmatpush1.msra.mxu0 0.0
        %2042 = vmatprep.subr.mxu0 0.0
        %2043 = vmatpush1.msra.mxu0 0.0
        %2044 = vmatprep.subr.mxu0 0.0
        %2045 = vmatpush1.msra.mxu0 0.0
        %2046 = vmatprep.subr.mxu0 0.0
        %2047 = vmatpush1.msra.mxu0 0.0
        %2048 = vmatprep.subr.mxu0 0.0
        %2049 = vmatpush1.msra.mxu0 0.0
        %2050 = vmatprep.subr.mxu0 0.0
        %2051 = vmatpush1.msra.mxu0 0.0
        %2052 = vmatprep.subr.mxu0 0.0
        %2053 = vmatpush1.msra.mxu0 0.0
        %2054 = vmatprep.subr.mxu0 0.0
        %2055 = vmatpush1.msra.mxu0 0.0
        %2056 = vmatprep.subr.mxu0 0.0
        %2057 = vmatpush1.msra.mxu0 0.0
        %2058 = vmatprep.subr.mxu0 0.0
        %2059 = vmatpush1.msra.mxu0 0.0
        %2060 = vmatprep.subr.mxu0 0.0
        %2061 = vmatpush1.msra.mxu0 0.0
        %2062 = vmatprep.subr.mxu0 0.0
        %2063 = vmatpush1.msra.mxu0 0.0
        %2064 = vmatprep.subr.mxu0 0.0
        %2065 = vmatpush1.msra.mxu0 0.0
        %2066 = vmatprep.subr.mxu0 0.0
        %2067 = vmatpush1.msra.mxu0 0.0
        %2068 = vmatprep.subr.mxu0 0.0
        %2069 = vmatpush1.msra.mxu0 0.0
        %2070 = vmatprep.subr.mxu0 0.0
        %2071 = vmatpush1.msra.mxu0 0.0
        %2072 = vmatprep.subr.mxu0 0.0
        %2073 = vmatpush1.msra.mxu0 0.0
        %2074 = vmatprep.subr.mxu0 0.0
        %2075 = vmatpush1.msra.mxu0 0.0
        %2076 = vmatprep.subr.mxu0 0.0
        %2077 = vmatpush1.msra.mxu0 0.0
        %2078 = vmatprep.subr.mxu0 0.0
        %2079 = vmatpush1.msra.mxu0 0.0
        %2080 = vmatprep.subr.mxu0 0.0
        %2081 = vmatpush1.msra.mxu0 0.0
        %2082 = vmatprep.subr.mxu0 0.0
        %2083 = vmatpush1.msra.mxu0 0.0
        %2084 = vmatprep.subr.mxu0 0.0
        %2085 = vmatpush1.msra.mxu0 0.0
        %2086 = vmatprep.mubr.f32.mxu0 0.0
        %2087 = vmatmul.mubr.f32.gmra.mrb[0].mxu0 %v2011
        %v2088 = vpop.f32.mrb[0].mxu0
        %v2089 = vadd.f32 %v1996, %v2088
        %v2090 = vpop.f32.mrb[0].mxu0
        %2091 = vmatprep.mubr.f32.mxu0 0.0
        %2092 = vmatmul.mubr.f32.gmra.mrb[0].mxu0 %v2014
        %v2093 = vpop.f32.mrb[0].mxu0
        %v2094 = vadd.f32 %v2000, %v2093
        %v2095 = vpop.f32.mrb[0].mxu0
        %2096 = vmatprep.mubr.f32.mxu0 0.0
        %2097 = vmatmul.mubr.f32.gmra.mrb[0].mxu0 %v2017
        %v2098 = vpop.f32.mrb[0].mxu0
        %v2099 = vadd.f32 %v2004, %v2098
        %v2100 = vpop.f32.mrb[0].mxu0
        %2101 = vmatprep.mubr.f32.mxu0 0.0
        %2102 = vmatmul.mubr.f32.gmra.mrb[0].mxu0 %v2020
        %v2103 = vpop.f32.mrb[0].mxu0
        %v2104 = vadd.f32 %v2008, %v2103
        %v2105 = vpop.f32.mrb[0].mxu0
        %2106 = vdwg.mxu0
        %v2107 = vadd.f32 %v1362, %v2089
        %v2108 = vadd.f32 %v1363, %v2094
        %v2109 = vadd.f32 %v1364, %v2099
        %v2110 = vadd.f32 %v1365, %v2104
        %s2111 = scalar_lea.vmem %s6, 64
        %v2112 = vld [vmem:[%s2111] sm:$0xff]
        %v2113 = vld [vmem:[%s2111 + $0x8] sm:$0xff]
        %v2114 = vld [vmem:[%s2111 + $0x10] sm:$0xff]
        %v2115 = vld [vmem:[%s2111 + $0x18] sm:$0xff]
        %s2116 = scalar_lea.vmem %s4, 64
        %v2117 = vld [vmem:[%s2116] sm:$0xff]
        %v2118 = vld [vmem:[%s2116 + $0x8] sm:$0xff]
        %v2119 = vld [vmem:[%s2116 + $0x10] sm:$0xff]
        %v2120 = vld [vmem:[%s2116 + $0x18] sm:$0xff]
        %2122 = vset.pattern.permute.xlu0 0
        %2123 = vperm.xlu0 %2122, %v2112
        %v2124 = vpop.permute.xlu0 %2123
        %2127 = vset.pattern.permute.xlu0 0
        %2128 = vperm.xlu0 %2127, %v2113
        %v2129 = vpop.permute.xlu0 %2128
        %2132 = vset.pattern.permute.xlu0 0
        %2133 = vperm.xlu0 %2132, %v2114
        %v2134 = vpop.permute.xlu0 %2133
        %2137 = vset.pattern.permute.xlu0 0
        %2138 = vperm.xlu0 %2137, %v2115
        %v2139 = vpop.permute.xlu0 %2138
        %v2142 = vsel %vm652, %v2117, 0
        %v2145 = vsel %vm652, %v2118, 0
        %v2148 = vsel %vm652, %v2119, 0
        %v2151 = vsel %vm652, %v2120, 0
        %2153 = vmatprep.subr.mxu0 0.0
        %2154 = vmatpush1.msra.mxu0 %v2107
        %2155 = vmatprep.subr.mxu0 0.0
        %2156 = vmatpush1.msra.mxu0 %v2108
        %2157 = vmatprep.subr.mxu0 0.0
        %2158 = vmatpush1.msra.mxu0 0.0
        %2159 = vmatprep.subr.mxu0 0.0
        %2160 = vmatpush1.msra.mxu0 0.0
        %2161 = vmatprep.subr.mxu0 0.0
        %2162 = vmatpush1.msra.mxu0 0.0
        %2163 = vmatprep.subr.mxu0 0.0
        %2164 = vmatpush1.msra.mxu0 0.0
        %2165 = vmatprep.subr.mxu0 0.0
        %2166 = vmatpush1.msra.mxu0 0.0
        %2167 = vmatprep.subr.mxu0 0.0
        %2168 = vmatpush1.msra.mxu0 0.0
        %2169 = vmatprep.subr.mxu0 0.0
        %2170 = vmatpush1.msra.mxu0 0.0
        %2171 = vmatprep.subr.mxu0 0.0
        %2172 = vmatpush1.msra.mxu0 0.0
        %2173 = vmatprep.subr.mxu0 0.0
        %2174 = vmatpush1.msra.mxu0 0.0
        %2175 = vmatprep.subr.mxu0 0.0
        %2176 = vmatpush1.msra.mxu0 0.0
        %2177 = vmatprep.subr.mxu0 0.0
        %2178 = vmatpush1.msra.mxu0 0.0
        %2179 = vmatprep.subr.mxu0 0.0
        %2180 = vmatpush1.msra.mxu0 0.0
        %2181 = vmatprep.subr.mxu0 0.0
        %2182 = vmatpush1.msra.mxu0 0.0
        %2183 = vmatprep.subr.mxu0 0.0
        %2184 = vmatpush1.msra.mxu0 0.0
        %2185 = vmatprep.subr.mxu0 0.0
        %2186 = vmatpush1.msra.mxu0 0.0
        %2187 = vmatprep.subr.mxu0 0.0
        %2188 = vmatpush1.msra.mxu0 0.0
        %2189 = vmatprep.subr.mxu0 0.0
        %2190 = vmatpush1.msra.mxu0 0.0
        %2191 = vmatprep.subr.mxu0 0.0
        %2192 = vmatpush1.msra.mxu0 0.0
        %2193 = vmatprep.subr.mxu0 0.0
        %2194 = vmatpush1.msra.mxu0 0.0
        %2195 = vmatprep.subr.mxu0 0.0
        %2196 = vmatpush1.msra.mxu0 0.0
        %2197 = vmatprep.subr.mxu0 0.0
        %2198 = vmatpush1.msra.mxu0 0.0
        %2199 = vmatprep.subr.mxu0 0.0
        %2200 = vmatpush1.msra.mxu0 0.0
        %2201 = vmatprep.subr.mxu0 0.0
        %2202 = vmatpush1.msra.mxu0 0.0
        %2203 = vmatprep.subr.mxu0 0.0
        %2204 = vmatpush1.msra.mxu0 0.0
        %2205 = vmatprep.subr.mxu0 0.0
        %2206 = vmatpush1.msra.mxu0 0.0
        %2207 = vmatprep.subr.mxu0 0.0
        %2208 = vmatpush1.msra.mxu0 0.0
        %2209 = vmatprep.subr.mxu0 0.0
        %2210 = vmatpush1.msra.mxu0 0.0
        %2211 = vmatprep.subr.mxu0 0.0
        %2212 = vmatpush1.msra.mxu0 0.0
        %2213 = vmatprep.subr.mxu0 0.0
        %2214 = vmatpush1.msra.mxu0 0.0
        %2215 = vmatprep.subr.mxu0 0.0
        %2216 = vmatpush1.msra.mxu0 0.0
        %2217 = vmatprep.mubr.f32.mxu0 0.0
        %2218 = vmatmul.mubr.f32.gmra.mrb[0].mxu0 %v2142
        %v2219 = vpop.f32.mrb[0].mxu0
        %v2220 = vadd.f32 %v2124, %v2219
        %v2221 = vpop.f32.mrb[0].mxu0
        %2222 = vmatprep.mubr.f32.mxu0 0.0
        %2223 = vmatmul.mubr.f32.gmra.mrb[0].mxu0 %v2145
        %v2224 = vpop.f32.mrb[0].mxu0
        %v2225 = vadd.f32 %v2129, %v2224
        %v2226 = vpop.f32.mrb[0].mxu0
        %2227 = vmatprep.mubr.f32.mxu0 0.0
        %2228 = vmatmul.mubr.f32.gmra.mrb[0].mxu0 %v2148
        %v2229 = vpop.f32.mrb[0].mxu0
        %v2230 = vadd.f32 %v2134, %v2229
        %v2231 = vpop.f32.mrb[0].mxu0
        %2232 = vmatprep.mubr.f32.mxu0 0.0
        %2233 = vmatmul.mubr.f32.gmra.mrb[0].mxu0 %v2151
        %v2234 = vpop.f32.mrb[0].mxu0
        %v2235 = vadd.f32 %v2139, %v2234
        %v2236 = vpop.f32.mrb[0].mxu0
        %2237 = vdwg.mxu0
        %s2238 = sld [smem:[#allocation3 + $0x4]]
        %vm2239 = vcmp.ge.f32.partialorder %v2220, 0.0
        %vm2240 = vcmp.ge.f32.partialorder %v2225, 0.0
        %vm2241 = vcmp.ge.f32.partialorder %v2230, 0.0
        %vm2242 = vcmp.ge.f32.partialorder %v2235, 0.0
        %v2243 = vstv %s2238
        %v2244 = vmul.f32 %v2243, %v2220
        %v2245 = vmul.f32 %v2243, %v2225
        %v2246 = vmul.f32 %v2243, %v2230
        %v2247 = vmul.f32 %v2243, %v2235
        %v2248 = vsel %vm2239, %v2220, %v2244
        %v2249 = vsel %vm2240, %v2225, %v2245
        %v2250 = vsel %vm2241, %v2230, %v2246
        %v2251 = vsel %vm2242, %v2235, %v2247
        %v2252 = vsel %vm438, %v2248, 0.0
        %v2253 = vsel %vm438, %v2249, 0.0
        %v2254 = vadd.f32 %v2252, %v2253
        %v2255 = vsel %vm438, %v2250, 0.0
        %v2256 = vadd.f32 %v2254, %v2255
        %v2257 = vsel %vm438, %v2251, 0.0
        %v2258 = vadd.f32 %v2256, %v2257
        %2259 = vadd.xlane.f32.xlu0 %v2258
        %v2260 = vpop.xlane.xlu0 %2259
        %v2261 = vrot.slane %v2260, 4
        %v2262 = vadd.f32 %v2260, %v2261
        %v2263 = vrot.slane %v2262, 2
        %v2264 = vadd.f32 %v2262, %v2263
        %v2265 = vrot.slane %v2264, 1
        %v2266 = vadd.f32 %v2264, %v2265
        %s2267 = vtos %v2266
        %v2268 = vmul.f32 %v2248, %v2248
        %v2269 = vmul.f32 %v2249, %v2249
        %v2270 = vmul.f32 %v2250, %v2250
        %v2271 = vmul.f32 %v2251, %v2251
        %v2272 = vsel %vm438, %v2268, 0.0
        %v2273 = vsel %vm438, %v2269, 0.0
        %v2274 = vadd.f32 %v2272, %v2273
        %v2275 = vsel %vm438, %v2270, 0.0
        %v2276 = vadd.f32 %v2274, %v2275
        %v2277 = vsel %vm438, %v2271, 0.0
        %v2278 = vadd.f32 %v2276, %v2277
        %2279 = vadd.xlane.f32.xlu0 %v2278
        %v2280 = vpop.xlane.xlu0 %2279
        %v2281 = vrot.slane %v2280, 4
        %v2282 = vadd.f32 %v2280, %v2281
        %v2283 = vrot.slane %v2282, 2
        %v2284 = vadd.f32 %v2282, %v2283
        %v2285 = vrot.slane %v2284, 1
        %v2286 = vadd.f32 %v2284, %v2285
        %s2287 = vtos %v2286
        %s2288 = smul.f32 %s2267, 0.0013020834
        %s2289 = smul.f32 %s2287, 0.0013020834
        %s2290 = smul.f32 %s2288, %s2288
        %s2291 = ssub.f32 %s2289, %s2290
        %s2292 = smax.f32 %s2291, 0.0
        %v2293 = vstv %s2288
        %v2294 = vsub.f32 %v2248, %v2293
        %v2295 = vsub.f32 %v2249, %v2293
        %v2296 = vsub.f32 %v2250, %v2293
        %v2297 = vsub.f32 %v2251, %v2293
        %s2298 = sadd.f32 %s2292, 1e-08
        %v2299 = vstv %s2298
        %v2300 = vrsqrt.pop %v2299
        %s2301 = vtos %v2300
        %v2302 = vstv %s2301
        %v2303 = vmul.f32 %v2294, %v2302
        %v2304 = vmul.f32 %v2295, %v2302
        %v2305 = vmul.f32 %v2296, %v2302
        %v2306 = vmul.f32 %v2297, %v2302
        %2307 = vset.pattern.permute.xlu0 1
        %2308 = vperm.xlu0 %2307, %v2112
        %v2309 = vpop.permute.xlu0 %2308
        %2311 = vset.pattern.permute.xlu0 1
        %2312 = vperm.xlu0 %2311, %v2113
        %v2313 = vpop.permute.xlu0 %2312
        %2315 = vset.pattern.permute.xlu0 1
        %2316 = vperm.xlu0 %2315, %v2114
        %v2317 = vpop.permute.xlu0 %2316
        %2319 = vset.pattern.permute.xlu0 1
        %2320 = vperm.xlu0 %2319, %v2115
        %v2321 = vpop.permute.xlu0 %2320
        %v2323 = vmul.f32 %v2309, %v2303
        %v2324 = vmul.f32 %v2313, %v2304
        %v2325 = vmul.f32 %v2317, %v2305
        %v2326 = vmul.f32 %v2321, %v2306
        %2327 = vset.pattern.permute.xlu0 2
        %2328 = vperm.xlu0 %2327, %v2112
        %v2329 = vpop.permute.xlu0 %2328
        %2331 = vset.pattern.permute.xlu0 2
        %2332 = vperm.xlu0 %2331, %v2113
        %v2333 = vpop.permute.xlu0 %2332
        %2335 = vset.pattern.permute.xlu0 2
        %2336 = vperm.xlu0 %2335, %v2114
        %v2337 = vpop.permute.xlu0 %2336
        %2339 = vset.pattern.permute.xlu0 2
        %2340 = vperm.xlu0 %2339, %v2115
        %v2341 = vpop.permute.xlu0 %2340
        %v2343 = vadd.f32 %v2323, %v2329
        %v2344 = vadd.f32 %v2324, %v2333
        %v2345 = vadd.f32 %v2325, %v2337
        %v2346 = vadd.f32 %v2326, %v2341
        %s2347 = scalar_lea.vmem %s8, 96
        %v2348 = vld [vmem:[%s2347] sm:$0xff]
        %v2349 = vld [vmem:[%s2347 + $0x8] sm:$0xff]
        %v2350 = vld [vmem:[%s2347 + $0x10] sm:$0xff]
        %v2352 = vsel %vm438, %v2343, 0
        %v2355 = vsel %vm438, %v2344, 0
        %v2358 = vsel %vm438, %v2345, 0
        %v2361 = vsel %vm438, %v2346, 0
        %2363 = vmatprep.subr.mxu0 0.0
        %2364 = vmatpush1.msra.mxu0 %v2348
        %2365 = vmatprep.subr.mxu0 0.0
        %2366 = vmatpush1.msra.mxu0 %v2349
        %2367 = vmatprep.subr.mxu0 0.0
        %2368 = vmatpush1.msra.mxu0 %v2350
        %2369 = vmatprep.subr.mxu0 0.0
        %2370 = vmatpush1.msra.mxu0 0.0
        %2371 = vmatprep.subr.mxu0 0.0
        %2372 = vmatpush1.msra.mxu0 0.0
        %2373 = vmatprep.subr.mxu0 0.0
        %2374 = vmatpush1.msra.mxu0 0.0
        %2375 = vmatprep.subr.mxu0 0.0
        %2376 = vmatpush1.msra.mxu0 0.0
        %2377 = vmatprep.subr.mxu0 0.0
        %2378 = vmatpush1.msra.mxu0 0.0
        %2379 = vmatprep.subr.mxu0 0.0
        %2380 = vmatpush1.msra.mxu0 0.0
        %2381 = vmatprep.subr.mxu0 0.0
        %2382 = vmatpush1.msra.mxu0 0.0
        %2383 = vmatprep.subr.mxu0 0.0
        %2384 = vmatpush1.msra.mxu0 0.0
        %2385 = vmatprep.subr.mxu0 0.0
        %2386 = vmatpush1.msra.mxu0 0.0
        %2387 = vmatprep.subr.mxu0 0.0
        %2388 = vmatpush1.msra.mxu0 0.0
        %2389 = vmatprep.subr.mxu0 0.0
        %2390 = vmatpush1.msra.mxu0 0.0
        %2391 = vmatprep.subr.mxu0 0.0
        %2392 = vmatpush1.msra.mxu0 0.0
        %2393 = vmatprep.subr.mxu0 0.0
        %2394 = vmatpush1.msra.mxu0 0.0
        %2395 = vmatprep.subr.mxu0 0.0
        %2396 = vmatpush1.msra.mxu0 0.0
        %2397 = vmatprep.subr.mxu0 0.0
        %2398 = vmatpush1.msra.mxu0 0.0
        %2399 = vmatprep.subr.mxu0 0.0
        %2400 = vmatpush1.msra.mxu0 0.0
        %2401 = vmatprep.subr.mxu0 0.0
        %2402 = vmatpush1.msra.mxu0 0.0
        %2403 = vmatprep.subr.mxu0 0.0
        %2404 = vmatpush1.msra.mxu0 0.0
        %2405 = vmatprep.subr.mxu0 0.0
        %2406 = vmatpush1.msra.mxu0 0.0
        %2407 = vmatprep.subr.mxu0 0.0
        %2408 = vmatpush1.msra.mxu0 0.0
        %2409 = vmatprep.subr.mxu0 0.0
        %2410 = vmatpush1.msra.mxu0 0.0
        %2411 = vmatprep.subr.mxu0 0.0
        %2412 = vmatpush1.msra.mxu0 0.0
        %2413 = vmatprep.subr.mxu0 0.0
        %2414 = vmatpush1.msra.mxu0 0.0
        %2415 = vmatprep.subr.mxu0 0.0
        %2416 = vmatpush1.msra.mxu0 0.0
        %2417 = vmatprep.subr.mxu0 0.0
        %2418 = vmatpush1.msra.mxu0 0.0
        %2419 = vmatprep.subr.mxu0 0.0
        %2420 = vmatpush1.msra.mxu0 0.0
        %2421 = vmatprep.subr.mxu0 0.0
        %2422 = vmatpush1.msra.mxu0 0.0
        %2423 = vmatprep.subr.mxu0 0.0
        %2424 = vmatpush1.msra.mxu0 0.0
        %2425 = vmatprep.subr.mxu0 0.0
        %2426 = vmatpush1.msra.mxu0 0.0
        %2427 = vmatprep.mubr.f32.mxu0 0.0
        %2428 = vmatmul.mubr.f32.gmra.mrb[0].mxu0 %v2352
        %v2429 = vpop.f32.mrb[0].mxu0
        %v2430 = vadd.f32 0.0, %v2429
        %v2431 = vpop.f32.mrb[0].mxu0
        %2432 = vmatprep.mubr.f32.mxu0 0.0
        %2433 = vmatmul.mubr.f32.gmra.mrb[0].mxu0 %v2355
        %v2434 = vpop.f32.mrb[0].mxu0
        %v2435 = vadd.f32 0.0, %v2434
        %v2436 = vpop.f32.mrb[0].mxu0
        %2437 = vmatprep.mubr.f32.mxu0 0.0
        %2438 = vmatmul.mubr.f32.gmra.mrb[0].mxu0 %v2358
        %v2439 = vpop.f32.mrb[0].mxu0
        %v2440 = vadd.f32 0.0, %v2439
        %v2441 = vpop.f32.mrb[0].mxu0
        %2442 = vmatprep.mubr.f32.mxu0 0.0
        %2443 = vmatmul.mubr.f32.gmra.mrb[0].mxu0 %v2361
        %v2444 = vpop.f32.mrb[0].mxu0
        %v2445 = vadd.f32 0.0, %v2444
        %v2446 = vpop.f32.mrb[0].mxu0
        %2447 = vdwg.mxu0
        %s2448 = scalar_lea.vmem %s8, 120
        %v2449 = vld [vmem:[%s2448] sm:$0xff]
        %v2450 = vld [vmem:[%s2448 + $0x8] sm:$0xff]
        %v2451 = vld [vmem:[%s2448 + $0x10] sm:$0xff]
        %2452 = vmatprep.subr.mxu0 0.0
        %2453 = vmatpush1.msra.mxu0 %v2449
        %2454 = vmatprep.subr.mxu0 0.0
        %2455 = vmatpush1.msra.mxu0 %v2450
        %2456 = vmatprep.subr.mxu0 0.0
        %2457 = vmatpush1.msra.mxu0 %v2451
        %2458 = vmatprep.subr.mxu0 0.0
        %2459 = vmatpush1.msra.mxu0 0.0
        %2460 = vmatprep.subr.mxu0 0.0
        %2461 = vmatpush1.msra.mxu0 0.0
        %2462 = vmatprep.subr.mxu0 0.0
        %2463 = vmatpush1.msra.mxu0 0.0
        %2464 = vmatprep.subr.mxu0 0.0
        %2465 = vmatpush1.msra.mxu0 0.0
        %2466 = vmatprep.subr.mxu0 0.0
        %2467 = vmatpush1.msra.mxu0 0.0
        %2468 = vmatprep.subr.mxu0 0.0
        %2469 = vmatpush1.msra.mxu0 0.0
        %2470 = vmatprep.subr.mxu0 0.0
        %2471 = vmatpush1.msra.mxu0 0.0
        %2472 = vmatprep.subr.mxu0 0.0
        %2473 = vmatpush1.msra.mxu0 0.0
        %2474 = vmatprep.subr.mxu0 0.0
        %2475 = vmatpush1.msra.mxu0 0.0
        %2476 = vmatprep.subr.mxu0 0.0
        %2477 = vmatpush1.msra.mxu0 0.0
        %2478 = vmatprep.subr.mxu0 0.0
        %2479 = vmatpush1.msra.mxu0 0.0
        %2480 = vmatprep.subr.mxu0 0.0
        %2481 = vmatpush1.msra.mxu0 0.0
        %2482 = vmatprep.subr.mxu0 0.0
        %2483 = vmatpush1.msra.mxu0 0.0
        %2484 = vmatprep.subr.mxu0 0.0
        %2485 = vmatpush1.msra.mxu0 0.0
        %2486 = vmatprep.subr.mxu0 0.0
        %2487 = vmatpush1.msra.mxu0 0.0
        %2488 = vmatprep.subr.mxu0 0.0
        %2489 = vmatpush1.msra.mxu0 0.0
        %2490 = vmatprep.subr.mxu0 0.0
        %2491 = vmatpush1.msra.mxu0 0.0
        %2492 = vmatprep.subr.mxu0 0.0
        %2493 = vmatpush1.msra.mxu0 0.0
        %2494 = vmatprep.subr.mxu0 0.0
        %2495 = vmatpush1.msra.mxu0 0.0
        %2496 = vmatprep.subr.mxu0 0.0
        %2497 = vmatpush1.msra.mxu0 0.0
        %2498 = vmatprep.subr.mxu0 0.0
        %2499 = vmatpush1.msra.mxu0 0.0
        %2500 = vmatprep.subr.mxu0 0.0
        %2501 = vmatpush1.msra.mxu0 0.0
        %2502 = vmatprep.subr.mxu0 0.0
        %2503 = vmatpush1.msra.mxu0 0.0
        %2504 = vmatprep.subr.mxu0 0.0
        %2505 = vmatpush1.msra.mxu0 0.0
        %2506 = vmatprep.subr.mxu0 0.0
        %2507 = vmatpush1.msra.mxu0 0.0
        %2508 = vmatprep.subr.mxu0 0.0
        %2509 = vmatpush1.msra.mxu0 0.0
        %2510 = vmatprep.subr.mxu0 0.0
        %2511 = vmatpush1.msra.mxu0 0.0
        %2512 = vmatprep.subr.mxu0 0.0
        %2513 = vmatpush1.msra.mxu0 0.0
        %2514 = vmatprep.subr.mxu0 0.0
        %2515 = vmatpush1.msra.mxu0 0.0
        %2516 = vmatprep.mubr.f32.mxu0 0.0
        %2517 = vmatmul.mubr.f32.gmra.mrb[0].mxu0 %v2352
        %v2518 = vpop.f32.mrb[0].mxu0
        %v2519 = vadd.f32 0.0, %v2518
        %v2520 = vpop.f32.mrb[0].mxu0
        %2521 = vmatprep.mubr.f32.mxu0 0.0
        %2522 = vmatmul.mubr.f32.gmra.mrb[0].mxu0 %v2355
        %v2523 = vpop.f32.mrb[0].mxu0
        %v2524 = vadd.f32 0.0, %v2523
        %v2525 = vpop.f32.mrb[0].mxu0
        %2526 = vmatprep.mubr.f32.mxu0 0.0
        %2527 = vmatmul.mubr.f32.gmra.mrb[0].mxu0 %v2358
        %v2528 = vpop.f32.mrb[0].mxu0
        %v2529 = vadd.f32 0.0, %v2528
        %v2530 = vpop.f32.mrb[0].mxu0
        %2531 = vmatprep.mubr.f32.mxu0 0.0
        %2532 = vmatmul.mubr.f32.gmra.mrb[0].mxu0 %v2361
        %v2533 = vpop.f32.mrb[0].mxu0
        %v2534 = vadd.f32 0.0, %v2533
        %v2535 = vpop.f32.mrb[0].mxu0
        %2536 = vdwg.mxu0
        %2537 = vset.pattern.permute.xlu0 3
        %2538 = vperm.xlu0 %2537, %v2112
        %v2539 = vpop.permute.xlu0 %2538
        %2541 = vset.pattern.permute.xlu0 3
        %2542 = vperm.xlu0 %2541, %v2113
        %v2543 = vpop.permute.xlu0 %2542
        %2545 = vset.pattern.permute.xlu0 3
        %2546 = vperm.xlu0 %2545, %v2114
        %v2547 = vpop.permute.xlu0 %2546
        %2549 = vset.pattern.permute.xlu0 3
        %2550 = vperm.xlu0 %2549, %v2115
        %v2551 = vpop.permute.xlu0 %2550
        %v2553 = vmul.f32 %v2539, %v2430
        %v2554 = vmul.f32 %v2543, %v2435
        %v2555 = vmul.f32 %v2547, %v2440
        %v2556 = vmul.f32 %v2551, %v2445
        %2557 = vset.pattern.permute.xlu0 4
        %2558 = vperm.xlu0 %2557, %v2112
        %v2559 = vpop.permute.xlu0 %2558
        %2561 = vset.pattern.permute.xlu0 4
        %2562 = vperm.xlu0 %2561, %v2113
        %v2563 = vpop.permute.xlu0 %2562
        %2565 = vset.pattern.permute.xlu0 4
        %2566 = vperm.xlu0 %2565, %v2114
        %v2567 = vpop.permute.xlu0 %2566
        %2569 = vset.pattern.permute.xlu0 4
        %2570 = vperm.xlu0 %2569, %v2115
        %v2571 = vpop.permute.xlu0 %2570
        %v2573 = vmul.f32 %v2559, %v2343
        %v2574 = vmul.f32 %v2563, %v2344
        %v2575 = vmul.f32 %v2567, %v2345
        %v2576 = vmul.f32 %v2571, %v2346
        %v2577 = vadd.f32 %v2553, %v2573
        %v2578 = vadd.f32 %v2554, %v2574
        %v2579 = vadd.f32 %v2555, %v2575
        %v2580 = vadd.f32 %v2556, %v2576
        %2581 = vset.pattern.permute.xlu0 5
        %2582 = vperm.xlu0 %2581, %v2112
        %v2583 = vpop.permute.xlu0 %2582
        %2585 = vset.pattern.permute.xlu0 5
        %2586 = vperm.xlu0 %2585, %v2113
        %v2587 = vpop.permute.xlu0 %2586
        %2589 = vset.pattern.permute.xlu0 5
        %2590 = vperm.xlu0 %2589, %v2114
        %v2591 = vpop.permute.xlu0 %2590
        %2593 = vset.pattern.permute.xlu0 5
        %2594 = vperm.xlu0 %2593, %v2115
        %v2595 = vpop.permute.xlu0 %2594
        %v2597 = vmul.f32 %v2583, %v2519
        %v2598 = vmul.f32 %v2587, %v2524
        %v2599 = vmul.f32 %v2591, %v2529
        %v2600 = vmul.f32 %v2595, %v2534
        %v2601 = vadd.f32 %v2577, %v2597
        %v2602 = vadd.f32 %v2578, %v2598
        %v2603 = vadd.f32 %v2579, %v2599
        %v2604 = vadd.f32 %v2580, %v2600
        %2605 = vset.pattern.permute.xlu0 6
        %2606 = vperm.xlu0 %2605, %v2112
        %v2607 = vpop.permute.xlu0 %2606
        %2609 = vset.pattern.permute.xlu0 6
        %2610 = vperm.xlu0 %2609, %v2113
        %v2611 = vpop.permute.xlu0 %2610
        %2613 = vset.pattern.permute.xlu0 6
        %2614 = vperm.xlu0 %2613, %v2114
        %v2615 = vpop.permute.xlu0 %2614
        %2617 = vset.pattern.permute.xlu0 6
        %2618 = vperm.xlu0 %2617, %v2115
        %v2619 = vpop.permute.xlu0 %2618
        %v2621 = vadd.f32 %v2601, %v2607
        %v2622 = vadd.f32 %v2602, %v2611
        %v2623 = vadd.f32 %v2603, %v2615
        %v2624 = vadd.f32 %v2604, %v2619
        %s2625 = sld [smem:[#allocation3 + $0x5]]
        %vm2626 = vcmp.ge.f32.partialorder %v2621, 0.0
        %vm2627 = vcmp.ge.f32.partialorder %v2622, 0.0
        %vm2628 = vcmp.ge.f32.partialorder %v2623, 0.0
        %vm2629 = vcmp.ge.f32.partialorder %v2624, 0.0
        %v2630 = vstv %s2625
        %v2631 = vmul.f32 %v2630, %v2621
        %v2632 = vmul.f32 %v2630, %v2622
        %v2633 = vmul.f32 %v2630, %v2623
        %v2634 = vmul.f32 %v2630, %v2624
        %v2635 = vsel %vm2626, %v2621, %v2631
        %v2636 = vsel %vm2627, %v2622, %v2632
        %v2637 = vsel %vm2628, %v2623, %v2633
        %v2638 = vsel %vm2629, %v2624, %v2634
        %v2639 = vsel %vm438, %v2635, 0.0
        %v2640 = vsel %vm438, %v2636, 0.0
        %v2641 = vadd.f32 %v2639, %v2640
        %v2642 = vsel %vm438, %v2637, 0.0
        %v2643 = vadd.f32 %v2641, %v2642
        %v2644 = vsel %vm438, %v2638, 0.0
        %v2645 = vadd.f32 %v2643, %v2644
        %2646 = vadd.xlane.f32.xlu0 %v2645
        %v2647 = vpop.xlane.xlu0 %2646
        %v2648 = vrot.slane %v2647, 4
        %v2649 = vadd.f32 %v2647, %v2648
        %v2650 = vrot.slane %v2649, 2
        %v2651 = vadd.f32 %v2649, %v2650
        %v2652 = vrot.slane %v2651, 1
        %v2653 = vadd.f32 %v2651, %v2652
        %s2654 = vtos %v2653
        %v2655 = vmul.f32 %v2635, %v2635
        %v2656 = vmul.f32 %v2636, %v2636
        %v2657 = vmul.f32 %v2637, %v2637
        %v2658 = vmul.f32 %v2638, %v2638
        %v2659 = vsel %vm438, %v2655, 0.0
        %v2660 = vsel %vm438, %v2656, 0.0
        %v2661 = vadd.f32 %v2659, %v2660
        %v2662 = vsel %vm438, %v2657, 0.0
        %v2663 = vadd.f32 %v2661, %v2662
        %v2664 = vsel %vm438, %v2658, 0.0
        %v2665 = vadd.f32 %v2663, %v2664
        %2666 = vadd.xlane.f32.xlu0 %v2665
        %v2667 = vpop.xlane.xlu0 %2666
        %v2668 = vrot.slane %v2667, 4
        %v2669 = vadd.f32 %v2667, %v2668
        %v2670 = vrot.slane %v2669, 2
        %v2671 = vadd.f32 %v2669, %v2670
        %v2672 = vrot.slane %v2671, 1
        %v2673 = vadd.f32 %v2671, %v2672
        %s2674 = vtos %v2673
        %s2675 = smul.f32 %s2654, 0.0013020834
        %s2676 = smul.f32 %s2674, 0.0013020834
        %s2677 = smul.f32 %s2675, %s2675
        %s2678 = ssub.f32 %s2676, %s2677
        %s2679 = smax.f32 %s2678, 0.0
        %v2680 = vstv %s2675
        %v2681 = vsub.f32 %v2635, %v2680
        %v2682 = vsub.f32 %v2636, %v2680
        %v2683 = vsub.f32 %v2637, %v2680
        %v2684 = vsub.f32 %v2638, %v2680
        %s2685 = sadd.f32 %s2679, 1e-08
        %v2686 = vstv %s2685
        %v2687 = vrsqrt.pop %v2686
        %s2688 = vtos %v2687
        %v2689 = vstv %s2688
        %v2690 = vmul.f32 %v2681, %v2689
        %v2691 = vmul.f32 %v2682, %v2689
        %v2692 = vmul.f32 %v2683, %v2689
        %v2693 = vmul.f32 %v2684, %v2689
        %2694 = vset.pattern.permute.xlu0 7
        %2695 = vperm.xlu0 %2694, %v2112
        %v2696 = vpop.permute.xlu0 %2695
        %2698 = vset.pattern.permute.xlu0 7
        %2699 = vperm.xlu0 %2698, %v2113
        %v2700 = vpop.permute.xlu0 %2699
        %2702 = vset.pattern.permute.xlu0 7
        %2703 = vperm.xlu0 %2702, %v2114
        %v2704 = vpop.permute.xlu0 %2703
        %2706 = vset.pattern.permute.xlu0 7
        %2707 = vperm.xlu0 %2706, %v2115
        %v2708 = vpop.permute.xlu0 %2707
        %v2710 = vmul.f32 %v2696, %v2690
        %v2711 = vmul.f32 %v2700, %v2691
        %v2712 = vmul.f32 %v2704, %v2692
        %v2713 = vmul.f32 %v2708, %v2693
        %2714 = vset.pattern.permute.xlu0 8
        %2715 = vperm.xlu0 %2714, %v2112
        %v2716 = vpop.permute.xlu0 %2715
        %2718 = vset.pattern.permute.xlu0 8
        %2719 = vperm.xlu0 %2718, %v2113
        %v2720 = vpop.permute.xlu0 %2719
        %2722 = vset.pattern.permute.xlu0 8
        %2723 = vperm.xlu0 %2722, %v2114
        %v2724 = vpop.permute.xlu0 %2723
        %2726 = vset.pattern.permute.xlu0 8
        %2727 = vperm.xlu0 %2726, %v2115
        %v2728 = vpop.permute.xlu0 %2727
        %v2730 = vadd.f32 %v2710, %v2716
        %v2731 = vadd.f32 %v2711, %v2720
        %v2732 = vadd.f32 %v2712, %v2724
        %v2733 = vadd.f32 %v2713, %v2728
        %s2734 = scalar_lea.vmem %s5, 64
        %v2735 = vld [vmem:[%s2734] sm:$0xff]
        %v2736 = vld [vmem:[%s2734 + $0x8] sm:$0xff]
        %v2737 = vld [vmem:[%s2734 + $0x10] sm:$0xff]
        %v2738 = vld [vmem:[%s2734 + $0x18] sm:$0xff]
        %2739 = vset.pattern.permute.xlu0 9
        %2740 = vperm.xlu0 %2739, %v2112
        %v2741 = vpop.permute.xlu0 %2740
        %2742 = vset.pattern.permute.xlu0 9
        %2743 = vperm.xlu0 %2742, %v2113
        %v2744 = vpop.permute.xlu0 %2743
        %2745 = vset.pattern.permute.xlu0 9
        %2746 = vperm.xlu0 %2745, %v2114
        %v2747 = vpop.permute.xlu0 %2746
        %2749 = vset.pattern.permute.xlu0 9
        %2750 = vperm.xlu0 %2749, %v2115
        %v2751 = vpop.permute.xlu0 %2750
        %v2754 = vsel %vm544, %v2735, 0
        %v2757 = vsel %vm544, %v2736, 0
        %v2760 = vsel %vm544, %v2737, 0
        %v2763 = vsel %vm544, %v2738, 0
        %2765 = vmatprep.subr.mxu0 0.0
        %2766 = vmatpush1.msra.mxu0 %v2730
        %2767 = vmatprep.subr.mxu0 0.0
        %2768 = vmatpush1.msra.mxu0 %v2731
        %2769 = vmatprep.subr.mxu0 0.0
        %2770 = vmatpush1.msra.mxu0 %v2732
        %2771 = vmatprep.subr.mxu0 0.0
        %2772 = vmatpush1.msra.mxu0 %v2733
        %2773 = vmatprep.subr.mxu0 0.0
        %2774 = vmatpush1.msra.mxu0 0.0
        %2775 = vmatprep.subr.mxu0 0.0
        %2776 = vmatpush1.msra.mxu0 0.0
        %2777 = vmatprep.subr.mxu0 0.0
        %2778 = vmatpush1.msra.mxu0 0.0
        %2779 = vmatprep.subr.mxu0 0.0
        %2780 = vmatpush1.msra.mxu0 0.0
        %2781 = vmatprep.subr.mxu0 0.0
        %2782 = vmatpush1.msra.mxu0 0.0
        %2783 = vmatprep.subr.mxu0 0.0
        %2784 = vmatpush1.msra.mxu0 0.0
        %2785 = vmatprep.subr.mxu0 0.0
        %2786 = vmatpush1.msra.mxu0 0.0
        %2787 = vmatprep.subr.mxu0 0.0
        %2788 = vmatpush1.msra.mxu0 0.0
        %2789 = vmatprep.subr.mxu0 0.0
        %2790 = vmatpush1.msra.mxu0 0.0
        %2791 = vmatprep.subr.mxu0 0.0
        %2792 = vmatpush1.msra.mxu0 0.0
        %2793 = vmatprep.subr.mxu0 0.0
        %2794 = vmatpush1.msra.mxu0 0.0
        %2795 = vmatprep.subr.mxu0 0.0
        %2796 = vmatpush1.msra.mxu0 0.0
        %2797 = vmatprep.subr.mxu0 0.0
        %2798 = vmatpush1.msra.mxu0 0.0
        %2799 = vmatprep.subr.mxu0 0.0
        %2800 = vmatpush1.msra.mxu0 0.0
        %2801 = vmatprep.subr.mxu0 0.0
        %2802 = vmatpush1.msra.mxu0 0.0
        %2803 = vmatprep.subr.mxu0 0.0
        %2804 = vmatpush1.msra.mxu0 0.0
        %2805 = vmatprep.subr.mxu0 0.0
        %2806 = vmatpush1.msra.mxu0 0.0
        %2807 = vmatprep.subr.mxu0 0.0
        %2808 = vmatpush1.msra.mxu0 0.0
        %2809 = vmatprep.subr.mxu0 0.0
        %2810 = vmatpush1.msra.mxu0 0.0
        %2811 = vmatprep.subr.mxu0 0.0
        %2812 = vmatpush1.msra.mxu0 0.0
        %2813 = vmatprep.subr.mxu0 0.0
        %2814 = vmatpush1.msra.mxu0 0.0
        %2815 = vmatprep.subr.mxu0 0.0
        %2816 = vmatpush1.msra.mxu0 0.0
        %2817 = vmatprep.subr.mxu0 0.0
        %2818 = vmatpush1.msra.mxu0 0.0
        %2819 = vmatprep.subr.mxu0 0.0
        %2820 = vmatpush1.msra.mxu0 0.0
        %2821 = vmatprep.subr.mxu0 0.0
        %2822 = vmatpush1.msra.mxu0 0.0
        %2823 = vmatprep.subr.mxu0 0.0
        %2824 = vmatpush1.msra.mxu0 0.0
        %2825 = vmatprep.subr.mxu0 0.0
        %2826 = vmatpush1.msra.mxu0 0.0
        %2827 = vmatprep.subr.mxu0 0.0
        %2828 = vmatpush1.msra.mxu0 0.0
        %2829 = vmatprep.mubr.f32.mxu0 0.0
        %2830 = vmatmul.mubr.f32.gmra.mrb[0].mxu0 %v2754
        %v2831 = vpop.f32.mrb[0].mxu0
        %v2832 = vpop.f32.mrb[0].mxu0
        %2833 = vmatprep.mubr.f32.mxu0 0.0
        %2834 = vmatmul.mubr.f32.gmra.mrb[0].mxu0 %v2757
        %v2835 = vpop.f32.mrb[0].mxu0
        %v2836 = vpop.f32.mrb[0].mxu0
        %2837 = vmatprep.mubr.f32.mxu0 0.0
        %2838 = vmatmul.mubr.f32.gmra.mrb[0].mxu0 %v2760
        %v2839 = vpop.f32.mrb[0].mxu0
        %v2840 = vadd.f32 %v2747, %v2839
        %v2841 = vpop.f32.mrb[0].mxu0
        %2842 = vmatprep.mubr.f32.mxu0 0.0
        %2843 = vmatmul.mubr.f32.gmra.mrb[0].mxu0 %v2763
        %v2844 = vpop.f32.mrb[0].mxu0
        %v2845 = vadd.f32 %v2751, %v2844
        %v2846 = vpop.f32.mrb[0].mxu0
        %2847 = vdwg.mxu0
        %v2848 = vadd.f32 %v2109, %v2840
        %v2849 = vadd.f32 %v2110, %v2845
        %s2850 = sld [smem:[#allocation3 + $0x6]]
        %vm2851 = vcmp.ge.f32.partialorder %v2848, 0.0
        %vm2852 = vcmp.ge.f32.partialorder %v2849, 0.0
        %v2853 = vstv %s2850
        %v2854 = vmul.f32 %v2853, %v2848
        %v2855 = vmul.f32 %v2853, %v2849
        %v2856 = vsel %vm2851, %v2848, %v2854
        %v2857 = vsel %vm2852, %v2849, %v2855
        %v2858 = vld [vmem:[%s7] sm:$0xff]
        %v2859 = vld [vmem:[%s7 + $0x8] sm:$0xff]
        %v2860 = vld [vmem:[%s7 + $0x10] sm:$0x1]
        %2861 = vxpose.xlu0.b32.start [1/16] %v2856, 128
        %2862 = vxpose.xlu0.b32.cont [2/16] %v2857, 128
        %2863 = vxpose.xlu0.b32.cont [3/16] 0.0, 128
        %2864 = vxpose.xlu0.b32.cont [4/16] 0.0, 128
        %2865 = vxpose.xlu0.b32.cont [5/16] 0.0, 128
        %2866 = vxpose.xlu0.b32.cont [6/16] 0.0, 128
        %2867 = vxpose.xlu0.b32.cont [7/16] 0.0, 128
        %2868 = vxpose.xlu0.b32.cont [8/16] 0.0, 128
        %2869 = vxpose.xlu0.b32.cont [9/16] 0.0, 128
        %2870 = vxpose.xlu0.b32.cont [10/16] 0.0, 128
        %2871 = vxpose.xlu0.b32.cont [11/16] 0.0, 128
        %2872 = vxpose.xlu0.b32.cont [12/16] 0.0, 128
        %2873 = vxpose.xlu0.b32.cont [13/16] 0.0, 128
        %2874 = vxpose.xlu0.b32.cont [14/16] 0.0, 128
        %2875 = vxpose.xlu0.b32.cont [15/16] 0.0, 128
        %2876 = vxpose.xlu0.b32.end [16/16] 0.0, 128
        %v2877 = vpop.trf.xlu0
        %v2878 = vpop.trf.xlu0
        %v2879 = vpop.trf.xlu0
        %v2880 = vpop.trf.xlu0
        %v2881 = vpop.trf.xlu0
        %v2882 = vpop.trf.xlu0
        %v2883 = vpop.trf.xlu0
        %v2884 = vpop.trf.xlu0
        %v2885 = vpop.trf.xlu0
        %v2886 = vpop.trf.xlu0
        %v2887 = vpop.trf.xlu0
        %v2888 = vpop.trf.xlu0
        %v2889 = vpop.trf.xlu0
        %v2890 = vpop.trf.xlu0
        %v2891 = vpop.trf.xlu0
        %v2892 = vpop.trf.xlu0
        %v2894 = vsel %vm652, %v2877, 0
        %v2897 = vsel %vm652, %v2878, 0
        %v2900 = vsel %vm652, %v2879, 0
        %2902 = vmatprep.subr.mxu0 0.0
        %2903 = vmatpush1.msra.mxu0 %v2858
        %2904 = vmatprep.subr.mxu0 0.0
        %2905 = vmatpush1.msra.mxu0 %v2859
        %2906 = vmatprep.subr.mxu0 0.0
        %2907 = vmatpush1.msra.mxu0 0.0
        %2908 = vmatprep.subr.mxu0 0.0
        %2909 = vmatpush1.msra.mxu0 0.0
        %2910 = vmatprep.subr.mxu0 0.0
        %2911 = vmatpush1.msra.mxu0 0.0
        %2912 = vmatprep.subr.mxu0 0.0
        %2913 = vmatpush1.msra.mxu0 0.0
        %2914 = vmatprep.subr.mxu0 0.0
        %2915 = vmatpush1.msra.mxu0 0.0
        %2916 = vmatprep.subr.mxu0 0.0
        %2917 = vmatpush1.msra.mxu0 0.0
        %2918 = vmatprep.subr.mxu0 0.0
        %2919 = vmatpush1.msra.mxu0 0.0
        %2920 = vmatprep.subr.mxu0 0.0
        %2921 = vmatpush1.msra.mxu0 0.0
        %2922 = vmatprep.subr.mxu0 0.0
        %2923 = vmatpush1.msra.mxu0 0.0
        %2924 = vmatprep.subr.mxu0 0.0
        %2925 = vmatpush1.msra.mxu0 0.0
        %2926 = vmatprep.subr.mxu0 0.0
        %2927 = vmatpush1.msra.mxu0 0.0
        %2928 = vmatprep.subr.mxu0 0.0
        %2929 = vmatpush1.msra.mxu0 0.0
        %2930 = vmatprep.subr.mxu0 0.0
        %2931 = vmatpush1.msra.mxu0 0.0
        %2932 = vmatprep.subr.mxu0 0.0
        %2933 = vmatpush1.msra.mxu0 0.0
        %2934 = vmatprep.subr.mxu0 0.0
        %2935 = vmatpush1.msra.mxu0 0.0
        %2936 = vmatprep.subr.mxu0 0.0
        %2937 = vmatpush1.msra.mxu0 0.0
        %2938 = vmatprep.subr.mxu0 0.0
        %2939 = vmatpush1.msra.mxu0 0.0
        %2940 = vmatprep.subr.mxu0 0.0
        %2941 = vmatpush1.msra.mxu0 0.0
        %2942 = vmatprep.subr.mxu0 0.0
        %2943 = vmatpush1.msra.mxu0 0.0
        %2944 = vmatprep.subr.mxu0 0.0
        %2945 = vmatpush1.msra.mxu0 0.0
        %2946 = vmatprep.subr.mxu0 0.0
        %2947 = vmatpush1.msra.mxu0 0.0
        %2948 = vmatprep.subr.mxu0 0.0
        %2949 = vmatpush1.msra.mxu0 0.0
        %2950 = vmatprep.subr.mxu0 0.0
        %2951 = vmatpush1.msra.mxu0 0.0
        %2952 = vmatprep.subr.mxu0 0.0
        %2953 = vmatpush1.msra.mxu0 0.0
        %2954 = vmatprep.subr.mxu0 0.0
        %2955 = vmatpush1.msra.mxu0 0.0
        %2956 = vmatprep.subr.mxu0 0.0
        %2957 = vmatpush1.msra.mxu0 0.0
        %2958 = vmatprep.subr.mxu0 0.0
        %2959 = vmatpush1.msra.mxu0 0.0
        %2960 = vmatprep.subr.mxu0 0.0
        %2961 = vmatpush1.msra.mxu0 0.0
        %2962 = vmatprep.subr.mxu0 0.0
        %2963 = vmatpush1.msra.mxu0 0.0
        %2964 = vmatprep.subr.mxu0 0.0
        %2965 = vmatpush1.msra.mxu0 0.0
        %2966 = vmatprep.mubr.f32.mxu0 0.0
        %2967 = vmatmul.mubr.f32.gmra.mrb[0].mxu0 %v2894
        %v2968 = vpop.f32.mrb[0].mxu0
        %v2969 = vadd.f32 0.0, %v2968
        %v2970 = vpop.f32.mrb[0].mxu0
        %2971 = vmatprep.mubr.f32.mxu0 0.0
        %2972 = vmatmul.mubr.f32.gmra.mrb[0].mxu0 %v2897
        %v2973 = vpop.f32.mrb[0].mxu0
        %v2974 = vadd.f32 0.0, %v2973
        %v2975 = vpop.f32.mrb[0].mxu0
        %2976 = vmatprep.mubr.f32.mxu0 0.0
        %2977 = vmatmul.mubr.f32.gmra.mrb[0].mxu0 %v2900
        %v2978 = vpop.f32.mrb[0].mxu0
        %v2979 = vadd.f32 0.0, %v2978
        %v2980 = vpop.f32.mrb[0].mxu0
        %2981 = vdwg.mxu0
        %v2982 = vsel %vm544, %v2969, 0.0
        %v2983 = vsel %vm544, %v2974, 0.0
        %v2984 = vadd.f32 %v2982, %v2983
        %v2985 = vsel %vm544, %v2979, 0.0
        %v2986 = vadd.f32 %v2984, %v2985
        %v2987 = vrot.slane %v2986, 4
        %v2988 = vadd.f32 %v2986, %v2987
        %v2989 = vrot.slane %v2988, 2
        %v2990 = vadd.f32 %v2988, %v2989
        %v2991 = vrot.slane %v2990, 1
        %v2992 = vadd.f32 %v2990, %v2991
        %v2993 = vmul.f32 %v2992, 0.041666668
        %v2994 = vadd.f32 %v2993, %v2860
        %vm2995 = vcmask 253952
        %2996 = vst.msk [vmem:[%s304] sm:$0x1] %vm2995, %v2994
        %s2997 = sand.u32 %s210, 1
        %s2998 = scalar_lea.sflag [#allocation5], %s2997
        %s2999 = sand.u32 %s210, 1
        %s3000 = scalar_lea.vmem [#allocation4], %s2999
        // Predicated region
        $region53: #{net_forward.1} parent=51 // pred_check
          %p3001 = pneg %p220
        $region54: #{net_forward.1} parent=51 // pred_check_branch
          %3003 = sbr.rel (%p3001) target = $region56
        $region55: #{net_forward.1} parent=51 // pred_region
          %s3005 = ssub.s32 16, 16
          %3006 = vsyncadd %s2998, %s3005
          %s3007 = smul.addr %s29, 16
          %s3008 = scalar_lea.hbm %s9, %s3007
          %s3010 = sshll.u32 %s3000, 4
          %s3011 = int_to_ptr.vmem [resolvable:$true] %s3010
          %3013 = dma.vmem_to_hbm [thread:$0]  %s3011, 16, %s3008, %s2998
        $region56: #{net_forward.1} parent=51 // pred_fallthru
          _
      $region52: #{net_forward.1} parent=5 // pred_fallthru
        _
      %p3014 = scmp.le.s32.totalorder 2, %s24
      // Predicated region
      $region57: #{net_forward.1} parent=5 // pred_check
        %p3015 = pneg %p3014
      $region58: #{net_forward.1} parent=5 // pred_check_branch
        %3017 = sbr.rel (%p3015) target = $region60
      $region59: #{net_forward.1} parent=5 // pred_region
        %s3018 = ssub.s32 %s24, 2
        // Predicated region
        $region61: #{net_forward.1} parent=59 // pred_check
          %p3019 = pneg %p226
        $region62: #{net_forward.1} parent=59 // pred_check_branch
          %3021 = sbr.rel (%p3019) target = $region64
        $region63: #{net_forward.1} parent=59 // pred_region
          %s3022 = sand.u32 %s211, 1
          %s3023 = scalar_lea.sflag [#allocation5], %s3022
          %s3024 = sand.u32 %s211, 1
          %s3025 = scalar_lea.vmem [#allocation4], %s3024
          %3026 = dma.done %s3023, 16
        $region64: #{net_forward.1} parent=59 // pred_fallthru
          _
      $region60: #{net_forward.1} parent=5 // pred_fallthru
        _
    $region6: #{net_forward.1} parent=1 // loop_footer
      %s28 = sadd.s32 1, %s24
    $region7: #{net_forward.1} parent=1 // loop_footer_branch
      %23 = sbr.rel target = $region3
    $region8: #{net_forward.1} parent=1 // loop_exit
      _
    %3027 = vsyncpa [#allocation5], 1
    %s3028 = scalar_lea.sflag [#allocation5], 1
    %3029 = vsyncpa %s3028, 1

</llo_original>
